<compile_context>
chip_gen: v7x
topology: tpu7x:2x2x1
jax: 0.10.0
libtpu: 0.0.40
codegen_flags: <defaults>
</compile_context>

<pallas_src>
import functools

import jax
import jax.numpy as jnp
from jax.experimental import pallas as pl
from jax.experimental.pallas import tpu as pltpu

HERO_COUNT = 122          # const.HERO_COUNT
DRAFT_FIELDS = 24         # DraftFields.Size
HERO_VEC = 128            # CategoryEncoder(HERO_COUNT, 128).out_size
HIDDEN = 256              # common MLP width
JUDGE_ESTIMATES = 31      # JudgeEstimates.Size
EST_PAD = 32              # estimates head padded to 32 columns inside W_fused
WIN_CLASSES = 2
OUT_LANES = 128           # packed output slab: win in [0:2], est in [2:33]
K_FUSED = DRAFT_FIELDS * HERO_COUNT   # 2928


def _round_up(x, m):
    return (x + m - 1) // m * m


def _draft_judge_kernel(draft_ref, wf_ref, b1_ref, w2_ref, b2_ref,
                        w3_ref, b3_ref, *rest, compute_estimates):
    """One batch tile per grid step; weights use constant index_maps.

    The whole hero-encoder + head-projection is a single K=2928 matmul against the
    pre-fused weight (columns 0:256 -> h1 pre-act, columns 256:287 -> estimates)."""
    if compute_estimates:
        best_ref, out_ref = rest
    else:
        (out_ref,) = rest

    t = draft_ref.shape[0]

    x = draft_ref[...]
    if x.dtype != wf_ref.dtype:
        x = x.astype(wf_ref.dtype)            # e.g. bf16 one-hot stream, f32 weights
    acc = jnp.dot(x, wf_ref[...], preferred_element_type=jnp.float32)   # (t, ncat)

    # MLP tail (runs per tile, overlapped with the next tile's draft DMA).
    h1 = jnp.maximum(acc[:, :HIDDEN] + b1_ref[...], 0.0)
    h2 = jnp.maximum(
        jnp.dot(h1.astype(w2_ref.dtype), w2_ref[...],
                preferred_element_type=jnp.float32) + b2_ref[...], 0.0)
    logits = jnp.dot(h2.astype(w3_ref.dtype), w3_ref[...],
                     preferred_element_type=jnp.float32) + b3_ref[...]   # (t, 2)

    # 2-class softmax == per-class sigmoid of the logit difference: no cross-lane
    # max/sum reductions over a 2-valid-lane vreg.
    l0 = logits[:, 0:1]
    l1 = logits[:, 1:2]
    w0 = 1.0 / (1.0 + jnp.exp(l1 - l0))
    w1 = 1.0 / (1.0 + jnp.exp(l0 - l1))

    # Build the lane-dense packed slab in-register and store it with ONE dense vst.
    parts = [w0, w1]
    if compute_estimates:
        parts.append(acc[:, HIDDEN:HIDDEN + JUDGE_ESTIMATES] + best_ref[...])
    used = sum(p.shape[-1] for p in parts)
    parts.append(jnp.zeros((t, OUT_LANES - used), jnp.float32))
    out_ref[...] = jnp.concatenate(parts, axis=-1)


def prepare_params(params, compute_estimates=False, use_bf16=False):
    """One-time weight preparation (hoisted out of the per-call forward).

    Fuses the hero encoder into the heads that consume the encoded draft:
        W_fused[d] = We @ [W1 | West(pad 32)][d]   ->  (24*122, ncat)
    so the kernel needs a single K=2928 matmul per batch tile.
    """
    hp = jax.lax.Precision.HIGHEST
    we = params["we"]                                     # (122, 128)
    heads = [params["w1"]]                                # (3072, 256)
    if compute_estimates:
        heads.append(jnp.pad(params["west"],
                             ((0, 0), (0, EST_PAD - JUDGE_ESTIMATES))))  # (3072, 32)
    wcat = jnp.concatenate(heads, axis=1)                 # (3072, ncat)
    ncat = wcat.shape[1]
    wcat3 = wcat.reshape(DRAFT_FIELDS, HERO_VEC, ncat)    # rows are (slot, hero_vec)
    wf = jnp.einsum("hv,dvn->dhn", we, wcat3, precision=hp)
    wf = wf.reshape(K_FUSED, ncat)                        # (2928, ncat)

    wdtype = jnp.bfloat16 if use_bf16 else jnp.float32
    return dict(
        wf=wf.astype(wdtype),
        w2=params["w2"].astype(wdtype),
        w3=params["w3"].astype(wdtype),
        b1=params["b1"], b2=params["b2"], b3=params["b3"],
        best=params["best"] if compute_estimates else None,
        compute_estimates=compute_estimates,
    )


def _choose_tile(bs, tile_bs, is_bf16):
    bs8 = _round_up(bs, 8)
    t = max(8, min(tile_bs, bs8))
    # v7x VMEM ceiling (64 MiB physical): don't carry over v6e-sized tiles blindly.
    t = min(t, 1024 if is_bf16 else 512)
    # Keep >= 2 grid steps when the batch allows, so both v7x TensorCores get work.
    t = min(t, _round_up(bs8 // 2, 8)) if bs8 >= 16 else t
    return _round_up(t, 8)


def draft_judge_forward(draft, prepped, tile_bs=256, draft_dtype=None,
                        vmem_limit_bytes=None):
    bs, ds, hc = draft.shape
    assert ds == DRAFT_FIELDS and hc == HERO_COUNT
    compute_estimates = prepped["compute_estimates"]
    wf = prepped["wf"]
    ncat = wf.shape[1]

    tile_bs = _choose_tile(bs, tile_bs, wf.dtype == jnp.bfloat16)
    bs_pad = _round_up(bs, tile_bs)

    # Free contiguous reshape; no hero-dim pad, no transpose.  Only the batch is
    # padded (a no-op when bs is already a multiple of the tile).
    x = draft.reshape(bs, ds * hc)
    if draft_dtype is not None:
        x = x.astype(draft_dtype)      # bf16 is exact for 0/1 one-hot drafts
    if bs_pad != bs:
        x = jnp.pad(x, ((0, bs_pad - bs), (0, 0)))

    if vmem_limit_bytes is None:
        xb = int(x.dtype.itemsize)
        wb = int(wf.dtype.itemsize)
        vmem_limit_bytes = 2 * (tile_bs * K_FUSED * xb        # draft (double-buffered)
                                + K_FUSED * ncat * wb          # fused weight
                                + HIDDEN * HIDDEN * wb         # W2
                                + tile_bs * OUT_LANES * 4)     # output slab
        vmem_limit_bytes += 6 << 20                            # activations + scratch
        vmem_limit_bytes = max(16 << 20, min(int(vmem_limit_bytes), 56 << 20))

    in_specs = [
        pl.BlockSpec((tile_bs, K_FUSED), lambda i: (i, 0)),        # draft tile
        pl.BlockSpec((K_FUSED, ncat), lambda i: (0, 0)),           # W_fused (resident)
        pl.BlockSpec((1, HIDDEN), lambda i: (0, 0)),               # b1
        pl.BlockSpec((HIDDEN, HIDDEN), lambda i: (0, 0)),          # W2
        pl.BlockSpec((1, HIDDEN), lambda i: (0, 0)),               # b2
        pl.BlockSpec((HIDDEN, WIN_CLASSES), lambda i: (0, 0)),     # W3
        pl.BlockSpec((1, WIN_CLASSES), lambda i: (0, 0)),          # b3
    ]
    args = [x, wf, prepped["b1"], prepped["w2"], prepped["b2"],
            prepped["w3"], prepped["b3"]]
    if compute_estimates:
        in_specs.append(pl.BlockSpec((1, JUDGE_ESTIMATES), lambda i: (0, 0)))
        args.append(prepped["best"])

    kernel = functools.partial(_draft_judge_kernel,
                               compute_estimates=compute_estimates)

    out = pl.pallas_call(
        kernel,
        out_shape=jax.ShapeDtypeStruct((bs_pad, OUT_LANES), jnp.float32),
        grid_spec=pltpu.PrefetchScalarGridSpec(
            num_scalar_prefetch=0,
            grid=(bs_pad // tile_bs,),
            in_specs=in_specs,
            out_specs=pl.BlockSpec((tile_bs, OUT_LANES), lambda i: (i, 0)),
        ),
        compiler_params=pltpu.CompilerParams(
            dimension_semantics=("parallel",),
            vmem_limit_bytes=vmem_limit_bytes),
    )(*args)

    win = out[:bs, :WIN_CLASSES]
    est = (out[:bs, WIN_CLASSES:WIN_CLASSES + JUDGE_ESTIMATES]
           if compute_estimates else None)
    return win, est


def init_params(key):
    """Deterministic init mimicking torch.nn.Linear defaults (U(-1/sqrt(fan_in), ..))."""
    def linear(key, fan_in, fan_out, bias=True):
        kw, kb = jax.random.split(key)
        bound = 1.0 / jnp.sqrt(fan_in)
        w = jax.random.uniform(kw, (fan_in, fan_out), jnp.float32, -bound, bound)
        b = (jax.random.uniform(kb, (1, fan_out), jnp.float32, -bound, bound)
             if bias else None)
        return w, b

    enc_size = DRAFT_FIELDS * HERO_VEC
    keys = jax.random.split(key, 5)
    we, _ = linear(keys[0], HERO_COUNT, HERO_VEC, bias=False)     # CategoryEncoder (no bias)
    w1, b1 = linear(keys[1], enc_size, HIDDEN)                    # common[0]
    w2, b2 = linear(keys[2], HIDDEN, HIDDEN)                      # common[2]
    w3, b3 = linear(keys[3], HIDDEN, WIN_CLASSES)                 # win_layer[0]
    west, best = linear(keys[4], enc_size, JUDGE_ESTIMATES)       # estimates[0]
    return dict(we=we, w1=w1, b1=b1, w2=w2, b2=b2, w3=w3, b3=b3, west=west, best=best)


def reference_forward(draft, params):
    """Pure-JAX reference (mirrors the torch forward, rank=None)."""
    hp = jax.lax.Precision.HIGHEST
    bs, ds, hc = draft.shape
    enc = jnp.dot(draft.reshape(bs * ds, hc), params["we"], precision=hp)
    edraft = enc.reshape(bs, ds * HERO_VEC)
    h1 = jax.nn.relu(jnp.dot(edraft, params["w1"], precision=hp) + params["b1"])
    h2 = jax.nn.relu(jnp.dot(h1, params["w2"], precision=hp) + params["b2"])
    win = jax.nn.softmax(jnp.dot(h2, params["w3"], precision=hp) + params["b3"], axis=-1)
    est = jnp.dot(edraft, params["west"], precision=hp) + params["best"]
    return win, est


if __name__ == "__main__":
    key = jax.random.PRNGKey(0)
    k_draft, k_idx, k_params = jax.random.split(key, 3)

    bs = 2
    draft = jax.random.normal(k_draft, (bs, DRAFT_FIELDS, HERO_COUNT), dtype=jnp.float32)
    params = init_params(k_params)
    ref_win, ref_est = reference_forward(draft, params)

    # f32 path with estimates head.
    prepped = prepare_params(params, compute_estimates=True)
    win, est = draft_judge_forward(draft, prepped)
    win, est = jax.block_until_ready((win, est))
    assert win.shape == (bs, WIN_CLASSES) and est.shape == (bs, JUDGE_ESTIMATES)
    assert jnp.allclose(win, ref_win, atol=1e-4, rtol=1e-4)
    assert jnp.allclose(est, ref_est, atol=2e-4, rtol=2e-4)
    assert jnp.allclose(jnp.sum(win, axis=-1), 1.0, atol=1e-5)

    # win-only specialization: estimates head compiled out (no West cols, no best DMA).
    prepped_win = prepare_params(params, compute_estimates=False)
    win_only, est_none = draft_judge_forward(draft, prepped_win)
    win_only = jax.block_until_ready(win_only)
    assert est_none is None
    assert jnp.allclose(win_only, ref_win, atol=1e-4, rtol=1e-4)

    # One-hot draft (the module's real input) streamed as bf16 (exact cast) while
    # weights stay f32 — halves the dominant HBM stream, same numerics.
    idx = jax.random.randint(k_idx, (bs, DRAFT_FIELDS), 0, HERO_COUNT)
    onehot = jax.nn.one_hot(idx, HERO_COUNT, dtype=jnp.float32)
    ref_win_oh, ref_est_oh = reference_forward(onehot, params)
    win_oh, est_oh = draft_judge_forward(onehot, prepped, draft_dtype=jnp.bfloat16)
    win_oh, est_oh = jax.block_until_ready((win_oh, est_oh))
    assert jnp.allclose(win_oh, ref_win_oh, atol=1e-4, rtol=1e-4)
    assert jnp.allclose(est_oh, ref_est_oh, atol=2e-4, rtol=2e-4)

    # bf16 weight/activation fast path (v5e/v6e/v7x throughput), f32 accumulation.
    prepped_bf16 = prepare_params(params, compute_estimates=True, use_bf16=True)
    win_bf, est_bf = draft_judge_forward(draft, prepped_bf16, draft_dtype=jnp.bfloat16)
    win_bf, est_bf = jax.block_until_ready((win_bf, est_bf))
    assert jnp.allclose(win_bf, ref_win, atol=3e-2, rtol=3e-2)
    assert jnp.allclose(est_bf, ref_est, atol=5e-2, rtol=5e-2)

    print("KERNEL_OK")
</pallas_src>

<mosaic_0001>
module attributes {stable_mosaic.version = 11 : i64} {
  func.func @_draft_judge_kernel(%arg0: i32, %arg1: memref<8x2928xf32, #tpu.memory_space<vmem>>, %arg2: memref<2928x288xf32, #tpu.memory_space<vmem>>, %arg3: memref<1x256xf32, #tpu.memory_space<vmem>>, %arg4: memref<256x256xf32, #tpu.memory_space<vmem>>, %arg5: memref<1x256xf32, #tpu.memory_space<vmem>>, %arg6: memref<256x2xf32, #tpu.memory_space<vmem>>, %arg7: memref<1x2xf32, #tpu.memory_space<vmem>>, %arg8: memref<1x31xf32, #tpu.memory_space<vmem>>, %arg9: memref<8x128xf32, #tpu.memory_space<vmem>>) attributes {dimension_semantics = [#tpu.dimension_semantics<parallel>], iteration_bounds = array<i64: 1>, scalar_prefetch = 0 : i64, scratch_operands = 0 : i64, tpu.core_type = #tpu.core_type<tc>, window_params = [{transform_indices = @transform_0, window_bounds = array<i64: 8, 2928>}, {pipeline_mode = #tpu.pipeline_mode<synchronous>, transform_indices = @transform_1, window_bounds = array<i64: 2928, 288>}, {pipeline_mode = #tpu.pipeline_mode<synchronous>, transform_indices = @transform_2, window_bounds = array<i64: 1, 256>}, {pipeline_mode = #tpu.pipeline_mode<synchronous>, transform_indices = @transform_3, window_bounds = array<i64: 256, 256>}, {pipeline_mode = #tpu.pipeline_mode<synchronous>, transform_indices = @transform_4, window_bounds = array<i64: 1, 256>}, {pipeline_mode = #tpu.pipeline_mode<synchronous>, transform_indices = @transform_5, window_bounds = array<i64: 256, 2>}, {pipeline_mode = #tpu.pipeline_mode<synchronous>, transform_indices = @transform_6, window_bounds = array<i64: 1, 2>}, {pipeline_mode = #tpu.pipeline_mode<synchronous>, transform_indices = @transform_7, window_bounds = array<i64: 1, 31>}, {transform_indices = @transform_8, window_bounds = array<i64: 8, 128>}]} {
    %c0 = arith.constant 0 : index
    %c0_0 = arith.constant 0 : index
    %0 = vector.load %arg1[%c0, %c0_0] : memref<8x2928xf32, #tpu.memory_space<vmem>>, vector<8x2928xf32>
    %c0_1 = arith.constant 0 : index
    %c0_2 = arith.constant 0 : index
    %1 = vector.load %arg2[%c0_1, %c0_2] : memref<2928x288xf32, #tpu.memory_space<vmem>>, vector<2928x288xf32>
    %cst = arith.constant dense<0.000000e+00> : vector<8x288xf32>
    %2 = tpu.matmul %0, %1, %cst {dimension_numbers = #tpu.dot_dimension_numbers<[1], [0], [0], [1], [0, 0, 1, 1], [], []>} : vector<8x2928xf32>, vector<2928x288xf32>, vector<8x288xf32> -> vector<8x288xf32>
    %3 = vector.extract_strided_slice %2 {offsets = [0, 0], sizes = [8, 256], strides = [1, 1]} : vector<8x288xf32> to vector<8x256xf32>
    %c0_3 = arith.constant 0 : index
    %c0_4 = arith.constant 0 : index
    %4 = vector.load %arg3[%c0_3, %c0_4] : memref<1x256xf32, #tpu.memory_space<vmem>>, vector<1x256xf32>
    %5 = vector.broadcast %4 : vector<1x256xf32> to vector<8x256xf32>
    %6 = arith.addf %3, %5 : vector<8x256xf32>
    %cst_5 = arith.constant 0.000000e+00 : f32
    %7 = vector.broadcast %cst_5 : f32 to vector<8x256xf32>
    %8 = arith.maximumf %6, %7 : vector<8x256xf32>
    %c0_6 = arith.constant 0 : index
    %c0_7 = arith.constant 0 : index
    %9 = vector.load %arg4[%c0_6, %c0_7] : memref<256x256xf32, #tpu.memory_space<vmem>>, vector<256x256xf32>
    %cst_8 = arith.constant dense<0.000000e+00> : vector<8x256xf32>
    %10 = tpu.matmul %8, %9, %cst_8 {dimension_numbers = #tpu.dot_dimension_numbers<[1], [0], [0], [1], [0, 0, 1, 1], [], []>} : vector<8x256xf32>, vector<256x256xf32>, vector<8x256xf32> -> vector<8x256xf32>
    %c0_9 = arith.constant 0 : index
    %c0_10 = arith.constant 0 : index
    %11 = vector.load %arg5[%c0_9, %c0_10] : memref<1x256xf32, #tpu.memory_space<vmem>>, vector<1x256xf32>
    %12 = vector.broadcast %11 : vector<1x256xf32> to vector<8x256xf32>
    %13 = arith.addf %10, %12 : vector<8x256xf32>
    %cst_11 = arith.constant 0.000000e+00 : f32
    %14 = vector.broadcast %cst_11 : f32 to vector<8x256xf32>
    %15 = arith.maximumf %13, %14 : vector<8x256xf32>
    %c0_12 = arith.constant 0 : index
    %c0_13 = arith.constant 0 : index
    %16 = vector.load %arg6[%c0_12, %c0_13] : memref<256x2xf32, #tpu.memory_space<vmem>>, vector<256x2xf32>
    %cst_14 = arith.constant dense<0.000000e+00> : vector<8x2xf32>
    %17 = tpu.matmul %15, %16, %cst_14 {dimension_numbers = #tpu.dot_dimension_numbers<[1], [0], [0], [1], [0, 0, 1, 1], [], []>} : vector<8x256xf32>, vector<256x2xf32>, vector<8x2xf32> -> vector<8x2xf32>
    %c0_15 = arith.constant 0 : index
    %c0_16 = arith.constant 0 : index
    %18 = vector.load %arg7[%c0_15, %c0_16] : memref<1x2xf32, #tpu.memory_space<vmem>>, vector<1x2xf32>
    %19 = vector.broadcast %18 : vector<1x2xf32> to vector<8x2xf32>
    %20 = arith.addf %17, %19 : vector<8x2xf32>
    %21 = vector.extract_strided_slice %20 {offsets = [0, 0], sizes = [8, 1], strides = [1, 1]} : vector<8x2xf32> to vector<8x1xf32>
    %22 = vector.extract_strided_slice %20 {offsets = [0, 1], sizes = [8, 1], strides = [1, 1]} : vector<8x2xf32> to vector<8x1xf32>
    %23 = arith.subf %22, %21 : vector<8x1xf32>
    %24 = math.exp %23 : vector<8x1xf32>
    %cst_17 = arith.constant 1.000000e+00 : f32
    %25 = vector.broadcast %cst_17 : f32 to vector<8x1xf32>
    %26 = arith.addf %25, %24 : vector<8x1xf32>
    %cst_18 = arith.constant 1.000000e+00 : f32
    %27 = vector.broadcast %cst_18 : f32 to vector<8x1xf32>
    %28 = arith.divf %27, %26 : vector<8x1xf32>
    %29 = arith.subf %21, %22 : vector<8x1xf32>
    %30 = math.exp %29 : vector<8x1xf32>
    %cst_19 = arith.constant 1.000000e+00 : f32
    %31 = vector.broadcast %cst_19 : f32 to vector<8x1xf32>
    %32 = arith.addf %31, %30 : vector<8x1xf32>
    %cst_20 = arith.constant 1.000000e+00 : f32
    %33 = vector.broadcast %cst_20 : f32 to vector<8x1xf32>
    %34 = arith.divf %33, %32 : vector<8x1xf32>
    %35 = vector.extract_strided_slice %2 {offsets = [0, 256], sizes = [8, 31], strides = [1, 1]} : vector<8x288xf32> to vector<8x31xf32>
    %c0_21 = arith.constant 0 : index
    %c0_22 = arith.constant 0 : index
    %36 = vector.load %arg8[%c0_21, %c0_22] : memref<1x31xf32, #tpu.memory_space<vmem>>, vector<1x31xf32>
    %37 = vector.broadcast %36 : vector<1x31xf32> to vector<8x31xf32>
    %38 = arith.addf %35, %37 : vector<8x31xf32>
    %cst_23 = arith.constant 0.000000e+00 : f32
    %39 = vector.broadcast %cst_23 : f32 to vector<8x95xf32>
    %40 = tpu.concatenate %28, %34, %38, %39 in 1 : vector<8x1xf32>, vector<8x1xf32>, vector<8x31xf32>, vector<8x95xf32> -> vector<8x128xf32>
    %c0_24 = arith.constant 0 : index
    %c0_25 = arith.constant 0 : index
    %41 = vector.load %arg9[%c0_24, %c0_25] : memref<8x128xf32, #tpu.memory_space<vmem>>, vector<8x128xf32>
    tpu.vector_store %arg9[%c0_24, %c0_25], %40 {strides = array<i32>} : memref<8x128xf32, #tpu.memory_space<vmem>>, vector<8x128xf32>,
    return
  }
  func.func @transform_0(%arg0: i32) -> (i32, i32) {
    %c0_i32 = arith.constant 0 : i32
    %c0_i32_0 = arith.constant 0 : i32
    return %arg0, %c0_i32 : i32, i32
  }
  func.func @transform_1(%arg0: i32) -> (i32, i32) {
    %c0_i32 = arith.constant 0 : i32
    %c0_i32_0 = arith.constant 0 : i32
    %c0_i32_1 = arith.constant 0 : i32
    return %c0_i32, %c0_i32_0 : i32, i32
  }
  func.func @transform_2(%arg0: i32) -> (i32, i32) {
    %c0_i32 = arith.constant 0 : i32
    %c0_i32_0 = arith.constant 0 : i32
    %c0_i32_1 = arith.constant 0 : i32
    return %c0_i32, %c0_i32_0 : i32, i32
  }
  func.func @transform_3(%arg0: i32) -> (i32, i32) {
    %c0_i32 = arith.constant 0 : i32
    %c0_i32_0 = arith.constant 0 : i32
    %c0_i32_1 = arith.constant 0 : i32
    return %c0_i32, %c0_i32_0 : i32, i32
  }
  func.func @transform_4(%arg0: i32) -> (i32, i32) {
    %c0_i32 = arith.constant 0 : i32
    %c0_i32_0 = arith.constant 0 : i32
    %c0_i32_1 = arith.constant 0 : i32
    return %c0_i32, %c0_i32_0 : i32, i32
  }
  func.func @transform_5(%arg0: i32) -> (i32, i32) {
    %c0_i32 = arith.constant 0 : i32
    %c0_i32_0 = arith.constant 0 : i32
    %c0_i32_1 = arith.constant 0 : i32
    return %c0_i32, %c0_i32_0 : i32, i32
  }
  func.func @transform_6(%arg0: i32) -> (i32, i32) {
    %c0_i32 = arith.constant 0 : i32
    %c0_i32_0 = arith.constant 0 : i32
    %c0_i32_1 = arith.constant 0 : i32
    return %c0_i32, %c0_i32_0 : i32, i32
  }
  func.func @transform_7(%arg0: i32) -> (i32, i32) {
    %c0_i32 = arith.constant 0 : i32
    %c0_i32_0 = arith.constant 0 : i32
    %c0_i32_1 = arith.constant 0 : i32
    return %c0_i32, %c0_i32_0 : i32, i32
  }
  func.func @transform_8(%arg0: i32) -> (i32, i32) {
    %c0_i32 = arith.constant 0 : i32
    %c0_i32_0 = arith.constant 0 : i32
    return %arg0, %c0_i32 : i32, i32
  }
}

</mosaic_0001>

<llo_original>
// kernel: tpu_custom_call.1
$region0: #{tpu_custom_call.1}
  #allocation0 [shape = 'u32[]', space=smem, size = 0x4, offset = 0x4, fixed_abs, tag = 'smem constant byte address 0x4 - core index']
  #allocation1 [shape = 'u32[144,128]{1,0:T(1,128)}', space=vmem, size = 0x12000, scoped, tag = 'internal scratch']
  %s0 = inlined_call_operand.vmem [shape: f32[8,2928], index: 0, kind: input, shape index: {}]
  %s1 = inlined_call_operand.vmem [shape: f32[2928,288], index: 1, kind: input, shape index: {}]
  %s2 = inlined_call_operand.vmem [shape: f32[1,256], index: 2, kind: input, shape index: {}]
  %s3 = inlined_call_operand.vmem [shape: f32[256,256], index: 3, kind: input, shape index: {}]
  %s4 = inlined_call_operand.vmem [shape: f32[1,256], index: 4, kind: input, shape index: {}]
  %s5 = inlined_call_operand.vmem [shape: f32[256,2], index: 5, kind: input, shape index: {}]
  %s6 = inlined_call_operand.vmem [shape: f32[1,2], index: 6, kind: input, shape index: {}]
  %s7 = inlined_call_operand.vmem [shape: f32[1,31], index: 7, kind: input, shape index: {}]
  %s8 = inlined_call_operand.hbm [shape: f32[8,128], index: 8, kind: output, shape index: {}]
  %s9 = sld [smem:[#allocation0]]
  $region42: #{tpu_custom_call.1} parent=0
    _
  %s11 = ssub.s32 1, %s9
  %s12 = scalar_select 0, %s11, %s9
  $region1: #{tpu_custom_call.1} parent=0
    #allocation2 [shape = 'u8[4096]{0}', space=vmem, size = 0x1000, scoped, tag = 'output window, operand 0, single buffered']
    #allocation3 [shape = 's32[1]{0}', space=sflag, size = 0x4, scoped, tag = 'scoped memory for tpu_custom_call.1']
    %13 = vsyncpa [#allocation3], 0
    // Predicated region
    $region2: #{tpu_custom_call.1} parent=1 // pred_check
      _
    $region3: #{tpu_custom_call.1} parent=1 // pred_check_branch
      %15 = sbr.rel (0) target = $region5
    $region4: #{tpu_custom_call.1} parent=1 // pred_region
      _
    $region5: #{tpu_custom_call.1} parent=1 // pred_fallthru
      _
    // Predicated region
    $region6: #{tpu_custom_call.1} parent=1 // pred_check
      _
    $region7: #{tpu_custom_call.1} parent=1 // pred_check_branch
      %17 = sbr.rel (0) target = $region9
    $region8: #{tpu_custom_call.1} parent=1 // pred_region
      _
    $region9: #{tpu_custom_call.1} parent=1 // pred_fallthru
      _
    // Predicated region
    $region10: #{tpu_custom_call.1} parent=1 // pred_check
      _
    $region11: #{tpu_custom_call.1} parent=1 // pred_check_branch
      %19 = sbr.rel (0) target = $region13
    $region12: #{tpu_custom_call.1} parent=1 // pred_region
      _
    $region13: #{tpu_custom_call.1} parent=1 // pred_fallthru
      _
    // Predicated region
    $region14: #{tpu_custom_call.1} parent=1 // pred_check
      _
    $region15: #{tpu_custom_call.1} parent=1 // pred_check_branch
      %21 = sbr.rel (0) target = $region17
    $region16: #{tpu_custom_call.1} parent=1 // pred_region
      _
    $region17: #{tpu_custom_call.1} parent=1 // pred_fallthru
      _
    // Predicated region
    $region18: #{tpu_custom_call.1} parent=1 // pred_check
      _
    $region19: #{tpu_custom_call.1} parent=1 // pred_check_branch
      %23 = sbr.rel (0) target = $region21
    $region20: #{tpu_custom_call.1} parent=1 // pred_region
      _
    $region21: #{tpu_custom_call.1} parent=1 // pred_fallthru
      _
    // Predicated region
    $region22: #{tpu_custom_call.1} parent=1 // pred_check
      _
    $region23: #{tpu_custom_call.1} parent=1 // pred_check_branch
      %25 = sbr.rel (0) target = $region25
    $region24: #{tpu_custom_call.1} parent=1 // pred_region
      _
    $region25: #{tpu_custom_call.1} parent=1 // pred_fallthru
      _
    // Predicated region
    $region26: #{tpu_custom_call.1} parent=1 // pred_check
      _
    $region27: #{tpu_custom_call.1} parent=1 // pred_check_branch
      %27 = sbr.rel (0) target = $region29
    $region28: #{tpu_custom_call.1} parent=1 // pred_region
      _
    $region29: #{tpu_custom_call.1} parent=1 // pred_fallthru
      _
    // Predicated region
    $region30: #{tpu_custom_call.1} parent=1 // pred_check
      _
    $region31: #{tpu_custom_call.1} parent=1 // pred_check_branch
      %29 = sbr.rel (0) target = $region33
    $region32: #{tpu_custom_call.1} parent=1 // pred_region
      _
    $region33: #{tpu_custom_call.1} parent=1 // pred_fallthru
      _
    %v30 = vld [vmem:[%s0] sm:$0xff]
    %v31 = vld [vmem:[%s0 + $0x8] sm:$0xff]
    %v32 = vld [vmem:[%s0 + $0x10] sm:$0xff]
    %v33 = vld [vmem:[%s0 + $0x18] sm:$0xff]
    %v34 = vld [vmem:[%s0 + $0x20] sm:$0xff]
    %v35 = vld [vmem:[%s0 + $0x28] sm:$0xff]
    %v36 = vld [vmem:[%s0 + $0x30] sm:$0xff]
    %v37 = vld [vmem:[%s0 + $0x38] sm:$0xff]
    %v38 = vld [vmem:[%s0 + $0x40] sm:$0xff]
    %v39 = vld [vmem:[%s0 + $0x48] sm:$0xff]
    %v40 = vld [vmem:[%s0 + $0x50] sm:$0xff]
    %v41 = vld [vmem:[%s0 + $0x58] sm:$0xff]
    %v42 = vld [vmem:[%s0 + $0x60] sm:$0xff]
    %v43 = vld [vmem:[%s0 + $0x68] sm:$0xff]
    %v44 = vld [vmem:[%s0 + $0x70] sm:$0xff]
    %v45 = vld [vmem:[%s0 + $0x78] sm:$0xff]
    %v46 = vld [vmem:[%s0 + $0x80] sm:$0xff]
    %v47 = vld [vmem:[%s0 + $0x88] sm:$0xff]
    %v48 = vld [vmem:[%s0 + $0x90] sm:$0xff]
    %v49 = vld [vmem:[%s0 + $0x98] sm:$0xff]
    %v50 = vld [vmem:[%s0 + $0xa0] sm:$0xff]
    %v51 = vld [vmem:[%s0 + $0xa8] sm:$0xff]
    %v52 = vld [vmem:[%s0 + $0xb0] sm:$0xff]
    %v53 = vld [vmem:[%s1] sm:$0xff]
    %v54 = vld [vmem:[%s1 + $0x8] sm:$0xff]
    %v55 = vld [vmem:[%s1 + $0x10] sm:$0xff]
    %v56 = vld [vmem:[%s1 + $0x18] sm:$0xff]
    %v57 = vld [vmem:[%s1 + $0x20] sm:$0xff]
    %v58 = vld [vmem:[%s1 + $0x28] sm:$0xff]
    %v59 = vld [vmem:[%s1 + $0x30] sm:$0xff]
    %v60 = vld [vmem:[%s1 + $0x38] sm:$0xff]
    %v61 = vld [vmem:[%s1 + $0x40] sm:$0xff]
    %v62 = vld [vmem:[%s1 + $0x48] sm:$0xff]
    %v63 = vld [vmem:[%s1 + $0x50] sm:$0xff]
    %v64 = vld [vmem:[%s1 + $0x58] sm:$0xff]
    %v65 = vld [vmem:[%s1 + $0x60] sm:$0xff]
    %v66 = vld [vmem:[%s1 + $0x68] sm:$0xff]
    %v67 = vld [vmem:[%s1 + $0x70] sm:$0xff]
    %v68 = vld [vmem:[%s1 + $0x78] sm:$0xff]
    %v69 = vld [vmem:[%s1 + $0x80] sm:$0xff]
    %v70 = vld [vmem:[%s1 + $0x88] sm:$0xff]
    %v71 = vld [vmem:[%s1 + $0x90] sm:$0xff]
    %v72 = vld [vmem:[%s1 + $0x98] sm:$0xff]
    %v73 = vld [vmem:[%s1 + $0xa0] sm:$0xff]
    %v74 = vld [vmem:[%s1 + $0xa8] sm:$0xff]
    %v75 = vld [vmem:[%s1 + $0xb0] sm:$0xff]
    %v76 = vld [vmem:[%s1 + $0xb8] sm:$0xff]
    %v77 = vld [vmem:[%s1 + $0xc0] sm:$0xff]
    %v78 = vld [vmem:[%s1 + $0xc8] sm:$0xff]
    %v79 = vld [vmem:[%s1 + $0xd0] sm:$0xff]
    %v80 = vld [vmem:[%s1 + $0xd8] sm:$0xff]
    %v81 = vld [vmem:[%s1 + $0xe0] sm:$0xff]
    %v82 = vld [vmem:[%s1 + $0xe8] sm:$0xff]
    %v83 = vld [vmem:[%s1 + $0xf0] sm:$0xff]
    %v84 = vld [vmem:[%s1 + $0xf8] sm:$0xff]
    %v85 = vld [vmem:[%s1 + $0x100] sm:$0xff]
    %v86 = vld [vmem:[%s1 + $0x108] sm:$0xff]
    %v87 = vld [vmem:[%s1 + $0x110] sm:$0xff]
    %v88 = vld [vmem:[%s1 + $0x118] sm:$0xff]
    %v89 = vld [vmem:[%s1 + $0x120] sm:$0xff]
    %v90 = vld [vmem:[%s1 + $0x128] sm:$0xff]
    %v91 = vld [vmem:[%s1 + $0x130] sm:$0xff]
    %v92 = vld [vmem:[%s1 + $0x138] sm:$0xff]
    %v93 = vld [vmem:[%s1 + $0x140] sm:$0xff]
    %v94 = vld [vmem:[%s1 + $0x148] sm:$0xff]
    %v95 = vld [vmem:[%s1 + $0x150] sm:$0xff]
    %v96 = vld [vmem:[%s1 + $0x158] sm:$0xff]
    %v97 = vld [vmem:[%s1 + $0x160] sm:$0xff]
    %v98 = vld [vmem:[%s1 + $0x168] sm:$0xff]
    %v99 = vld [vmem:[%s1 + $0x170] sm:$0xff]
    %v100 = vld [vmem:[%s1 + $0x178] sm:$0xff]
    %v101 = vld [vmem:[%s1 + $0x180] sm:$0xff]
    %v102 = vld [vmem:[%s1 + $0x188] sm:$0xff]
    %v103 = vld [vmem:[%s1 + $0x190] sm:$0xff]
    %v104 = vld [vmem:[%s1 + $0x198] sm:$0xff]
    %v105 = vld [vmem:[%s1 + $0x1a0] sm:$0xff]
    %v106 = vld [vmem:[%s1 + $0x1a8] sm:$0xff]
    %v107 = vld [vmem:[%s1 + $0x1b0] sm:$0xff]
    %v108 = vld [vmem:[%s1 + $0x1b8] sm:$0xff]
    %v109 = vld [vmem:[%s1 + $0x1c0] sm:$0xff]
    %v110 = vld [vmem:[%s1 + $0x1c8] sm:$0xff]
    %v111 = vld [vmem:[%s1 + $0x1d0] sm:$0xff]
    %v112 = vld [vmem:[%s1 + $0x1d8] sm:$0xff]
    %v113 = vld [vmem:[%s1 + $0x1e0] sm:$0xff]
    %v114 = vld [vmem:[%s1 + $0x1e8] sm:$0xff]
    %v115 = vld [vmem:[%s1 + $0x1f0] sm:$0xff]
    %v116 = vld [vmem:[%s1 + $0x1f8] sm:$0xff]
    %v117 = vld [vmem:[%s1 + $0x200] sm:$0xff]
    %v118 = vld [vmem:[%s1 + $0x208] sm:$0xff]
    %v119 = vld [vmem:[%s1 + $0x210] sm:$0xff]
    %v120 = vld [vmem:[%s1 + $0x218] sm:$0xff]
    %v121 = vld [vmem:[%s1 + $0x220] sm:$0xff]
    %v122 = vld [vmem:[%s1 + $0x228] sm:$0xff]
    %v123 = vld [vmem:[%s1 + $0x230] sm:$0xff]
    %v124 = vld [vmem:[%s1 + $0x238] sm:$0xff]
    %v125 = vld [vmem:[%s1 + $0x240] sm:$0xff]
    %v126 = vld [vmem:[%s1 + $0x248] sm:$0xff]
    %v127 = vld [vmem:[%s1 + $0x250] sm:$0xff]
    %v128 = vld [vmem:[%s1 + $0x258] sm:$0xff]
    %v129 = vld [vmem:[%s1 + $0x260] sm:$0xff]
    %v130 = vld [vmem:[%s1 + $0x268] sm:$0xff]
    %v131 = vld [vmem:[%s1 + $0x270] sm:$0xff]
    %v132 = vld [vmem:[%s1 + $0x278] sm:$0xff]
    %v133 = vld [vmem:[%s1 + $0x280] sm:$0xff]
    %v134 = vld [vmem:[%s1 + $0x288] sm:$0xff]
    %v135 = vld [vmem:[%s1 + $0x290] sm:$0xff]
    %v136 = vld [vmem:[%s1 + $0x298] sm:$0xff]
    %v137 = vld [vmem:[%s1 + $0x2a0] sm:$0xff]
    %v138 = vld [vmem:[%s1 + $0x2a8] sm:$0xff]
    %v139 = vld [vmem:[%s1 + $0x2b0] sm:$0xff]
    %v140 = vld [vmem:[%s1 + $0x2b8] sm:$0xff]
    %v141 = vld [vmem:[%s1 + $0x2c0] sm:$0xff]
    %v142 = vld [vmem:[%s1 + $0x2c8] sm:$0xff]
    %v143 = vld [vmem:[%s1 + $0x2d0] sm:$0xff]
    %v144 = vld [vmem:[%s1 + $0x2d8] sm:$0xff]
    %v145 = vld [vmem:[%s1 + $0x2e0] sm:$0xff]
    %v146 = vld [vmem:[%s1 + $0x2e8] sm:$0xff]
    %v147 = vld [vmem:[%s1 + $0x2f0] sm:$0xff]
    %v148 = vld [vmem:[%s1 + $0x2f8] sm:$0xff]
    %v149 = vld [vmem:[%s1 + $0x300] sm:$0xff]
    %v150 = vld [vmem:[%s1 + $0x308] sm:$0xff]
    %v151 = vld [vmem:[%s1 + $0x310] sm:$0xff]
    %v152 = vld [vmem:[%s1 + $0x318] sm:$0xff]
    %v153 = vld [vmem:[%s1 + $0x320] sm:$0xff]
    %v154 = vld [vmem:[%s1 + $0x328] sm:$0xff]
    %v155 = vld [vmem:[%s1 + $0x330] sm:$0xff]
    %v156 = vld [vmem:[%s1 + $0x338] sm:$0xff]
    %v157 = vld [vmem:[%s1 + $0x340] sm:$0xff]
    %v158 = vld [vmem:[%s1 + $0x348] sm:$0xff]
    %v159 = vld [vmem:[%s1 + $0x350] sm:$0xff]
    %v160 = vld [vmem:[%s1 + $0x358] sm:$0xff]
    %v161 = vld [vmem:[%s1 + $0x360] sm:$0xff]
    %v162 = vld [vmem:[%s1 + $0x368] sm:$0xff]
    %v163 = vld [vmem:[%s1 + $0x370] sm:$0xff]
    %v164 = vld [vmem:[%s1 + $0x378] sm:$0xff]
    %v165 = vld [vmem:[%s1 + $0x380] sm:$0xff]
    %v166 = vld [vmem:[%s1 + $0x388] sm:$0xff]
    %v167 = vld [vmem:[%s1 + $0x390] sm:$0xff]
    %v168 = vld [vmem:[%s1 + $0x398] sm:$0xff]
    %v169 = vld [vmem:[%s1 + $0x3a0] sm:$0xff]
    %v170 = vld [vmem:[%s1 + $0x3a8] sm:$0xff]
    %v171 = vld [vmem:[%s1 + $0x3b0] sm:$0xff]
    %v172 = vld [vmem:[%s1 + $0x3b8] sm:$0xff]
    %v173 = vld [vmem:[%s1 + $0x3c0] sm:$0xff]
    %v174 = vld [vmem:[%s1 + $0x3c8] sm:$0xff]
    %v175 = vld [vmem:[%s1 + $0x3d0] sm:$0xff]
    %v176 = vld [vmem:[%s1 + $0x3d8] sm:$0xff]
    %v177 = vld [vmem:[%s1 + $0x3e0] sm:$0xff]
    %v178 = vld [vmem:[%s1 + $0x3e8] sm:$0xff]
    %v179 = vld [vmem:[%s1 + $0x3f0] sm:$0xff]
    %v180 = vld [vmem:[%s1 + $0x3f8] sm:$0xff]
    %v181 = vld [vmem:[%s1 + $0x400] sm:$0xff]
    %v182 = vld [vmem:[%s1 + $0x408] sm:$0xff]
    %v183 = vld [vmem:[%s1 + $0x410] sm:$0xff]
    %v184 = vld [vmem:[%s1 + $0x418] sm:$0xff]
    %v185 = vld [vmem:[%s1 + $0x420] sm:$0xff]
    %v186 = vld [vmem:[%s1 + $0x428] sm:$0xff]
    %v187 = vld [vmem:[%s1 + $0x430] sm:$0xff]
    %v188 = vld [vmem:[%s1 + $0x438] sm:$0xff]
    %v189 = vld [vmem:[%s1 + $0x440] sm:$0xff]
    %v190 = vld [vmem:[%s1 + $0x448] sm:$0xff]
    %v191 = vld [vmem:[%s1 + $0x450] sm:$0xff]
    %v192 = vld [vmem:[%s1 + $0x458] sm:$0xff]
    %v193 = vld [vmem:[%s1 + $0x460] sm:$0xff]
    %v194 = vld [vmem:[%s1 + $0x468] sm:$0xff]
    %v195 = vld [vmem:[%s1 + $0x470] sm:$0xff]
    %v196 = vld [vmem:[%s1 + $0x478] sm:$0xff]
    %v197 = vld [vmem:[%s1 + $0x480] sm:$0xff]
    %v198 = vld [vmem:[%s1 + $0x488] sm:$0xff]
    %v199 = vld [vmem:[%s1 + $0x490] sm:$0xff]
    %v200 = vld [vmem:[%s1 + $0x498] sm:$0xff]
    %v201 = vld [vmem:[%s1 + $0x4a0] sm:$0xff]
    %v202 = vld [vmem:[%s1 + $0x4a8] sm:$0xff]
    %v203 = vld [vmem:[%s1 + $0x4b0] sm:$0xff]
    %v204 = vld [vmem:[%s1 + $0x4b8] sm:$0xff]
    %v205 = vld [vmem:[%s1 + $0x4c0] sm:$0xff]
    %v206 = vld [vmem:[%s1 + $0x4c8] sm:$0xff]
    %v207 = vld [vmem:[%s1 + $0x4d0] sm:$0xff]
    %v208 = vld [vmem:[%s1 + $0x4d8] sm:$0xff]
    %v209 = vld [vmem:[%s1 + $0x4e0] sm:$0xff]
    %v210 = vld [vmem:[%s1 + $0x4e8] sm:$0xff]
    %v211 = vld [vmem:[%s1 + $0x4f0] sm:$0xff]
    %v212 = vld [vmem:[%s1 + $0x4f8] sm:$0xff]
    %v213 = vld [vmem:[%s1 + $0x500] sm:$0xff]
    %v214 = vld [vmem:[%s1 + $0x508] sm:$0xff]
    %v215 = vld [vmem:[%s1 + $0x510] sm:$0xff]
    %v216 = vld [vmem:[%s1 + $0x518] sm:$0xff]
    %v217 = vld [vmem:[%s1 + $0x520] sm:$0xff]
    %v218 = vld [vmem:[%s1 + $0x528] sm:$0xff]
    %v219 = vld [vmem:[%s1 + $0x530] sm:$0xff]
    %v220 = vld [vmem:[%s1 + $0x538] sm:$0xff]
    %v221 = vld [vmem:[%s1 + $0x540] sm:$0xff]
    %v222 = vld [vmem:[%s1 + $0x548] sm:$0xff]
    %v223 = vld [vmem:[%s1 + $0x550] sm:$0xff]
    %v224 = vld [vmem:[%s1 + $0x558] sm:$0xff]
    %v225 = vld [vmem:[%s1 + $0x560] sm:$0xff]
    %v226 = vld [vmem:[%s1 + $0x568] sm:$0xff]
    %v227 = vld [vmem:[%s1 + $0x570] sm:$0xff]
    %v228 = vld [vmem:[%s1 + $0x578] sm:$0xff]
    %v229 = vld [vmem:[%s1 + $0x580] sm:$0xff]
    %v230 = vld [vmem:[%s1 + $0x588] sm:$0xff]
    %v231 = vld [vmem:[%s1 + $0x590] sm:$0xff]
    %v232 = vld [vmem:[%s1 + $0x598] sm:$0xff]
    %v233 = vld [vmem:[%s1 + $0x5a0] sm:$0xff]
    %v234 = vld [vmem:[%s1 + $0x5a8] sm:$0xff]
    %v235 = vld [vmem:[%s1 + $0x5b0] sm:$0xff]
    %v236 = vld [vmem:[%s1 + $0x5b8] sm:$0xff]
    %v237 = vld [vmem:[%s1 + $0x5c0] sm:$0xff]
    %v238 = vld [vmem:[%s1 + $0x5c8] sm:$0xff]
    %v239 = vld [vmem:[%s1 + $0x5d0] sm:$0xff]
    %v240 = vld [vmem:[%s1 + $0x5d8] sm:$0xff]
    %v241 = vld [vmem:[%s1 + $0x5e0] sm:$0xff]
    %v242 = vld [vmem:[%s1 + $0x5e8] sm:$0xff]
    %v243 = vld [vmem:[%s1 + $0x5f0] sm:$0xff]
    %v244 = vld [vmem:[%s1 + $0x5f8] sm:$0xff]
    %v245 = vld [vmem:[%s1 + $0x600] sm:$0xff]
    %v246 = vld [vmem:[%s1 + $0x608] sm:$0xff]
    %v247 = vld [vmem:[%s1 + $0x610] sm:$0xff]
    %v248 = vld [vmem:[%s1 + $0x618] sm:$0xff]
    %v249 = vld [vmem:[%s1 + $0x620] sm:$0xff]
    %v250 = vld [vmem:[%s1 + $0x628] sm:$0xff]
    %v251 = vld [vmem:[%s1 + $0x630] sm:$0xff]
    %v252 = vld [vmem:[%s1 + $0x638] sm:$0xff]
    %v253 = vld [vmem:[%s1 + $0x640] sm:$0xff]
    %v254 = vld [vmem:[%s1 + $0x648] sm:$0xff]
    %v255 = vld [vmem:[%s1 + $0x650] sm:$0xff]
    %v256 = vld [vmem:[%s1 + $0x658] sm:$0xff]
    %v257 = vld [vmem:[%s1 + $0x660] sm:$0xff]
    %v258 = vld [vmem:[%s1 + $0x668] sm:$0xff]
    %v259 = vld [vmem:[%s1 + $0x670] sm:$0xff]
    %v260 = vld [vmem:[%s1 + $0x678] sm:$0xff]
    %v261 = vld [vmem:[%s1 + $0x680] sm:$0xff]
    %v262 = vld [vmem:[%s1 + $0x688] sm:$0xff]
    %v263 = vld [vmem:[%s1 + $0x690] sm:$0xff]
    %v264 = vld [vmem:[%s1 + $0x698] sm:$0xff]
    %v265 = vld [vmem:[%s1 + $0x6a0] sm:$0xff]
    %v266 = vld [vmem:[%s1 + $0x6a8] sm:$0xff]
    %v267 = vld [vmem:[%s1 + $0x6b0] sm:$0xff]
    %v268 = vld [vmem:[%s1 + $0x6b8] sm:$0xff]
    %v269 = vld [vmem:[%s1 + $0x6c0] sm:$0xff]
    %v270 = vld [vmem:[%s1 + $0x6c8] sm:$0xff]
    %v271 = vld [vmem:[%s1 + $0x6d0] sm:$0xff]
    %v272 = vld [vmem:[%s1 + $0x6d8] sm:$0xff]
    %v273 = vld [vmem:[%s1 + $0x6e0] sm:$0xff]
    %v274 = vld [vmem:[%s1 + $0x6e8] sm:$0xff]
    %v275 = vld [vmem:[%s1 + $0x6f0] sm:$0xff]
    %v276 = vld [vmem:[%s1 + $0x6f8] sm:$0xff]
    %v277 = vld [vmem:[%s1 + $0x700] sm:$0xff]
    %v278 = vld [vmem:[%s1 + $0x708] sm:$0xff]
    %v279 = vld [vmem:[%s1 + $0x710] sm:$0xff]
    %v280 = vld [vmem:[%s1 + $0x718] sm:$0xff]
    %v281 = vld [vmem:[%s1 + $0x720] sm:$0xff]
    %v282 = vld [vmem:[%s1 + $0x728] sm:$0xff]
    %v283 = vld [vmem:[%s1 + $0x730] sm:$0xff]
    %v284 = vld [vmem:[%s1 + $0x738] sm:$0xff]
    %v285 = vld [vmem:[%s1 + $0x740] sm:$0xff]
    %v286 = vld [vmem:[%s1 + $0x748] sm:$0xff]
    %v287 = vld [vmem:[%s1 + $0x750] sm:$0xff]
    %v288 = vld [vmem:[%s1 + $0x758] sm:$0xff]
    %v289 = vld [vmem:[%s1 + $0x760] sm:$0xff]
    %v290 = vld [vmem:[%s1 + $0x768] sm:$0xff]
    %v291 = vld [vmem:[%s1 + $0x770] sm:$0xff]
    %v292 = vld [vmem:[%s1 + $0x778] sm:$0xff]
    %v293 = vld [vmem:[%s1 + $0x780] sm:$0xff]
    %v294 = vld [vmem:[%s1 + $0x788] sm:$0xff]
    %v295 = vld [vmem:[%s1 + $0x790] sm:$0xff]
    %v296 = vld [vmem:[%s1 + $0x798] sm:$0xff]
    %v297 = vld [vmem:[%s1 + $0x7a0] sm:$0xff]
    %v298 = vld [vmem:[%s1 + $0x7a8] sm:$0xff]
    %v299 = vld [vmem:[%s1 + $0x7b0] sm:$0xff]
    %v300 = vld [vmem:[%s1 + $0x7b8] sm:$0xff]
    %v301 = vld [vmem:[%s1 + $0x7c0] sm:$0xff]
    %v302 = vld [vmem:[%s1 + $0x7c8] sm:$0xff]
    %v303 = vld [vmem:[%s1 + $0x7d0] sm:$0xff]
    %v304 = vld [vmem:[%s1 + $0x7d8] sm:$0xff]
    %v305 = vld [vmem:[%s1 + $0x7e0] sm:$0xff]
    %v306 = vld [vmem:[%s1 + $0x7e8] sm:$0xff]
    %v307 = vld [vmem:[%s1 + $0x7f0] sm:$0xff]
    %v308 = vld [vmem:[%s1 + $0x7f8] sm:$0xff]
    %v309 = vld [vmem:[%s1 + $0x800] sm:$0xff]
    %v310 = vld [vmem:[%s1 + $0x808] sm:$0xff]
    %v311 = vld [vmem:[%s1 + $0x810] sm:$0xff]
    %v312 = vld [vmem:[%s1 + $0x818] sm:$0xff]
    %v313 = vld [vmem:[%s1 + $0x820] sm:$0xff]
    %v314 = vld [vmem:[%s1 + $0x828] sm:$0xff]
    %v315 = vld [vmem:[%s1 + $0x830] sm:$0xff]
    %v316 = vld [vmem:[%s1 + $0x838] sm:$0xff]
    %v317 = vld [vmem:[%s1 + $0x840] sm:$0xff]
    %v318 = vld [vmem:[%s1 + $0x848] sm:$0xff]
    %v319 = vld [vmem:[%s1 + $0x850] sm:$0xff]
    %v320 = vld [vmem:[%s1 + $0x858] sm:$0xff]
    %v321 = vld [vmem:[%s1 + $0x860] sm:$0xff]
    %v322 = vld [vmem:[%s1 + $0x868] sm:$0xff]
    %v323 = vld [vmem:[%s1 + $0x870] sm:$0xff]
    %v324 = vld [vmem:[%s1 + $0x878] sm:$0xff]
    %v325 = vld [vmem:[%s1 + $0x880] sm:$0xff]
    %v326 = vld [vmem:[%s1 + $0x888] sm:$0xff]
    %v327 = vld [vmem:[%s1 + $0x890] sm:$0xff]
    %v328 = vld [vmem:[%s1 + $0x898] sm:$0xff]
    %v329 = vld [vmem:[%s1 + $0x8a0] sm:$0xff]
    %v330 = vld [vmem:[%s1 + $0x8a8] sm:$0xff]
    %v331 = vld [vmem:[%s1 + $0x8b0] sm:$0xff]
    %v332 = vld [vmem:[%s1 + $0x8b8] sm:$0xff]
    %v333 = vld [vmem:[%s1 + $0x8c0] sm:$0xff]
    %v334 = vld [vmem:[%s1 + $0x8c8] sm:$0xff]
    %v335 = vld [vmem:[%s1 + $0x8d0] sm:$0xff]
    %v336 = vld [vmem:[%s1 + $0x8d8] sm:$0xff]
    %v337 = vld [vmem:[%s1 + $0x8e0] sm:$0xff]
    %v338 = vld [vmem:[%s1 + $0x8e8] sm:$0xff]
    %v339 = vld [vmem:[%s1 + $0x8f0] sm:$0xff]
    %v340 = vld [vmem:[%s1 + $0x8f8] sm:$0xff]
    %v341 = vld [vmem:[%s1 + $0x900] sm:$0xff]
    %v342 = vld [vmem:[%s1 + $0x908] sm:$0xff]
    %v343 = vld [vmem:[%s1 + $0x910] sm:$0xff]
    %v344 = vld [vmem:[%s1 + $0x918] sm:$0xff]
    %v345 = vld [vmem:[%s1 + $0x920] sm:$0xff]
    %v346 = vld [vmem:[%s1 + $0x928] sm:$0xff]
    %v347 = vld [vmem:[%s1 + $0x930] sm:$0xff]
    %v348 = vld [vmem:[%s1 + $0x938] sm:$0xff]
    %v349 = vld [vmem:[%s1 + $0x940] sm:$0xff]
    %v350 = vld [vmem:[%s1 + $0x948] sm:$0xff]
    %v351 = vld [vmem:[%s1 + $0x950] sm:$0xff]
    %v352 = vld [vmem:[%s1 + $0x958] sm:$0xff]
    %v353 = vld [vmem:[%s1 + $0x960] sm:$0xff]
    %v354 = vld [vmem:[%s1 + $0x968] sm:$0xff]
    %v355 = vld [vmem:[%s1 + $0x970] sm:$0xff]
    %v356 = vld [vmem:[%s1 + $0x978] sm:$0xff]
    %v357 = vld [vmem:[%s1 + $0x980] sm:$0xff]
    %v358 = vld [vmem:[%s1 + $0x988] sm:$0xff]
    %v359 = vld [vmem:[%s1 + $0x990] sm:$0xff]
    %v360 = vld [vmem:[%s1 + $0x998] sm:$0xff]
    %v361 = vld [vmem:[%s1 + $0x9a0] sm:$0xff]
    %v362 = vld [vmem:[%s1 + $0x9a8] sm:$0xff]
    %v363 = vld [vmem:[%s1 + $0x9b0] sm:$0xff]
    %v364 = vld [vmem:[%s1 + $0x9b8] sm:$0xff]
    %v365 = vld [vmem:[%s1 + $0x9c0] sm:$0xff]
    %v366 = vld [vmem:[%s1 + $0x9c8] sm:$0xff]
    %v367 = vld [vmem:[%s1 + $0x9d0] sm:$0xff]
    %v368 = vld [vmem:[%s1 + $0x9d8] sm:$0xff]
    %v369 = vld [vmem:[%s1 + $0x9e0] sm:$0xff]
    %v370 = vld [vmem:[%s1 + $0x9e8] sm:$0xff]
    %v371 = vld [vmem:[%s1 + $0x9f0] sm:$0xff]
    %v372 = vld [vmem:[%s1 + $0x9f8] sm:$0xff]
    %v373 = vld [vmem:[%s1 + $0xa00] sm:$0xff]
    %v374 = vld [vmem:[%s1 + $0xa08] sm:$0xff]
    %v375 = vld [vmem:[%s1 + $0xa10] sm:$0xff]
    %v376 = vld [vmem:[%s1 + $0xa18] sm:$0xff]
    %v377 = vld [vmem:[%s1 + $0xa20] sm:$0xff]
    %v378 = vld [vmem:[%s1 + $0xa28] sm:$0xff]
    %v379 = vld [vmem:[%s1 + $0xa30] sm:$0xff]
    %v380 = vld [vmem:[%s1 + $0xa38] sm:$0xff]
    %v381 = vld [vmem:[%s1 + $0xa40] sm:$0xff]
    %v382 = vld [vmem:[%s1 + $0xa48] sm:$0xff]
    %v383 = vld [vmem:[%s1 + $0xa50] sm:$0xff]
    %v384 = vld [vmem:[%s1 + $0xa58] sm:$0xff]
    %v385 = vld [vmem:[%s1 + $0xa60] sm:$0xff]
    %v386 = vld [vmem:[%s1 + $0xa68] sm:$0xff]
    %v387 = vld [vmem:[%s1 + $0xa70] sm:$0xff]
    %v388 = vld [vmem:[%s1 + $0xa78] sm:$0xff]
    %v389 = vld [vmem:[%s1 + $0xa80] sm:$0xff]
    %v390 = vld [vmem:[%s1 + $0xa88] sm:$0xff]
    %v391 = vld [vmem:[%s1 + $0xa90] sm:$0xff]
    %v392 = vld [vmem:[%s1 + $0xa98] sm:$0xff]
    %v393 = vld [vmem:[%s1 + $0xaa0] sm:$0xff]
    %v394 = vld [vmem:[%s1 + $0xaa8] sm:$0xff]
    %v395 = vld [vmem:[%s1 + $0xab0] sm:$0xff]
    %v396 = vld [vmem:[%s1 + $0xab8] sm:$0xff]
    %v397 = vld [vmem:[%s1 + $0xac0] sm:$0xff]
    %v398 = vld [vmem:[%s1 + $0xac8] sm:$0xff]
    %v399 = vld [vmem:[%s1 + $0xad0] sm:$0xff]
    %v400 = vld [vmem:[%s1 + $0xad8] sm:$0xff]
    %v401 = vld [vmem:[%s1 + $0xae0] sm:$0xff]
    %v402 = vld [vmem:[%s1 + $0xae8] sm:$0xff]
    %v403 = vld [vmem:[%s1 + $0xaf0] sm:$0xff]
    %v404 = vld [vmem:[%s1 + $0xaf8] sm:$0xff]
    %v405 = vld [vmem:[%s1 + $0xb00] sm:$0xff]
    %v406 = vld [vmem:[%s1 + $0xb08] sm:$0xff]
    %v407 = vld [vmem:[%s1 + $0xb10] sm:$0xff]
    %v408 = vld [vmem:[%s1 + $0xb18] sm:$0xff]
    %v409 = vld [vmem:[%s1 + $0xb20] sm:$0xff]
    %v410 = vld [vmem:[%s1 + $0xb28] sm:$0xff]
    %v411 = vld [vmem:[%s1 + $0xb30] sm:$0xff]
    %v412 = vld [vmem:[%s1 + $0xb38] sm:$0xff]
    %v413 = vld [vmem:[%s1 + $0xb40] sm:$0xff]
    %v414 = vld [vmem:[%s1 + $0xb48] sm:$0xff]
    %v415 = vld [vmem:[%s1 + $0xb50] sm:$0xff]
    %v416 = vld [vmem:[%s1 + $0xb58] sm:$0xff]
    %v417 = vld [vmem:[%s1 + $0xb60] sm:$0xff]
    %v418 = vld [vmem:[%s1 + $0xb68] sm:$0xff]
    %v419 = vld [vmem:[%s1 + $0xb70] sm:$0xff]
    %v420 = vld [vmem:[%s1 + $0xb78] sm:$0xff]
    %v421 = vld [vmem:[%s1 + $0xb80] sm:$0xff]
    %v422 = vld [vmem:[%s1 + $0xb88] sm:$0xff]
    %v423 = vld [vmem:[%s1 + $0xb90] sm:$0xff]
    %v424 = vld [vmem:[%s1 + $0xb98] sm:$0xff]
    %v425 = vld [vmem:[%s1 + $0xba0] sm:$0xff]
    %v426 = vld [vmem:[%s1 + $0xba8] sm:$0xff]
    %v427 = vld [vmem:[%s1 + $0xbb0] sm:$0xff]
    %v428 = vld [vmem:[%s1 + $0xbb8] sm:$0xff]
    %v429 = vld [vmem:[%s1 + $0xbc0] sm:$0xff]
    %v430 = vld [vmem:[%s1 + $0xbc8] sm:$0xff]
    %v431 = vld [vmem:[%s1 + $0xbd0] sm:$0xff]
    %v432 = vld [vmem:[%s1 + $0xbd8] sm:$0xff]
    %v433 = vld [vmem:[%s1 + $0xbe0] sm:$0xff]
    %v434 = vld [vmem:[%s1 + $0xbe8] sm:$0xff]
    %v435 = vld [vmem:[%s1 + $0xbf0] sm:$0xff]
    %v436 = vld [vmem:[%s1 + $0xbf8] sm:$0xff]
    %v437 = vld [vmem:[%s1 + $0xc00] sm:$0xff]
    %v438 = vld [vmem:[%s1 + $0xc08] sm:$0xff]
    %v439 = vld [vmem:[%s1 + $0xc10] sm:$0xff]
    %v440 = vld [vmem:[%s1 + $0xc18] sm:$0xff]
    %v441 = vld [vmem:[%s1 + $0xc20] sm:$0xff]
    %v442 = vld [vmem:[%s1 + $0xc28] sm:$0xff]
    %v443 = vld [vmem:[%s1 + $0xc30] sm:$0xff]
    %v444 = vld [vmem:[%s1 + $0xc38] sm:$0xff]
    %v445 = vld [vmem:[%s1 + $0xc40] sm:$0xff]
    %v446 = vld [vmem:[%s1 + $0xc48] sm:$0xff]
    %v447 = vld [vmem:[%s1 + $0xc50] sm:$0xff]
    %v448 = vld [vmem:[%s1 + $0xc58] sm:$0xff]
    %v449 = vld [vmem:[%s1 + $0xc60] sm:$0xff]
    %v450 = vld [vmem:[%s1 + $0xc68] sm:$0xff]
    %v451 = vld [vmem:[%s1 + $0xc70] sm:$0xff]
    %v452 = vld [vmem:[%s1 + $0xc78] sm:$0xff]
    %v453 = vld [vmem:[%s1 + $0xc80] sm:$0xff]
    %v454 = vld [vmem:[%s1 + $0xc88] sm:$0xff]
    %v455 = vld [vmem:[%s1 + $0xc90] sm:$0xff]
    %v456 = vld [vmem:[%s1 + $0xc98] sm:$0xff]
    %v457 = vld [vmem:[%s1 + $0xca0] sm:$0xff]
    %v458 = vld [vmem:[%s1 + $0xca8] sm:$0xff]
    %v459 = vld [vmem:[%s1 + $0xcb0] sm:$0xff]
    %v460 = vld [vmem:[%s1 + $0xcb8] sm:$0xff]
    %v461 = vld [vmem:[%s1 + $0xcc0] sm:$0xff]
    %v462 = vld [vmem:[%s1 + $0xcc8] sm:$0xff]
    %v463 = vld [vmem:[%s1 + $0xcd0] sm:$0xff]
    %v464 = vld [vmem:[%s1 + $0xcd8] sm:$0xff]
    %v465 = vld [vmem:[%s1 + $0xce0] sm:$0xff]
    %v466 = vld [vmem:[%s1 + $0xce8] sm:$0xff]
    %v467 = vld [vmem:[%s1 + $0xcf0] sm:$0xff]
    %v468 = vld [vmem:[%s1 + $0xcf8] sm:$0xff]
    %v469 = vld [vmem:[%s1 + $0xd00] sm:$0xff]
    %v470 = vld [vmem:[%s1 + $0xd08] sm:$0xff]
    %v471 = vld [vmem:[%s1 + $0xd10] sm:$0xff]
    %v472 = vld [vmem:[%s1 + $0xd18] sm:$0xff]
    %v473 = vld [vmem:[%s1 + $0xd20] sm:$0xff]
    %v474 = vld [vmem:[%s1 + $0xd28] sm:$0xff]
    %v475 = vld [vmem:[%s1 + $0xd30] sm:$0xff]
    %v476 = vld [vmem:[%s1 + $0xd38] sm:$0xff]
    %v477 = vld [vmem:[%s1 + $0xd40] sm:$0xff]
    %v478 = vld [vmem:[%s1 + $0xd48] sm:$0xff]
    %v479 = vld [vmem:[%s1 + $0xd50] sm:$0xff]
    %v480 = vld [vmem:[%s1 + $0xd58] sm:$0xff]
    %v481 = vld [vmem:[%s1 + $0xd60] sm:$0xff]
    %v482 = vld [vmem:[%s1 + $0xd68] sm:$0xff]
    %v483 = vld [vmem:[%s1 + $0xd70] sm:$0xff]
    %v484 = vld [vmem:[%s1 + $0xd78] sm:$0xff]
    %v485 = vld [vmem:[%s1 + $0xd80] sm:$0xff]
    %v486 = vld [vmem:[%s1 + $0xd88] sm:$0xff]
    %v487 = vld [vmem:[%s1 + $0xd90] sm:$0xff]
    %v488 = vld [vmem:[%s1 + $0xd98] sm:$0xff]
    %v489 = vld [vmem:[%s1 + $0xda0] sm:$0xff]
    %v490 = vld [vmem:[%s1 + $0xda8] sm:$0xff]
    %v491 = vld [vmem:[%s1 + $0xdb0] sm:$0xff]
    %v492 = vld [vmem:[%s1 + $0xdb8] sm:$0xff]
    %v493 = vld [vmem:[%s1 + $0xdc0] sm:$0xff]
    %v494 = vld [vmem:[%s1 + $0xdc8] sm:$0xff]
    %v495 = vld [vmem:[%s1 + $0xdd0] sm:$0xff]
    %v496 = vld [vmem:[%s1 + $0xdd8] sm:$0xff]
    %v497 = vld [vmem:[%s1 + $0xde0] sm:$0xff]
    %v498 = vld [vmem:[%s1 + $0xde8] sm:$0xff]
    %v499 = vld [vmem:[%s1 + $0xdf0] sm:$0xff]
    %v500 = vld [vmem:[%s1 + $0xdf8] sm:$0xff]
    %v501 = vld [vmem:[%s1 + $0xe00] sm:$0xff]
    %v502 = vld [vmem:[%s1 + $0xe08] sm:$0xff]
    %v503 = vld [vmem:[%s1 + $0xe10] sm:$0xff]
    %v504 = vld [vmem:[%s1 + $0xe18] sm:$0xff]
    %v505 = vld [vmem:[%s1 + $0xe20] sm:$0xff]
    %v506 = vld [vmem:[%s1 + $0xe28] sm:$0xff]
    %v507 = vld [vmem:[%s1 + $0xe30] sm:$0xff]
    %v508 = vld [vmem:[%s1 + $0xe38] sm:$0xff]
    %v509 = vld [vmem:[%s1 + $0xe40] sm:$0xff]
    %v510 = vld [vmem:[%s1 + $0xe48] sm:$0xff]
    %v511 = vld [vmem:[%s1 + $0xe50] sm:$0xff]
    %v512 = vld [vmem:[%s1 + $0xe58] sm:$0xff]
    %v513 = vld [vmem:[%s1 + $0xe60] sm:$0xff]
    %v514 = vld [vmem:[%s1 + $0xe68] sm:$0xff]
    %v515 = vld [vmem:[%s1 + $0xe70] sm:$0xff]
    %v516 = vld [vmem:[%s1 + $0xe78] sm:$0xff]
    %v517 = vld [vmem:[%s1 + $0xe80] sm:$0xff]
    %v518 = vld [vmem:[%s1 + $0xe88] sm:$0xff]
    %v519 = vld [vmem:[%s1 + $0xe90] sm:$0xff]
    %v520 = vld [vmem:[%s1 + $0xe98] sm:$0xff]
    %v521 = vld [vmem:[%s1 + $0xea0] sm:$0xff]
    %v522 = vld [vmem:[%s1 + $0xea8] sm:$0xff]
    %v523 = vld [vmem:[%s1 + $0xeb0] sm:$0xff]
    %v524 = vld [vmem:[%s1 + $0xeb8] sm:$0xff]
    %v525 = vld [vmem:[%s1 + $0xec0] sm:$0xff]
    %v526 = vld [vmem:[%s1 + $0xec8] sm:$0xff]
    %v527 = vld [vmem:[%s1 + $0xed0] sm:$0xff]
    %v528 = vld [vmem:[%s1 + $0xed8] sm:$0xff]
    %v529 = vld [vmem:[%s1 + $0xee0] sm:$0xff]
    %v530 = vld [vmem:[%s1 + $0xee8] sm:$0xff]
    %v531 = vld [vmem:[%s1 + $0xef0] sm:$0xff]
    %v532 = vld [vmem:[%s1 + $0xef8] sm:$0xff]
    %v533 = vld [vmem:[%s1 + $0xf00] sm:$0xff]
    %v534 = vld [vmem:[%s1 + $0xf08] sm:$0xff]
    %v535 = vld [vmem:[%s1 + $0xf10] sm:$0xff]
    %v536 = vld [vmem:[%s1 + $0xf18] sm:$0xff]
    %v537 = vld [vmem:[%s1 + $0xf20] sm:$0xff]
    %v538 = vld [vmem:[%s1 + $0xf28] sm:$0xff]
    %v539 = vld [vmem:[%s1 + $0xf30] sm:$0xff]
    %v540 = vld [vmem:[%s1 + $0xf38] sm:$0xff]
    %v541 = vld [vmem:[%s1 + $0xf40] sm:$0xff]
    %v542 = vld [vmem:[%s1 + $0xf48] sm:$0xff]
    %v543 = vld [vmem:[%s1 + $0xf50] sm:$0xff]
    %v544 = vld [vmem:[%s1 + $0xf58] sm:$0xff]
    %v545 = vld [vmem:[%s1 + $0xf60] sm:$0xff]
    %v546 = vld [vmem:[%s1 + $0xf68] sm:$0xff]
    %v547 = vld [vmem:[%s1 + $0xf70] sm:$0xff]
    %v548 = vld [vmem:[%s1 + $0xf78] sm:$0xff]
    %v549 = vld [vmem:[%s1 + $0xf80] sm:$0xff]
    %v550 = vld [vmem:[%s1 + $0xf88] sm:$0xff]
    %v551 = vld [vmem:[%s1 + $0xf90] sm:$0xff]
    %v552 = vld [vmem:[%s1 + $0xf98] sm:$0xff]
    %v553 = vld [vmem:[%s1 + $0xfa0] sm:$0xff]
    %v554 = vld [vmem:[%s1 + $0xfa8] sm:$0xff]
    %v555 = vld [vmem:[%s1 + $0xfb0] sm:$0xff]
    %v556 = vld [vmem:[%s1 + $0xfb8] sm:$0xff]
    %v557 = vld [vmem:[%s1 + $0xfc0] sm:$0xff]
    %v558 = vld [vmem:[%s1 + $0xfc8] sm:$0xff]
    %v559 = vld [vmem:[%s1 + $0xfd0] sm:$0xff]
    %v560 = vld [vmem:[%s1 + $0xfd8] sm:$0xff]
    %v561 = vld [vmem:[%s1 + $0xfe0] sm:$0xff]
    %v562 = vld [vmem:[%s1 + $0xfe8] sm:$0xff]
    %v563 = vld [vmem:[%s1 + $0xff0] sm:$0xff]
    %v564 = vld [vmem:[%s1 + $0xff8] sm:$0xff]
    %v565 = vld [vmem:[%s1 + $0x1000] sm:$0xff]
    %v566 = vld [vmem:[%s1 + $0x1008] sm:$0xff]
    %v567 = vld [vmem:[%s1 + $0x1010] sm:$0xff]
    %v568 = vld [vmem:[%s1 + $0x1018] sm:$0xff]
    %v569 = vld [vmem:[%s1 + $0x1020] sm:$0xff]
    %v570 = vld [vmem:[%s1 + $0x1028] sm:$0xff]
    %v571 = vld [vmem:[%s1 + $0x1030] sm:$0xff]
    %v572 = vld [vmem:[%s1 + $0x1038] sm:$0xff]
    %v573 = vld [vmem:[%s1 + $0x1040] sm:$0xff]
    %v574 = vld [vmem:[%s1 + $0x1048] sm:$0xff]
    %v575 = vld [vmem:[%s1 + $0x1050] sm:$0xff]
    %v576 = vld [vmem:[%s1 + $0x1058] sm:$0xff]
    %v577 = vld [vmem:[%s1 + $0x1060] sm:$0xff]
    %v578 = vld [vmem:[%s1 + $0x1068] sm:$0xff]
    %v579 = vld [vmem:[%s1 + $0x1070] sm:$0xff]
    %v580 = vld [vmem:[%s1 + $0x1078] sm:$0xff]
    %v581 = vld [vmem:[%s1 + $0x1080] sm:$0xff]
    %v582 = vld [vmem:[%s1 + $0x1088] sm:$0xff]
    %v583 = vld [vmem:[%s1 + $0x1090] sm:$0xff]
    %v584 = vld [vmem:[%s1 + $0x1098] sm:$0xff]
    %v585 = vld [vmem:[%s1 + $0x10a0] sm:$0xff]
    %v586 = vld [vmem:[%s1 + $0x10a8] sm:$0xff]
    %v587 = vld [vmem:[%s1 + $0x10b0] sm:$0xff]
    %v588 = vld [vmem:[%s1 + $0x10b8] sm:$0xff]
    %v589 = vld [vmem:[%s1 + $0x10c0] sm:$0xff]
    %v590 = vld [vmem:[%s1 + $0x10c8] sm:$0xff]
    %v591 = vld [vmem:[%s1 + $0x10d0] sm:$0xff]
    %v592 = vld [vmem:[%s1 + $0x10d8] sm:$0xff]
    %v593 = vld [vmem:[%s1 + $0x10e0] sm:$0xff]
    %v594 = vld [vmem:[%s1 + $0x10e8] sm:$0xff]
    %v595 = vld [vmem:[%s1 + $0x10f0] sm:$0xff]
    %v596 = vld [vmem:[%s1 + $0x10f8] sm:$0xff]
    %v597 = vld [vmem:[%s1 + $0x1100] sm:$0xff]
    %v598 = vld [vmem:[%s1 + $0x1108] sm:$0xff]
    %v599 = vld [vmem:[%s1 + $0x1110] sm:$0xff]
    %v600 = vld [vmem:[%s1 + $0x1118] sm:$0xff]
    %v601 = vld [vmem:[%s1 + $0x1120] sm:$0xff]
    %v602 = vld [vmem:[%s1 + $0x1128] sm:$0xff]
    %v603 = vld [vmem:[%s1 + $0x1130] sm:$0xff]
    %v604 = vld [vmem:[%s1 + $0x1138] sm:$0xff]
    %v605 = vld [vmem:[%s1 + $0x1140] sm:$0xff]
    %v606 = vld [vmem:[%s1 + $0x1148] sm:$0xff]
    %v607 = vld [vmem:[%s1 + $0x1150] sm:$0xff]
    %v608 = vld [vmem:[%s1 + $0x1158] sm:$0xff]
    %v609 = vld [vmem:[%s1 + $0x1160] sm:$0xff]
    %v610 = vld [vmem:[%s1 + $0x1168] sm:$0xff]
    %v611 = vld [vmem:[%s1 + $0x1170] sm:$0xff]
    %v612 = vld [vmem:[%s1 + $0x1178] sm:$0xff]
    %v613 = vld [vmem:[%s1 + $0x1180] sm:$0xff]
    %v614 = vld [vmem:[%s1 + $0x1188] sm:$0xff]
    %v615 = vld [vmem:[%s1 + $0x1190] sm:$0xff]
    %v616 = vld [vmem:[%s1 + $0x1198] sm:$0xff]
    %v617 = vld [vmem:[%s1 + $0x11a0] sm:$0xff]
    %v618 = vld [vmem:[%s1 + $0x11a8] sm:$0xff]
    %v619 = vld [vmem:[%s1 + $0x11b0] sm:$0xff]
    %v620 = vld [vmem:[%s1 + $0x11b8] sm:$0xff]
    %v621 = vld [vmem:[%s1 + $0x11c0] sm:$0xff]
    %v622 = vld [vmem:[%s1 + $0x11c8] sm:$0xff]
    %v623 = vld [vmem:[%s1 + $0x11d0] sm:$0xff]
    %v624 = vld [vmem:[%s1 + $0x11d8] sm:$0xff]
    %v625 = vld [vmem:[%s1 + $0x11e0] sm:$0xff]
    %v626 = vld [vmem:[%s1 + $0x11e8] sm:$0xff]
    %v627 = vld [vmem:[%s1 + $0x11f0] sm:$0xff]
    %v628 = vld [vmem:[%s1 + $0x11f8] sm:$0xff]
    %v629 = vld [vmem:[%s1 + $0x1200] sm:$0xff]
    %v630 = vld [vmem:[%s1 + $0x1208] sm:$0xff]
    %v631 = vld [vmem:[%s1 + $0x1210] sm:$0xff]
    %v632 = vld [vmem:[%s1 + $0x1218] sm:$0xff]
    %v633 = vld [vmem:[%s1 + $0x1220] sm:$0xff]
    %v634 = vld [vmem:[%s1 + $0x1228] sm:$0xff]
    %v635 = vld [vmem:[%s1 + $0x1230] sm:$0xff]
    %v636 = vld [vmem:[%s1 + $0x1238] sm:$0xff]
    %v637 = vld [vmem:[%s1 + $0x1240] sm:$0xff]
    %v638 = vld [vmem:[%s1 + $0x1248] sm:$0xff]
    %v639 = vld [vmem:[%s1 + $0x1250] sm:$0xff]
    %v640 = vld [vmem:[%s1 + $0x1258] sm:$0xff]
    %v641 = vld [vmem:[%s1 + $0x1260] sm:$0xff]
    %v642 = vld [vmem:[%s1 + $0x1268] sm:$0xff]
    %v643 = vld [vmem:[%s1 + $0x1270] sm:$0xff]
    %v644 = vld [vmem:[%s1 + $0x1278] sm:$0xff]
    %v645 = vld [vmem:[%s1 + $0x1280] sm:$0xff]
    %v646 = vld [vmem:[%s1 + $0x1288] sm:$0xff]
    %v647 = vld [vmem:[%s1 + $0x1290] sm:$0xff]
    %v648 = vld [vmem:[%s1 + $0x1298] sm:$0xff]
    %v649 = vld [vmem:[%s1 + $0x12a0] sm:$0xff]
    %v650 = vld [vmem:[%s1 + $0x12a8] sm:$0xff]
    %v651 = vld [vmem:[%s1 + $0x12b0] sm:$0xff]
    %v652 = vld [vmem:[%s1 + $0x12b8] sm:$0xff]
    %v653 = vld [vmem:[%s1 + $0x12c0] sm:$0xff]
    %v654 = vld [vmem:[%s1 + $0x12c8] sm:$0xff]
    %v655 = vld [vmem:[%s1 + $0x12d0] sm:$0xff]
    %v656 = vld [vmem:[%s1 + $0x12d8] sm:$0xff]
    %v657 = vld [vmem:[%s1 + $0x12e0] sm:$0xff]
    %v658 = vld [vmem:[%s1 + $0x12e8] sm:$0xff]
    %v659 = vld [vmem:[%s1 + $0x12f0] sm:$0xff]
    %v660 = vld [vmem:[%s1 + $0x12f8] sm:$0xff]
    %v661 = vld [vmem:[%s1 + $0x1300] sm:$0xff]
    %v662 = vld [vmem:[%s1 + $0x1308] sm:$0xff]
    %v663 = vld [vmem:[%s1 + $0x1310] sm:$0xff]
    %v664 = vld [vmem:[%s1 + $0x1318] sm:$0xff]
    %v665 = vld [vmem:[%s1 + $0x1320] sm:$0xff]
    %v666 = vld [vmem:[%s1 + $0x1328] sm:$0xff]
    %v667 = vld [vmem:[%s1 + $0x1330] sm:$0xff]
    %v668 = vld [vmem:[%s1 + $0x1338] sm:$0xff]
    %v669 = vld [vmem:[%s1 + $0x1340] sm:$0xff]
    %v670 = vld [vmem:[%s1 + $0x1348] sm:$0xff]
    %v671 = vld [vmem:[%s1 + $0x1350] sm:$0xff]
    %v672 = vld [vmem:[%s1 + $0x1358] sm:$0xff]
    %v673 = vld [vmem:[%s1 + $0x1360] sm:$0xff]
    %v674 = vld [vmem:[%s1 + $0x1368] sm:$0xff]
    %v675 = vld [vmem:[%s1 + $0x1370] sm:$0xff]
    %v676 = vld [vmem:[%s1 + $0x1378] sm:$0xff]
    %v677 = vld [vmem:[%s1 + $0x1380] sm:$0xff]
    %v678 = vld [vmem:[%s1 + $0x1388] sm:$0xff]
    %v679 = vld [vmem:[%s1 + $0x1390] sm:$0xff]
    %v680 = vld [vmem:[%s1 + $0x1398] sm:$0xff]
    %v681 = vld [vmem:[%s1 + $0x13a0] sm:$0xff]
    %v682 = vld [vmem:[%s1 + $0x13a8] sm:$0xff]
    %v683 = vld [vmem:[%s1 + $0x13b0] sm:$0xff]
    %v684 = vld [vmem:[%s1 + $0x13b8] sm:$0xff]
    %v685 = vld [vmem:[%s1 + $0x13c0] sm:$0xff]
    %v686 = vld [vmem:[%s1 + $0x13c8] sm:$0xff]
    %v687 = vld [vmem:[%s1 + $0x13d0] sm:$0xff]
    %v688 = vld [vmem:[%s1 + $0x13d8] sm:$0xff]
    %v689 = vld [vmem:[%s1 + $0x13e0] sm:$0xff]
    %v690 = vld [vmem:[%s1 + $0x13e8] sm:$0xff]
    %v691 = vld [vmem:[%s1 + $0x13f0] sm:$0xff]
    %v692 = vld [vmem:[%s1 + $0x13f8] sm:$0xff]
    %v693 = vld [vmem:[%s1 + $0x1400] sm:$0xff]
    %v694 = vld [vmem:[%s1 + $0x1408] sm:$0xff]
    %v695 = vld [vmem:[%s1 + $0x1410] sm:$0xff]
    %v696 = vld [vmem:[%s1 + $0x1418] sm:$0xff]
    %v697 = vld [vmem:[%s1 + $0x1420] sm:$0xff]
    %v698 = vld [vmem:[%s1 + $0x1428] sm:$0xff]
    %v699 = vld [vmem:[%s1 + $0x1430] sm:$0xff]
    %v700 = vld [vmem:[%s1 + $0x1438] sm:$0xff]
    %v701 = vld [vmem:[%s1 + $0x1440] sm:$0xff]
    %v702 = vld [vmem:[%s1 + $0x1448] sm:$0xff]
    %v703 = vld [vmem:[%s1 + $0x1450] sm:$0xff]
    %v704 = vld [vmem:[%s1 + $0x1458] sm:$0xff]
    %v705 = vld [vmem:[%s1 + $0x1460] sm:$0xff]
    %v706 = vld [vmem:[%s1 + $0x1468] sm:$0xff]
    %v707 = vld [vmem:[%s1 + $0x1470] sm:$0xff]
    %v708 = vld [vmem:[%s1 + $0x1478] sm:$0xff]
    %v709 = vld [vmem:[%s1 + $0x1480] sm:$0xff]
    %v710 = vld [vmem:[%s1 + $0x1488] sm:$0xff]
    %v711 = vld [vmem:[%s1 + $0x1490] sm:$0xff]
    %v712 = vld [vmem:[%s1 + $0x1498] sm:$0xff]
    %v713 = vld [vmem:[%s1 + $0x14a0] sm:$0xff]
    %v714 = vld [vmem:[%s1 + $0x14a8] sm:$0xff]
    %v715 = vld [vmem:[%s1 + $0x14b0] sm:$0xff]
    %v716 = vld [vmem:[%s1 + $0x14b8] sm:$0xff]
    %v717 = vld [vmem:[%s1 + $0x14c0] sm:$0xff]
    %v718 = vld [vmem:[%s1 + $0x14c8] sm:$0xff]
    %v719 = vld [vmem:[%s1 + $0x14d0] sm:$0xff]
    %v720 = vld [vmem:[%s1 + $0x14d8] sm:$0xff]
    %v721 = vld [vmem:[%s1 + $0x14e0] sm:$0xff]
    %v722 = vld [vmem:[%s1 + $0x14e8] sm:$0xff]
    %v723 = vld [vmem:[%s1 + $0x14f0] sm:$0xff]
    %v724 = vld [vmem:[%s1 + $0x14f8] sm:$0xff]
    %v725 = vld [vmem:[%s1 + $0x1500] sm:$0xff]
    %v726 = vld [vmem:[%s1 + $0x1508] sm:$0xff]
    %v727 = vld [vmem:[%s1 + $0x1510] sm:$0xff]
    %v728 = vld [vmem:[%s1 + $0x1518] sm:$0xff]
    %v729 = vld [vmem:[%s1 + $0x1520] sm:$0xff]
    %v730 = vld [vmem:[%s1 + $0x1528] sm:$0xff]
    %v731 = vld [vmem:[%s1 + $0x1530] sm:$0xff]
    %v732 = vld [vmem:[%s1 + $0x1538] sm:$0xff]
    %v733 = vld [vmem:[%s1 + $0x1540] sm:$0xff]
    %v734 = vld [vmem:[%s1 + $0x1548] sm:$0xff]
    %v735 = vld [vmem:[%s1 + $0x1550] sm:$0xff]
    %v736 = vld [vmem:[%s1 + $0x1558] sm:$0xff]
    %v737 = vld [vmem:[%s1 + $0x1560] sm:$0xff]
    %v738 = vld [vmem:[%s1 + $0x1568] sm:$0xff]
    %v739 = vld [vmem:[%s1 + $0x1570] sm:$0xff]
    %v740 = vld [vmem:[%s1 + $0x1578] sm:$0xff]
    %v741 = vld [vmem:[%s1 + $0x1580] sm:$0xff]
    %v742 = vld [vmem:[%s1 + $0x1588] sm:$0xff]
    %v743 = vld [vmem:[%s1 + $0x1590] sm:$0xff]
    %v744 = vld [vmem:[%s1 + $0x1598] sm:$0xff]
    %v745 = vld [vmem:[%s1 + $0x15a0] sm:$0xff]
    %v746 = vld [vmem:[%s1 + $0x15a8] sm:$0xff]
    %v747 = vld [vmem:[%s1 + $0x15b0] sm:$0xff]
    %v748 = vld [vmem:[%s1 + $0x15b8] sm:$0xff]
    %v749 = vld [vmem:[%s1 + $0x15c0] sm:$0xff]
    %v750 = vld [vmem:[%s1 + $0x15c8] sm:$0xff]
    %v751 = vld [vmem:[%s1 + $0x15d0] sm:$0xff]
    %v752 = vld [vmem:[%s1 + $0x15d8] sm:$0xff]
    %v753 = vld [vmem:[%s1 + $0x15e0] sm:$0xff]
    %v754 = vld [vmem:[%s1 + $0x15e8] sm:$0xff]
    %v755 = vld [vmem:[%s1 + $0x15f0] sm:$0xff]
    %v756 = vld [vmem:[%s1 + $0x15f8] sm:$0xff]
    %v757 = vld [vmem:[%s1 + $0x1600] sm:$0xff]
    %v758 = vld [vmem:[%s1 + $0x1608] sm:$0xff]
    %v759 = vld [vmem:[%s1 + $0x1610] sm:$0xff]
    %v760 = vld [vmem:[%s1 + $0x1618] sm:$0xff]
    %v761 = vld [vmem:[%s1 + $0x1620] sm:$0xff]
    %v762 = vld [vmem:[%s1 + $0x1628] sm:$0xff]
    %v763 = vld [vmem:[%s1 + $0x1630] sm:$0xff]
    %v764 = vld [vmem:[%s1 + $0x1638] sm:$0xff]
    %v765 = vld [vmem:[%s1 + $0x1640] sm:$0xff]
    %v766 = vld [vmem:[%s1 + $0x1648] sm:$0xff]
    %v767 = vld [vmem:[%s1 + $0x1650] sm:$0xff]
    %v768 = vld [vmem:[%s1 + $0x1658] sm:$0xff]
    %v769 = vld [vmem:[%s1 + $0x1660] sm:$0xff]
    %v770 = vld [vmem:[%s1 + $0x1668] sm:$0xff]
    %v771 = vld [vmem:[%s1 + $0x1670] sm:$0xff]
    %v772 = vld [vmem:[%s1 + $0x1678] sm:$0xff]
    %v773 = vld [vmem:[%s1 + $0x1680] sm:$0xff]
    %v774 = vld [vmem:[%s1 + $0x1688] sm:$0xff]
    %v775 = vld [vmem:[%s1 + $0x1690] sm:$0xff]
    %v776 = vld [vmem:[%s1 + $0x1698] sm:$0xff]
    %v777 = vld [vmem:[%s1 + $0x16a0] sm:$0xff]
    %v778 = vld [vmem:[%s1 + $0x16a8] sm:$0xff]
    %v779 = vld [vmem:[%s1 + $0x16b0] sm:$0xff]
    %v780 = vld [vmem:[%s1 + $0x16b8] sm:$0xff]
    %v781 = vld [vmem:[%s1 + $0x16c0] sm:$0xff]
    %v782 = vld [vmem:[%s1 + $0x16c8] sm:$0xff]
    %v783 = vld [vmem:[%s1 + $0x16d0] sm:$0xff]
    %v784 = vld [vmem:[%s1 + $0x16d8] sm:$0xff]
    %v785 = vld [vmem:[%s1 + $0x16e0] sm:$0xff]
    %v786 = vld [vmem:[%s1 + $0x16e8] sm:$0xff]
    %v787 = vld [vmem:[%s1 + $0x16f0] sm:$0xff]
    %v788 = vld [vmem:[%s1 + $0x16f8] sm:$0xff]
    %v789 = vld [vmem:[%s1 + $0x1700] sm:$0xff]
    %v790 = vld [vmem:[%s1 + $0x1708] sm:$0xff]
    %v791 = vld [vmem:[%s1 + $0x1710] sm:$0xff]
    %v792 = vld [vmem:[%s1 + $0x1718] sm:$0xff]
    %v793 = vld [vmem:[%s1 + $0x1720] sm:$0xff]
    %v794 = vld [vmem:[%s1 + $0x1728] sm:$0xff]
    %v795 = vld [vmem:[%s1 + $0x1730] sm:$0xff]
    %v796 = vld [vmem:[%s1 + $0x1738] sm:$0xff]
    %v797 = vld [vmem:[%s1 + $0x1740] sm:$0xff]
    %v798 = vld [vmem:[%s1 + $0x1748] sm:$0xff]
    %v799 = vld [vmem:[%s1 + $0x1750] sm:$0xff]
    %v800 = vld [vmem:[%s1 + $0x1758] sm:$0xff]
    %v801 = vld [vmem:[%s1 + $0x1760] sm:$0xff]
    %v802 = vld [vmem:[%s1 + $0x1768] sm:$0xff]
    %v803 = vld [vmem:[%s1 + $0x1770] sm:$0xff]
    %v804 = vld [vmem:[%s1 + $0x1778] sm:$0xff]
    %v805 = vld [vmem:[%s1 + $0x1780] sm:$0xff]
    %v806 = vld [vmem:[%s1 + $0x1788] sm:$0xff]
    %v807 = vld [vmem:[%s1 + $0x1790] sm:$0xff]
    %v808 = vld [vmem:[%s1 + $0x1798] sm:$0xff]
    %v809 = vld [vmem:[%s1 + $0x17a0] sm:$0xff]
    %v810 = vld [vmem:[%s1 + $0x17a8] sm:$0xff]
    %v811 = vld [vmem:[%s1 + $0x17b0] sm:$0xff]
    %v812 = vld [vmem:[%s1 + $0x17b8] sm:$0xff]
    %v813 = vld [vmem:[%s1 + $0x17c0] sm:$0xff]
    %v814 = vld [vmem:[%s1 + $0x17c8] sm:$0xff]
    %v815 = vld [vmem:[%s1 + $0x17d0] sm:$0xff]
    %v816 = vld [vmem:[%s1 + $0x17d8] sm:$0xff]
    %v817 = vld [vmem:[%s1 + $0x17e0] sm:$0xff]
    %v818 = vld [vmem:[%s1 + $0x17e8] sm:$0xff]
    %v819 = vld [vmem:[%s1 + $0x17f0] sm:$0xff]
    %v820 = vld [vmem:[%s1 + $0x17f8] sm:$0xff]
    %v821 = vld [vmem:[%s1 + $0x1800] sm:$0xff]
    %v822 = vld [vmem:[%s1 + $0x1808] sm:$0xff]
    %v823 = vld [vmem:[%s1 + $0x1810] sm:$0xff]
    %v824 = vld [vmem:[%s1 + $0x1818] sm:$0xff]
    %v825 = vld [vmem:[%s1 + $0x1820] sm:$0xff]
    %v826 = vld [vmem:[%s1 + $0x1828] sm:$0xff]
    %v827 = vld [vmem:[%s1 + $0x1830] sm:$0xff]
    %v828 = vld [vmem:[%s1 + $0x1838] sm:$0xff]
    %v829 = vld [vmem:[%s1 + $0x1840] sm:$0xff]
    %v830 = vld [vmem:[%s1 + $0x1848] sm:$0xff]
    %v831 = vld [vmem:[%s1 + $0x1850] sm:$0xff]
    %v832 = vld [vmem:[%s1 + $0x1858] sm:$0xff]
    %v833 = vld [vmem:[%s1 + $0x1860] sm:$0xff]
    %v834 = vld [vmem:[%s1 + $0x1868] sm:$0xff]
    %v835 = vld [vmem:[%s1 + $0x1870] sm:$0xff]
    %v836 = vld [vmem:[%s1 + $0x1878] sm:$0xff]
    %v837 = vld [vmem:[%s1 + $0x1880] sm:$0xff]
    %v838 = vld [vmem:[%s1 + $0x1888] sm:$0xff]
    %v839 = vld [vmem:[%s1 + $0x1890] sm:$0xff]
    %v840 = vld [vmem:[%s1 + $0x1898] sm:$0xff]
    %v841 = vld [vmem:[%s1 + $0x18a0] sm:$0xff]
    %v842 = vld [vmem:[%s1 + $0x18a8] sm:$0xff]
    %v843 = vld [vmem:[%s1 + $0x18b0] sm:$0xff]
    %v844 = vld [vmem:[%s1 + $0x18b8] sm:$0xff]
    %v845 = vld [vmem:[%s1 + $0x18c0] sm:$0xff]
    %v846 = vld [vmem:[%s1 + $0x18c8] sm:$0xff]
    %v847 = vld [vmem:[%s1 + $0x18d0] sm:$0xff]
    %v848 = vld [vmem:[%s1 + $0x18d8] sm:$0xff]
    %v849 = vld [vmem:[%s1 + $0x18e0] sm:$0xff]
    %v850 = vld [vmem:[%s1 + $0x18e8] sm:$0xff]
    %v851 = vld [vmem:[%s1 + $0x18f0] sm:$0xff]
    %v852 = vld [vmem:[%s1 + $0x18f8] sm:$0xff]
    %v853 = vld [vmem:[%s1 + $0x1900] sm:$0xff]
    %v854 = vld [vmem:[%s1 + $0x1908] sm:$0xff]
    %v855 = vld [vmem:[%s1 + $0x1910] sm:$0xff]
    %v856 = vld [vmem:[%s1 + $0x1918] sm:$0xff]
    %v857 = vld [vmem:[%s1 + $0x1920] sm:$0xff]
    %v858 = vld [vmem:[%s1 + $0x1928] sm:$0xff]
    %v859 = vld [vmem:[%s1 + $0x1930] sm:$0xff]
    %v860 = vld [vmem:[%s1 + $0x1938] sm:$0xff]
    %v861 = vld [vmem:[%s1 + $0x1940] sm:$0xff]
    %v862 = vld [vmem:[%s1 + $0x1948] sm:$0xff]
    %v863 = vld [vmem:[%s1 + $0x1950] sm:$0xff]
    %v864 = vld [vmem:[%s1 + $0x1958] sm:$0xff]
    %v865 = vld [vmem:[%s1 + $0x1960] sm:$0xff]
    %v866 = vld [vmem:[%s1 + $0x1968] sm:$0xff]
    %v867 = vld [vmem:[%s1 + $0x1970] sm:$0xff]
    %v868 = vld [vmem:[%s1 + $0x1978] sm:$0xff]
    %v869 = vld [vmem:[%s1 + $0x1980] sm:$0xff]
    %v870 = vld [vmem:[%s1 + $0x1988] sm:$0xff]
    %v871 = vld [vmem:[%s1 + $0x1990] sm:$0xff]
    %v872 = vld [vmem:[%s1 + $0x1998] sm:$0xff]
    %v873 = vld [vmem:[%s1 + $0x19a0] sm:$0xff]
    %v874 = vld [vmem:[%s1 + $0x19a8] sm:$0xff]
    %v875 = vld [vmem:[%s1 + $0x19b0] sm:$0xff]
    %v876 = vld [vmem:[%s1 + $0x19b8] sm:$0xff]
    %v877 = vld [vmem:[%s1 + $0x19c0] sm:$0xff]
    %v878 = vld [vmem:[%s1 + $0x19c8] sm:$0xff]
    %v879 = vld [vmem:[%s1 + $0x19d0] sm:$0xff]
    %v880 = vld [vmem:[%s1 + $0x19d8] sm:$0xff]
    %v881 = vld [vmem:[%s1 + $0x19e0] sm:$0xff]
    %v882 = vld [vmem:[%s1 + $0x19e8] sm:$0xff]
    %v883 = vld [vmem:[%s1 + $0x19f0] sm:$0xff]
    %v884 = vld [vmem:[%s1 + $0x19f8] sm:$0xff]
    %v885 = vld [vmem:[%s1 + $0x1a00] sm:$0xff]
    %v886 = vld [vmem:[%s1 + $0x1a08] sm:$0xff]
    %v887 = vld [vmem:[%s1 + $0x1a10] sm:$0xff]
    %v888 = vld [vmem:[%s1 + $0x1a18] sm:$0xff]
    %v889 = vld [vmem:[%s1 + $0x1a20] sm:$0xff]
    %v890 = vld [vmem:[%s1 + $0x1a28] sm:$0xff]
    %v891 = vld [vmem:[%s1 + $0x1a30] sm:$0xff]
    %v892 = vld [vmem:[%s1 + $0x1a38] sm:$0xff]
    %v893 = vld [vmem:[%s1 + $0x1a40] sm:$0xff]
    %v894 = vld [vmem:[%s1 + $0x1a48] sm:$0xff]
    %v895 = vld [vmem:[%s1 + $0x1a50] sm:$0xff]
    %v896 = vld [vmem:[%s1 + $0x1a58] sm:$0xff]
    %v897 = vld [vmem:[%s1 + $0x1a60] sm:$0xff]
    %v898 = vld [vmem:[%s1 + $0x1a68] sm:$0xff]
    %v899 = vld [vmem:[%s1 + $0x1a70] sm:$0xff]
    %v900 = vld [vmem:[%s1 + $0x1a78] sm:$0xff]
    %v901 = vld [vmem:[%s1 + $0x1a80] sm:$0xff]
    %v902 = vld [vmem:[%s1 + $0x1a88] sm:$0xff]
    %v903 = vld [vmem:[%s1 + $0x1a90] sm:$0xff]
    %v904 = vld [vmem:[%s1 + $0x1a98] sm:$0xff]
    %v905 = vld [vmem:[%s1 + $0x1aa0] sm:$0xff]
    %v906 = vld [vmem:[%s1 + $0x1aa8] sm:$0xff]
    %v907 = vld [vmem:[%s1 + $0x1ab0] sm:$0xff]
    %v908 = vld [vmem:[%s1 + $0x1ab8] sm:$0xff]
    %v909 = vld [vmem:[%s1 + $0x1ac0] sm:$0xff]
    %v910 = vld [vmem:[%s1 + $0x1ac8] sm:$0xff]
    %v911 = vld [vmem:[%s1 + $0x1ad0] sm:$0xff]
    %v912 = vld [vmem:[%s1 + $0x1ad8] sm:$0xff]
    %v913 = vld [vmem:[%s1 + $0x1ae0] sm:$0xff]
    %v914 = vld [vmem:[%s1 + $0x1ae8] sm:$0xff]
    %v915 = vld [vmem:[%s1 + $0x1af0] sm:$0xff]
    %v916 = vld [vmem:[%s1 + $0x1af8] sm:$0xff]
    %v917 = vld [vmem:[%s1 + $0x1b00] sm:$0xff]
    %v918 = vld [vmem:[%s1 + $0x1b08] sm:$0xff]
    %v919 = vld [vmem:[%s1 + $0x1b10] sm:$0xff]
    %v920 = vld [vmem:[%s1 + $0x1b18] sm:$0xff]
    %v921 = vld [vmem:[%s1 + $0x1b20] sm:$0xff]
    %v922 = vld [vmem:[%s1 + $0x1b28] sm:$0xff]
    %v923 = vld [vmem:[%s1 + $0x1b30] sm:$0xff]
    %v924 = vld [vmem:[%s1 + $0x1b38] sm:$0xff]
    %v925 = vld [vmem:[%s1 + $0x1b40] sm:$0xff]
    %v926 = vld [vmem:[%s1 + $0x1b48] sm:$0xff]
    %v927 = vld [vmem:[%s1 + $0x1b50] sm:$0xff]
    %v928 = vld [vmem:[%s1 + $0x1b58] sm:$0xff]
    %v929 = vld [vmem:[%s1 + $0x1b60] sm:$0xff]
    %v930 = vld [vmem:[%s1 + $0x1b68] sm:$0xff]
    %v931 = vld [vmem:[%s1 + $0x1b70] sm:$0xff]
    %v932 = vld [vmem:[%s1 + $0x1b78] sm:$0xff]
    %v933 = vld [vmem:[%s1 + $0x1b80] sm:$0xff]
    %v934 = vld [vmem:[%s1 + $0x1b88] sm:$0xff]
    %v935 = vld [vmem:[%s1 + $0x1b90] sm:$0xff]
    %v936 = vld [vmem:[%s1 + $0x1b98] sm:$0xff]
    %v937 = vld [vmem:[%s1 + $0x1ba0] sm:$0xff]
    %v938 = vld [vmem:[%s1 + $0x1ba8] sm:$0xff]
    %v939 = vld [vmem:[%s1 + $0x1bb0] sm:$0xff]
    %v940 = vld [vmem:[%s1 + $0x1bb8] sm:$0xff]
    %v941 = vld [vmem:[%s1 + $0x1bc0] sm:$0xff]
    %v942 = vld [vmem:[%s1 + $0x1bc8] sm:$0xff]
    %v943 = vld [vmem:[%s1 + $0x1bd0] sm:$0xff]
    %v944 = vld [vmem:[%s1 + $0x1bd8] sm:$0xff]
    %v945 = vld [vmem:[%s1 + $0x1be0] sm:$0xff]
    %v946 = vld [vmem:[%s1 + $0x1be8] sm:$0xff]
    %v947 = vld [vmem:[%s1 + $0x1bf0] sm:$0xff]
    %v948 = vld [vmem:[%s1 + $0x1bf8] sm:$0xff]
    %v949 = vld [vmem:[%s1 + $0x1c00] sm:$0xff]
    %v950 = vld [vmem:[%s1 + $0x1c08] sm:$0xff]
    %v951 = vld [vmem:[%s1 + $0x1c10] sm:$0xff]
    %v952 = vld [vmem:[%s1 + $0x1c18] sm:$0xff]
    %v953 = vld [vmem:[%s1 + $0x1c20] sm:$0xff]
    %v954 = vld [vmem:[%s1 + $0x1c28] sm:$0xff]
    %v955 = vld [vmem:[%s1 + $0x1c30] sm:$0xff]
    %v956 = vld [vmem:[%s1 + $0x1c38] sm:$0xff]
    %v957 = vld [vmem:[%s1 + $0x1c40] sm:$0xff]
    %v958 = vld [vmem:[%s1 + $0x1c48] sm:$0xff]
    %v959 = vld [vmem:[%s1 + $0x1c50] sm:$0xff]
    %v960 = vld [vmem:[%s1 + $0x1c58] sm:$0xff]
    %v961 = vld [vmem:[%s1 + $0x1c60] sm:$0xff]
    %v962 = vld [vmem:[%s1 + $0x1c68] sm:$0xff]
    %v963 = vld [vmem:[%s1 + $0x1c70] sm:$0xff]
    %v964 = vld [vmem:[%s1 + $0x1c78] sm:$0xff]
    %v965 = vld [vmem:[%s1 + $0x1c80] sm:$0xff]
    %v966 = vld [vmem:[%s1 + $0x1c88] sm:$0xff]
    %v967 = vld [vmem:[%s1 + $0x1c90] sm:$0xff]
    %v968 = vld [vmem:[%s1 + $0x1c98] sm:$0xff]
    %v969 = vld [vmem:[%s1 + $0x1ca0] sm:$0xff]
    %v970 = vld [vmem:[%s1 + $0x1ca8] sm:$0xff]
    %v971 = vld [vmem:[%s1 + $0x1cb0] sm:$0xff]
    %v972 = vld [vmem:[%s1 + $0x1cb8] sm:$0xff]
    %v973 = vld [vmem:[%s1 + $0x1cc0] sm:$0xff]
    %v974 = vld [vmem:[%s1 + $0x1cc8] sm:$0xff]
    %v975 = vld [vmem:[%s1 + $0x1cd0] sm:$0xff]
    %v976 = vld [vmem:[%s1 + $0x1cd8] sm:$0xff]
    %v977 = vld [vmem:[%s1 + $0x1ce0] sm:$0xff]
    %v978 = vld [vmem:[%s1 + $0x1ce8] sm:$0xff]
    %v979 = vld [vmem:[%s1 + $0x1cf0] sm:$0xff]
    %v980 = vld [vmem:[%s1 + $0x1cf8] sm:$0xff]
    %v981 = vld [vmem:[%s1 + $0x1d00] sm:$0xff]
    %v982 = vld [vmem:[%s1 + $0x1d08] sm:$0xff]
    %v983 = vld [vmem:[%s1 + $0x1d10] sm:$0xff]
    %v984 = vld [vmem:[%s1 + $0x1d18] sm:$0xff]
    %v985 = vld [vmem:[%s1 + $0x1d20] sm:$0xff]
    %v986 = vld [vmem:[%s1 + $0x1d28] sm:$0xff]
    %v987 = vld [vmem:[%s1 + $0x1d30] sm:$0xff]
    %v988 = vld [vmem:[%s1 + $0x1d38] sm:$0xff]
    %v989 = vld [vmem:[%s1 + $0x1d40] sm:$0xff]
    %v990 = vld [vmem:[%s1 + $0x1d48] sm:$0xff]
    %v991 = vld [vmem:[%s1 + $0x1d50] sm:$0xff]
    %v992 = vld [vmem:[%s1 + $0x1d58] sm:$0xff]
    %v993 = vld [vmem:[%s1 + $0x1d60] sm:$0xff]
    %v994 = vld [vmem:[%s1 + $0x1d68] sm:$0xff]
    %v995 = vld [vmem:[%s1 + $0x1d70] sm:$0xff]
    %v996 = vld [vmem:[%s1 + $0x1d78] sm:$0xff]
    %v997 = vld [vmem:[%s1 + $0x1d80] sm:$0xff]
    %v998 = vld [vmem:[%s1 + $0x1d88] sm:$0xff]
    %v999 = vld [vmem:[%s1 + $0x1d90] sm:$0xff]
    %v1000 = vld [vmem:[%s1 + $0x1d98] sm:$0xff]
    %v1001 = vld [vmem:[%s1 + $0x1da0] sm:$0xff]
    %v1002 = vld [vmem:[%s1 + $0x1da8] sm:$0xff]
    %v1003 = vld [vmem:[%s1 + $0x1db0] sm:$0xff]
    %v1004 = vld [vmem:[%s1 + $0x1db8] sm:$0xff]
    %v1005 = vld [vmem:[%s1 + $0x1dc0] sm:$0xff]
    %v1006 = vld [vmem:[%s1 + $0x1dc8] sm:$0xff]
    %v1007 = vld [vmem:[%s1 + $0x1dd0] sm:$0xff]
    %v1008 = vld [vmem:[%s1 + $0x1dd8] sm:$0xff]
    %v1009 = vld [vmem:[%s1 + $0x1de0] sm:$0xff]
    %v1010 = vld [vmem:[%s1 + $0x1de8] sm:$0xff]
    %v1011 = vld [vmem:[%s1 + $0x1df0] sm:$0xff]
    %v1012 = vld [vmem:[%s1 + $0x1df8] sm:$0xff]
    %v1013 = vld [vmem:[%s1 + $0x1e00] sm:$0xff]
    %v1014 = vld [vmem:[%s1 + $0x1e08] sm:$0xff]
    %v1015 = vld [vmem:[%s1 + $0x1e10] sm:$0xff]
    %v1016 = vld [vmem:[%s1 + $0x1e18] sm:$0xff]
    %v1017 = vld [vmem:[%s1 + $0x1e20] sm:$0xff]
    %v1018 = vld [vmem:[%s1 + $0x1e28] sm:$0xff]
    %v1019 = vld [vmem:[%s1 + $0x1e30] sm:$0xff]
    %v1020 = vld [vmem:[%s1 + $0x1e38] sm:$0xff]
    %v1021 = vld [vmem:[%s1 + $0x1e40] sm:$0xff]
    %v1022 = vld [vmem:[%s1 + $0x1e48] sm:$0xff]
    %v1023 = vld [vmem:[%s1 + $0x1e50] sm:$0xff]
    %v1024 = vld [vmem:[%s1 + $0x1e58] sm:$0xff]
    %v1025 = vld [vmem:[%s1 + $0x1e60] sm:$0xff]
    %v1026 = vld [vmem:[%s1 + $0x1e68] sm:$0xff]
    %v1027 = vld [vmem:[%s1 + $0x1e70] sm:$0xff]
    %v1028 = vld [vmem:[%s1 + $0x1e78] sm:$0xff]
    %v1029 = vld [vmem:[%s1 + $0x1e80] sm:$0xff]
    %v1030 = vld [vmem:[%s1 + $0x1e88] sm:$0xff]
    %v1031 = vld [vmem:[%s1 + $0x1e90] sm:$0xff]
    %v1032 = vld [vmem:[%s1 + $0x1e98] sm:$0xff]
    %v1033 = vld [vmem:[%s1 + $0x1ea0] sm:$0xff]
    %v1034 = vld [vmem:[%s1 + $0x1ea8] sm:$0xff]
    %v1035 = vld [vmem:[%s1 + $0x1eb0] sm:$0xff]
    %v1036 = vld [vmem:[%s1 + $0x1eb8] sm:$0xff]
    %v1037 = vld [vmem:[%s1 + $0x1ec0] sm:$0xff]
    %v1038 = vld [vmem:[%s1 + $0x1ec8] sm:$0xff]
    %v1039 = vld [vmem:[%s1 + $0x1ed0] sm:$0xff]
    %v1040 = vld [vmem:[%s1 + $0x1ed8] sm:$0xff]
    %v1041 = vld [vmem:[%s1 + $0x1ee0] sm:$0xff]
    %v1042 = vld [vmem:[%s1 + $0x1ee8] sm:$0xff]
    %v1043 = vld [vmem:[%s1 + $0x1ef0] sm:$0xff]
    %v1044 = vld [vmem:[%s1 + $0x1ef8] sm:$0xff]
    %v1045 = vld [vmem:[%s1 + $0x1f00] sm:$0xff]
    %v1046 = vld [vmem:[%s1 + $0x1f08] sm:$0xff]
    %v1047 = vld [vmem:[%s1 + $0x1f10] sm:$0xff]
    %v1048 = vld [vmem:[%s1 + $0x1f18] sm:$0xff]
    %v1049 = vld [vmem:[%s1 + $0x1f20] sm:$0xff]
    %v1050 = vld [vmem:[%s1 + $0x1f28] sm:$0xff]
    %v1051 = vld [vmem:[%s1 + $0x1f30] sm:$0xff]
    %v1052 = vld [vmem:[%s1 + $0x1f38] sm:$0xff]
    %v1053 = vld [vmem:[%s1 + $0x1f40] sm:$0xff]
    %v1054 = vld [vmem:[%s1 + $0x1f48] sm:$0xff]
    %v1055 = vld [vmem:[%s1 + $0x1f50] sm:$0xff]
    %v1056 = vld [vmem:[%s1 + $0x1f58] sm:$0xff]
    %v1057 = vld [vmem:[%s1 + $0x1f60] sm:$0xff]
    %v1058 = vld [vmem:[%s1 + $0x1f68] sm:$0xff]
    %v1059 = vld [vmem:[%s1 + $0x1f70] sm:$0xff]
    %v1060 = vld [vmem:[%s1 + $0x1f78] sm:$0xff]
    %v1061 = vld [vmem:[%s1 + $0x1f80] sm:$0xff]
    %v1062 = vld [vmem:[%s1 + $0x1f88] sm:$0xff]
    %v1063 = vld [vmem:[%s1 + $0x1f90] sm:$0xff]
    %v1064 = vld [vmem:[%s1 + $0x1f98] sm:$0xff]
    %v1065 = vld [vmem:[%s1 + $0x1fa0] sm:$0xff]
    %v1066 = vld [vmem:[%s1 + $0x1fa8] sm:$0xff]
    %v1067 = vld [vmem:[%s1 + $0x1fb0] sm:$0xff]
    %v1068 = vld [vmem:[%s1 + $0x1fb8] sm:$0xff]
    %v1069 = vld [vmem:[%s1 + $0x1fc0] sm:$0xff]
    %v1070 = vld [vmem:[%s1 + $0x1fc8] sm:$0xff]
    %v1071 = vld [vmem:[%s1 + $0x1fd0] sm:$0xff]
    %v1072 = vld [vmem:[%s1 + $0x1fd8] sm:$0xff]
    %v1073 = vld [vmem:[%s1 + $0x1fe0] sm:$0xff]
    %v1074 = vld [vmem:[%s1 + $0x1fe8] sm:$0xff]
    %v1075 = vld [vmem:[%s1 + $0x1ff0] sm:$0xff]
    %v1076 = vld [vmem:[%s1 + $0x1ff8] sm:$0xff]
    %v1077 = vld [vmem:[%s1 + $0x2000] sm:$0xff]
    %v1078 = vld [vmem:[%s1 + $0x2008] sm:$0xff]
    %v1079 = vld [vmem:[%s1 + $0x2010] sm:$0xff]
    %v1080 = vld [vmem:[%s1 + $0x2018] sm:$0xff]
    %v1081 = vld [vmem:[%s1 + $0x2020] sm:$0xff]
    %v1082 = vld [vmem:[%s1 + $0x2028] sm:$0xff]
    %v1083 = vld [vmem:[%s1 + $0x2030] sm:$0xff]
    %v1084 = vld [vmem:[%s1 + $0x2038] sm:$0xff]
    %v1085 = vld [vmem:[%s1 + $0x2040] sm:$0xff]
    %v1086 = vld [vmem:[%s1 + $0x2048] sm:$0xff]
    %v1087 = vld [vmem:[%s1 + $0x2050] sm:$0xff]
    %v1088 = vld [vmem:[%s1 + $0x2058] sm:$0xff]
    %v1089 = vld [vmem:[%s1 + $0x2060] sm:$0xff]
    %v1090 = vld [vmem:[%s1 + $0x2068] sm:$0xff]
    %v1091 = vld [vmem:[%s1 + $0x2070] sm:$0xff]
    %v1092 = vld [vmem:[%s1 + $0x2078] sm:$0xff]
    %v1093 = vld [vmem:[%s1 + $0x2080] sm:$0xff]
    %v1094 = vld [vmem:[%s1 + $0x2088] sm:$0xff]
    %v1095 = vld [vmem:[%s1 + $0x2090] sm:$0xff]
    %v1096 = vld [vmem:[%s1 + $0x2098] sm:$0xff]
    %v1097 = vld [vmem:[%s1 + $0x20a0] sm:$0xff]
    %v1098 = vld [vmem:[%s1 + $0x20a8] sm:$0xff]
    %v1099 = vld [vmem:[%s1 + $0x20b0] sm:$0xff]
    %v1100 = vld [vmem:[%s1 + $0x20b8] sm:$0xff]
    %v1101 = vld [vmem:[%s1 + $0x20c0] sm:$0xff]
    %v1102 = vld [vmem:[%s1 + $0x20c8] sm:$0xff]
    %v1103 = vld [vmem:[%s1 + $0x20d0] sm:$0xff]
    %v1104 = vld [vmem:[%s1 + $0x20d8] sm:$0xff]
    %v1105 = vld [vmem:[%s1 + $0x20e0] sm:$0xff]
    %v1106 = vld [vmem:[%s1 + $0x20e8] sm:$0xff]
    %v1107 = vld [vmem:[%s1 + $0x20f0] sm:$0xff]
    %v1108 = vld [vmem:[%s1 + $0x20f8] sm:$0xff]
    %v1109 = vld [vmem:[%s1 + $0x2100] sm:$0xff]
    %v1110 = vld [vmem:[%s1 + $0x2108] sm:$0xff]
    %v1111 = vld [vmem:[%s1 + $0x2110] sm:$0xff]
    %v1112 = vld [vmem:[%s1 + $0x2118] sm:$0xff]
    %v1113 = vld [vmem:[%s1 + $0x2120] sm:$0xff]
    %v1114 = vld [vmem:[%s1 + $0x2128] sm:$0xff]
    %v1115 = vld [vmem:[%s1 + $0x2130] sm:$0xff]
    %v1116 = vld [vmem:[%s1 + $0x2138] sm:$0xff]
    %v1117 = vld [vmem:[%s1 + $0x2140] sm:$0xff]
    %v1118 = vld [vmem:[%s1 + $0x2148] sm:$0xff]
    %v1119 = vld [vmem:[%s1 + $0x2150] sm:$0xff]
    %v1120 = vld [vmem:[%s1 + $0x2158] sm:$0xff]
    %v1121 = vld [vmem:[%s1 + $0x2160] sm:$0xff]
    %v1122 = vld [vmem:[%s1 + $0x2168] sm:$0xff]
    %v1123 = vld [vmem:[%s1 + $0x2170] sm:$0xff]
    %v1124 = vld [vmem:[%s1 + $0x2178] sm:$0xff]
    %v1125 = vld [vmem:[%s1 + $0x2180] sm:$0xff]
    %v1126 = vld [vmem:[%s1 + $0x2188] sm:$0xff]
    %v1127 = vld [vmem:[%s1 + $0x2190] sm:$0xff]
    %v1128 = vld [vmem:[%s1 + $0x2198] sm:$0xff]
    %v1129 = vld [vmem:[%s1 + $0x21a0] sm:$0xff]
    %v1130 = vld [vmem:[%s1 + $0x21a8] sm:$0xff]
    %v1131 = vld [vmem:[%s1 + $0x21b0] sm:$0xff]
    %v1132 = vld [vmem:[%s1 + $0x21b8] sm:$0xff]
    %v1133 = vld [vmem:[%s1 + $0x21c0] sm:$0xff]
    %v1134 = vld [vmem:[%s1 + $0x21c8] sm:$0xff]
    %v1135 = vld [vmem:[%s1 + $0x21d0] sm:$0xff]
    %v1136 = vld [vmem:[%s1 + $0x21d8] sm:$0xff]
    %v1137 = vld [vmem:[%s1 + $0x21e0] sm:$0xff]
    %v1138 = vld [vmem:[%s1 + $0x21e8] sm:$0xff]
    %v1139 = vld [vmem:[%s1 + $0x21f0] sm:$0xff]
    %v1140 = vld [vmem:[%s1 + $0x21f8] sm:$0xff]
    %v1141 = vld [vmem:[%s1 + $0x2200] sm:$0xff]
    %v1142 = vld [vmem:[%s1 + $0x2208] sm:$0xff]
    %v1143 = vld [vmem:[%s1 + $0x2210] sm:$0xff]
    %v1144 = vld [vmem:[%s1 + $0x2218] sm:$0xff]
    %v1145 = vld [vmem:[%s1 + $0x2220] sm:$0xff]
    %v1146 = vld [vmem:[%s1 + $0x2228] sm:$0xff]
    %v1147 = vld [vmem:[%s1 + $0x2230] sm:$0xff]
    %v1148 = vld [vmem:[%s1 + $0x2238] sm:$0xff]
    %v1149 = vld [vmem:[%s1 + $0x2240] sm:$0xff]
    %v1150 = vld [vmem:[%s1 + $0x2248] sm:$0xff]
    %vm1151 = vcmask 916480
    %v1153 = vsel %vm1151, %v52, 0
    %1155 = vmatprep.subr.mxu0 %v54
    %1156 = vmatpush1.msra.mxu0 %v53
    %1157 = vmatprep.subr.mxu0 %v57
    %1158 = vmatpush1.msra.mxu0 %v56
    %1159 = vmatprep.subr.mxu0 %v60
    %1160 = vmatpush1.msra.mxu0 %v59
    %1161 = vmatprep.subr.mxu0 %v63
    %1162 = vmatpush1.msra.mxu0 %v62
    %1163 = vmatprep.subr.mxu0 %v66
    %1164 = vmatpush1.msra.mxu0 %v65
    %1165 = vmatprep.subr.mxu0 %v69
    %1166 = vmatpush1.msra.mxu0 %v68
    %1167 = vmatprep.subr.mxu0 %v72
    %1168 = vmatpush1.msra.mxu0 %v71
    %1169 = vmatprep.subr.mxu0 %v75
    %1170 = vmatpush1.msra.mxu0 %v74
    %1171 = vmatprep.subr.mxu0 %v78
    %1172 = vmatpush1.msra.mxu0 %v77
    %1173 = vmatprep.subr.mxu0 %v81
    %1174 = vmatpush1.msra.mxu0 %v80
    %1175 = vmatprep.subr.mxu0 %v84
    %1176 = vmatpush1.msra.mxu0 %v83
    %1177 = vmatprep.subr.mxu0 %v87
    %1178 = vmatpush1.msra.mxu0 %v86
    %1179 = vmatprep.subr.mxu0 %v90
    %1180 = vmatpush1.msra.mxu0 %v89
    %1181 = vmatprep.subr.mxu0 %v93
    %1182 = vmatpush1.msra.mxu0 %v92
    %1183 = vmatprep.subr.mxu0 %v96
    %1184 = vmatpush1.msra.mxu0 %v95
    %1185 = vmatprep.subr.mxu0 %v99
    %1186 = vmatpush1.msra.mxu0 %v98
    %1187 = vmatprep.subr.mxu0 %v102
    %1188 = vmatpush1.msra.mxu0 %v101
    %1189 = vmatprep.subr.mxu0 %v105
    %1190 = vmatpush1.msra.mxu0 %v104
    %1191 = vmatprep.subr.mxu0 %v108
    %1192 = vmatpush1.msra.mxu0 %v107
    %1193 = vmatprep.subr.mxu0 %v111
    %1194 = vmatpush1.msra.mxu0 %v110
    %1195 = vmatprep.subr.mxu0 %v114
    %1196 = vmatpush1.msra.mxu0 %v113
    %1197 = vmatprep.subr.mxu0 %v117
    %1198 = vmatpush1.msra.mxu0 %v116
    %1199 = vmatprep.subr.mxu0 %v120
    %1200 = vmatpush1.msra.mxu0 %v119
    %1201 = vmatprep.subr.mxu0 %v123
    %1202 = vmatpush1.msra.mxu0 %v122
    %1203 = vmatprep.subr.mxu0 %v126
    %1204 = vmatpush1.msra.mxu0 %v125
    %1205 = vmatprep.subr.mxu0 %v129
    %1206 = vmatpush1.msra.mxu0 %v128
    %1207 = vmatprep.subr.mxu0 %v132
    %1208 = vmatpush1.msra.mxu0 %v131
    %1209 = vmatprep.subr.mxu0 %v135
    %1210 = vmatpush1.msra.mxu0 %v134
    %1211 = vmatprep.subr.mxu0 %v138
    %1212 = vmatpush1.msra.mxu0 %v137
    %1213 = vmatprep.subr.mxu0 %v141
    %1214 = vmatpush1.msra.mxu0 %v140
    %1215 = vmatprep.subr.mxu0 %v144
    %1216 = vmatpush1.msra.mxu0 %v143
    %1217 = vmatprep.subr.mxu0 %v147
    %1218 = vmatpush1.msra.mxu0 %v146
    %1219 = vmatprep.mubr.f32.mxu0 %v31
    %1220 = vmatmul.mubr.f32.gmra.mrb[0].mxu0 %v30
    %v1221 = vpop.f32.mrb[0].mxu0
    %v1222 = vadd.f32 0.0, %v1221
    %v1223 = vpop.f32.mrb[0].mxu0
    %v1224 = vadd.f32 0.0, %v1223
    %1225 = vdwg.mxu0
    %1226 = vmatprep.subr.mxu0 %v150
    %1227 = vmatpush1.msra.mxu0 %v149
    %1228 = vmatprep.subr.mxu0 %v153
    %1229 = vmatpush1.msra.mxu0 %v152
    %1230 = vmatprep.subr.mxu0 %v156
    %1231 = vmatpush1.msra.mxu0 %v155
    %1232 = vmatprep.subr.mxu0 %v159
    %1233 = vmatpush1.msra.mxu0 %v158
    %1234 = vmatprep.subr.mxu0 %v162
    %1235 = vmatpush1.msra.mxu0 %v161
    %1236 = vmatprep.subr.mxu0 %v165
    %1237 = vmatpush1.msra.mxu0 %v164
    %1238 = vmatprep.subr.mxu0 %v168
    %1239 = vmatpush1.msra.mxu0 %v167
    %1240 = vmatprep.subr.mxu0 %v171
    %1241 = vmatpush1.msra.mxu0 %v170
    %1242 = vmatprep.subr.mxu0 %v174
    %1243 = vmatpush1.msra.mxu0 %v173
    %1244 = vmatprep.subr.mxu0 %v177
    %1245 = vmatpush1.msra.mxu0 %v176
    %1246 = vmatprep.subr.mxu0 %v180
    %1247 = vmatpush1.msra.mxu0 %v179
    %1248 = vmatprep.subr.mxu0 %v183
    %1249 = vmatpush1.msra.mxu0 %v182
    %1250 = vmatprep.subr.mxu0 %v186
    %1251 = vmatpush1.msra.mxu0 %v185
    %1252 = vmatprep.subr.mxu0 %v189
    %1253 = vmatpush1.msra.mxu0 %v188
    %1254 = vmatprep.subr.mxu0 %v192
    %1255 = vmatpush1.msra.mxu0 %v191
    %1256 = vmatprep.subr.mxu0 %v195
    %1257 = vmatpush1.msra.mxu0 %v194
    %1258 = vmatprep.subr.mxu0 %v198
    %1259 = vmatpush1.msra.mxu0 %v197
    %1260 = vmatprep.subr.mxu0 %v201
    %1261 = vmatpush1.msra.mxu0 %v200
    %1262 = vmatprep.subr.mxu0 %v204
    %1263 = vmatpush1.msra.mxu0 %v203
    %1264 = vmatprep.subr.mxu0 %v207
    %1265 = vmatpush1.msra.mxu0 %v206
    %1266 = vmatprep.subr.mxu0 %v210
    %1267 = vmatpush1.msra.mxu0 %v209
    %1268 = vmatprep.subr.mxu0 %v213
    %1269 = vmatpush1.msra.mxu0 %v212
    %1270 = vmatprep.subr.mxu0 %v216
    %1271 = vmatpush1.msra.mxu0 %v215
    %1272 = vmatprep.subr.mxu0 %v219
    %1273 = vmatpush1.msra.mxu0 %v218
    %1274 = vmatprep.subr.mxu0 %v222
    %1275 = vmatpush1.msra.mxu0 %v221
    %1276 = vmatprep.subr.mxu0 %v225
    %1277 = vmatpush1.msra.mxu0 %v224
    %1278 = vmatprep.subr.mxu0 %v228
    %1279 = vmatpush1.msra.mxu0 %v227
    %1280 = vmatprep.subr.mxu0 %v231
    %1281 = vmatpush1.msra.mxu0 %v230
    %1282 = vmatprep.subr.mxu0 %v234
    %1283 = vmatpush1.msra.mxu0 %v233
    %1284 = vmatprep.subr.mxu0 %v237
    %1285 = vmatpush1.msra.mxu0 %v236
    %1286 = vmatprep.subr.mxu0 %v240
    %1287 = vmatpush1.msra.mxu0 %v239
    %1288 = vmatprep.subr.mxu0 %v243
    %1289 = vmatpush1.msra.mxu0 %v242
    %1290 = vmatprep.mubr.f32.mxu0 %v33
    %1291 = vmatmul.mubr.f32.gmra.mrb[0].mxu0 %v32
    %v1292 = vpop.f32.mrb[0].mxu0
    %v1293 = vadd.f32 %v1222, %v1292
    %v1294 = vpop.f32.mrb[0].mxu0
    %v1295 = vadd.f32 %v1224, %v1294
    %1296 = vdwg.mxu0
    %1297 = vmatprep.subr.mxu0 %v246
    %1298 = vmatpush1.msra.mxu0 %v245
    %1299 = vmatprep.subr.mxu0 %v249
    %1300 = vmatpush1.msra.mxu0 %v248
    %1301 = vmatprep.subr.mxu0 %v252
    %1302 = vmatpush1.msra.mxu0 %v251
    %1303 = vmatprep.subr.mxu0 %v255
    %1304 = vmatpush1.msra.mxu0 %v254
    %1305 = vmatprep.subr.mxu0 %v258
    %1306 = vmatpush1.msra.mxu0 %v257
    %1307 = vmatprep.subr.mxu0 %v261
    %1308 = vmatpush1.msra.mxu0 %v260
    %1309 = vmatprep.subr.mxu0 %v264
    %1310 = vmatpush1.msra.mxu0 %v263
    %1311 = vmatprep.subr.mxu0 %v267
    %1312 = vmatpush1.msra.mxu0 %v266
    %1313 = vmatprep.subr.mxu0 %v270
    %1314 = vmatpush1.msra.mxu0 %v269
    %1315 = vmatprep.subr.mxu0 %v273
    %1316 = vmatpush1.msra.mxu0 %v272
    %1317 = vmatprep.subr.mxu0 %v276
    %1318 = vmatpush1.msra.mxu0 %v275
    %1319 = vmatprep.subr.mxu0 %v279
    %1320 = vmatpush1.msra.mxu0 %v278
    %1321 = vmatprep.subr.mxu0 %v282
    %1322 = vmatpush1.msra.mxu0 %v281
    %1323 = vmatprep.subr.mxu0 %v285
    %1324 = vmatpush1.msra.mxu0 %v284
    %1325 = vmatprep.subr.mxu0 %v288
    %1326 = vmatpush1.msra.mxu0 %v287
    %1327 = vmatprep.subr.mxu0 %v291
    %1328 = vmatpush1.msra.mxu0 %v290
    %1329 = vmatprep.subr.mxu0 %v294
    %1330 = vmatpush1.msra.mxu0 %v293
    %1331 = vmatprep.subr.mxu0 %v297
    %1332 = vmatpush1.msra.mxu0 %v296
    %1333 = vmatprep.subr.mxu0 %v300
    %1334 = vmatpush1.msra.mxu0 %v299
    %1335 = vmatprep.subr.mxu0 %v303
    %1336 = vmatpush1.msra.mxu0 %v302
    %1337 = vmatprep.subr.mxu0 %v306
    %1338 = vmatpush1.msra.mxu0 %v305
    %1339 = vmatprep.subr.mxu0 %v309
    %1340 = vmatpush1.msra.mxu0 %v308
    %1341 = vmatprep.subr.mxu0 %v312
    %1342 = vmatpush1.msra.mxu0 %v311
    %1343 = vmatprep.subr.mxu0 %v315
    %1344 = vmatpush1.msra.mxu0 %v314
    %1345 = vmatprep.subr.mxu0 %v318
    %1346 = vmatpush1.msra.mxu0 %v317
    %1347 = vmatprep.subr.mxu0 %v321
    %1348 = vmatpush1.msra.mxu0 %v320
    %1349 = vmatprep.subr.mxu0 %v324
    %1350 = vmatpush1.msra.mxu0 %v323
    %1351 = vmatprep.subr.mxu0 %v327
    %1352 = vmatpush1.msra.mxu0 %v326
    %1353 = vmatprep.subr.mxu0 %v330
    %1354 = vmatpush1.msra.mxu0 %v329
    %1355 = vmatprep.subr.mxu0 %v333
    %1356 = vmatpush1.msra.mxu0 %v332
    %1357 = vmatprep.subr.mxu0 %v336
    %1358 = vmatpush1.msra.mxu0 %v335
    %1359 = vmatprep.subr.mxu0 %v339
    %1360 = vmatpush1.msra.mxu0 %v338
    %1361 = vmatprep.mubr.f32.mxu0 %v35
    %1362 = vmatmul.mubr.f32.gmra.mrb[0].mxu0 %v34
    %v1363 = vpop.f32.mrb[0].mxu0
    %v1364 = vadd.f32 %v1293, %v1363
    %v1365 = vpop.f32.mrb[0].mxu0
    %v1366 = vadd.f32 %v1295, %v1365
    %1367 = vdwg.mxu0
    %1368 = vmatprep.subr.mxu0 %v342
    %1369 = vmatpush1.msra.mxu0 %v341
    %1370 = vmatprep.subr.mxu0 %v345
    %1371 = vmatpush1.msra.mxu0 %v344
    %1372 = vmatprep.subr.mxu0 %v348
    %1373 = vmatpush1.msra.mxu0 %v347
    %1374 = vmatprep.subr.mxu0 %v351
    %1375 = vmatpush1.msra.mxu0 %v350
    %1376 = vmatprep.subr.mxu0 %v354
    %1377 = vmatpush1.msra.mxu0 %v353
    %1378 = vmatprep.subr.mxu0 %v357
    %1379 = vmatpush1.msra.mxu0 %v356
    %1380 = vmatprep.subr.mxu0 %v360
    %1381 = vmatpush1.msra.mxu0 %v359
    %1382 = vmatprep.subr.mxu0 %v363
    %1383 = vmatpush1.msra.mxu0 %v362
    %1384 = vmatprep.subr.mxu0 %v366
    %1385 = vmatpush1.msra.mxu0 %v365
    %1386 = vmatprep.subr.mxu0 %v369
    %1387 = vmatpush1.msra.mxu0 %v368
    %1388 = vmatprep.subr.mxu0 %v372
    %1389 = vmatpush1.msra.mxu0 %v371
    %1390 = vmatprep.subr.mxu0 %v375
    %1391 = vmatpush1.msra.mxu0 %v374
    %1392 = vmatprep.subr.mxu0 %v378
    %1393 = vmatpush1.msra.mxu0 %v377
    %1394 = vmatprep.subr.mxu0 %v381
    %1395 = vmatpush1.msra.mxu0 %v380
    %1396 = vmatprep.subr.mxu0 %v384
    %1397 = vmatpush1.msra.mxu0 %v383
    %1398 = vmatprep.subr.mxu0 %v387
    %1399 = vmatpush1.msra.mxu0 %v386
    %1400 = vmatprep.subr.mxu0 %v390
    %1401 = vmatpush1.msra.mxu0 %v389
    %1402 = vmatprep.subr.mxu0 %v393
    %1403 = vmatpush1.msra.mxu0 %v392
    %1404 = vmatprep.subr.mxu0 %v396
    %1405 = vmatpush1.msra.mxu0 %v395
    %1406 = vmatprep.subr.mxu0 %v399
    %1407 = vmatpush1.msra.mxu0 %v398
    %1408 = vmatprep.subr.mxu0 %v402
    %1409 = vmatpush1.msra.mxu0 %v401
    %1410 = vmatprep.subr.mxu0 %v405
    %1411 = vmatpush1.msra.mxu0 %v404
    %1412 = vmatprep.subr.mxu0 %v408
    %1413 = vmatpush1.msra.mxu0 %v407
    %1414 = vmatprep.subr.mxu0 %v411
    %1415 = vmatpush1.msra.mxu0 %v410
    %1416 = vmatprep.subr.mxu0 %v414
    %1417 = vmatpush1.msra.mxu0 %v413
    %1418 = vmatprep.subr.mxu0 %v417
    %1419 = vmatpush1.msra.mxu0 %v416
    %1420 = vmatprep.subr.mxu0 %v420
    %1421 = vmatpush1.msra.mxu0 %v419
    %1422 = vmatprep.subr.mxu0 %v423
    %1423 = vmatpush1.msra.mxu0 %v422
    %1424 = vmatprep.subr.mxu0 %v426
    %1425 = vmatpush1.msra.mxu0 %v425
    %1426 = vmatprep.subr.mxu0 %v429
    %1427 = vmatpush1.msra.mxu0 %v428
    %1428 = vmatprep.subr.mxu0 %v432
    %1429 = vmatpush1.msra.mxu0 %v431
    %1430 = vmatprep.subr.mxu0 %v435
    %1431 = vmatpush1.msra.mxu0 %v434
    %1432 = vmatprep.mubr.f32.mxu0 %v37
    %1433 = vmatmul.mubr.f32.gmra.mrb[0].mxu0 %v36
    %v1434 = vpop.f32.mrb[0].mxu0
    %v1435 = vadd.f32 %v1364, %v1434
    %v1436 = vpop.f32.mrb[0].mxu0
    %v1437 = vadd.f32 %v1366, %v1436
    %1438 = vdwg.mxu0
    %1439 = vmatprep.subr.mxu0 %v438
    %1440 = vmatpush1.msra.mxu0 %v437
    %1441 = vmatprep.subr.mxu0 %v441
    %1442 = vmatpush1.msra.mxu0 %v440
    %1443 = vmatprep.subr.mxu0 %v444
    %1444 = vmatpush1.msra.mxu0 %v443
    %1445 = vmatprep.subr.mxu0 %v447
    %1446 = vmatpush1.msra.mxu0 %v446
    %1447 = vmatprep.subr.mxu0 %v450
    %1448 = vmatpush1.msra.mxu0 %v449
    %1449 = vmatprep.subr.mxu0 %v453
    %1450 = vmatpush1.msra.mxu0 %v452
    %1451 = vmatprep.subr.mxu0 %v456
    %1452 = vmatpush1.msra.mxu0 %v455
    %1453 = vmatprep.subr.mxu0 %v459
    %1454 = vmatpush1.msra.mxu0 %v458
    %1455 = vmatprep.subr.mxu0 %v462
    %1456 = vmatpush1.msra.mxu0 %v461
    %1457 = vmatprep.subr.mxu0 %v465
    %1458 = vmatpush1.msra.mxu0 %v464
    %1459 = vmatprep.subr.mxu0 %v468
    %1460 = vmatpush1.msra.mxu0 %v467
    %1461 = vmatprep.subr.mxu0 %v471
    %1462 = vmatpush1.msra.mxu0 %v470
    %1463 = vmatprep.subr.mxu0 %v474
    %1464 = vmatpush1.msra.mxu0 %v473
    %1465 = vmatprep.subr.mxu0 %v477
    %1466 = vmatpush1.msra.mxu0 %v476
    %1467 = vmatprep.subr.mxu0 %v480
    %1468 = vmatpush1.msra.mxu0 %v479
    %1469 = vmatprep.subr.mxu0 %v483
    %1470 = vmatpush1.msra.mxu0 %v482
    %1471 = vmatprep.subr.mxu0 %v486
    %1472 = vmatpush1.msra.mxu0 %v485
    %1473 = vmatprep.subr.mxu0 %v489
    %1474 = vmatpush1.msra.mxu0 %v488
    %1475 = vmatprep.subr.mxu0 %v492
    %1476 = vmatpush1.msra.mxu0 %v491
    %1477 = vmatprep.subr.mxu0 %v495
    %1478 = vmatpush1.msra.mxu0 %v494
    %1479 = vmatprep.subr.mxu0 %v498
    %1480 = vmatpush1.msra.mxu0 %v497
    %1481 = vmatprep.subr.mxu0 %v501
    %1482 = vmatpush1.msra.mxu0 %v500
    %1483 = vmatprep.subr.mxu0 %v504
    %1484 = vmatpush1.msra.mxu0 %v503
    %1485 = vmatprep.subr.mxu0 %v507
    %1486 = vmatpush1.msra.mxu0 %v506
    %1487 = vmatprep.subr.mxu0 %v510
    %1488 = vmatpush1.msra.mxu0 %v509
    %1489 = vmatprep.subr.mxu0 %v513
    %1490 = vmatpush1.msra.mxu0 %v512
    %1491 = vmatprep.subr.mxu0 %v516
    %1492 = vmatpush1.msra.mxu0 %v515
    %1493 = vmatprep.subr.mxu0 %v519
    %1494 = vmatpush1.msra.mxu0 %v518
    %1495 = vmatprep.subr.mxu0 %v522
    %1496 = vmatpush1.msra.mxu0 %v521
    %1497 = vmatprep.subr.mxu0 %v525
    %1498 = vmatpush1.msra.mxu0 %v524
    %1499 = vmatprep.subr.mxu0 %v528
    %1500 = vmatpush1.msra.mxu0 %v527
    %1501 = vmatprep.subr.mxu0 %v531
    %1502 = vmatpush1.msra.mxu0 %v530
    %1503 = vmatprep.mubr.f32.mxu0 %v39
    %1504 = vmatmul.mubr.f32.gmra.mrb[0].mxu0 %v38
    %v1505 = vpop.f32.mrb[0].mxu0
    %v1506 = vadd.f32 %v1435, %v1505
    %v1507 = vpop.f32.mrb[0].mxu0
    %v1508 = vadd.f32 %v1437, %v1507
    %1509 = vdwg.mxu0
    %1510 = vmatprep.subr.mxu0 %v534
    %1511 = vmatpush1.msra.mxu0 %v533
    %1512 = vmatprep.subr.mxu0 %v537
    %1513 = vmatpush1.msra.mxu0 %v536
    %1514 = vmatprep.subr.mxu0 %v540
    %1515 = vmatpush1.msra.mxu0 %v539
    %1516 = vmatprep.subr.mxu0 %v543
    %1517 = vmatpush1.msra.mxu0 %v542
    %1518 = vmatprep.subr.mxu0 %v546
    %1519 = vmatpush1.msra.mxu0 %v545
    %1520 = vmatprep.subr.mxu0 %v549
    %1521 = vmatpush1.msra.mxu0 %v548
    %1522 = vmatprep.subr.mxu0 %v552
    %1523 = vmatpush1.msra.mxu0 %v551
    %1524 = vmatprep.subr.mxu0 %v555
    %1525 = vmatpush1.msra.mxu0 %v554
    %1526 = vmatprep.subr.mxu0 %v558
    %1527 = vmatpush1.msra.mxu0 %v557
    %1528 = vmatprep.subr.mxu0 %v561
    %1529 = vmatpush1.msra.mxu0 %v560
    %1530 = vmatprep.subr.mxu0 %v564
    %1531 = vmatpush1.msra.mxu0 %v563
    %1532 = vmatprep.subr.mxu0 %v567
    %1533 = vmatpush1.msra.mxu0 %v566
    %1534 = vmatprep.subr.mxu0 %v570
    %1535 = vmatpush1.msra.mxu0 %v569
    %1536 = vmatprep.subr.mxu0 %v573
    %1537 = vmatpush1.msra.mxu0 %v572
    %1538 = vmatprep.subr.mxu0 %v576
    %1539 = vmatpush1.msra.mxu0 %v575
    %1540 = vmatprep.subr.mxu0 %v579
    %1541 = vmatpush1.msra.mxu0 %v578
    %1542 = vmatprep.subr.mxu0 %v582
    %1543 = vmatpush1.msra.mxu0 %v581
    %1544 = vmatprep.subr.mxu0 %v585
    %1545 = vmatpush1.msra.mxu0 %v584
    %1546 = vmatprep.subr.mxu0 %v588
    %1547 = vmatpush1.msra.mxu0 %v587
    %1548 = vmatprep.subr.mxu0 %v591
    %1549 = vmatpush1.msra.mxu0 %v590
    %1550 = vmatprep.subr.mxu0 %v594
    %1551 = vmatpush1.msra.mxu0 %v593
    %1552 = vmatprep.subr.mxu0 %v597
    %1553 = vmatpush1.msra.mxu0 %v596
    %1554 = vmatprep.subr.mxu0 %v600
    %1555 = vmatpush1.msra.mxu0 %v599
    %1556 = vmatprep.subr.mxu0 %v603
    %1557 = vmatpush1.msra.mxu0 %v602
    %1558 = vmatprep.subr.mxu0 %v606
    %1559 = vmatpush1.msra.mxu0 %v605
    %1560 = vmatprep.subr.mxu0 %v609
    %1561 = vmatpush1.msra.mxu0 %v608
    %1562 = vmatprep.subr.mxu0 %v612
    %1563 = vmatpush1.msra.mxu0 %v611
    %1564 = vmatprep.subr.mxu0 %v615
    %1565 = vmatpush1.msra.mxu0 %v614
    %1566 = vmatprep.subr.mxu0 %v618
    %1567 = vmatpush1.msra.mxu0 %v617
    %1568 = vmatprep.subr.mxu0 %v621
    %1569 = vmatpush1.msra.mxu0 %v620
    %1570 = vmatprep.subr.mxu0 %v624
    %1571 = vmatpush1.msra.mxu0 %v623
    %1572 = vmatprep.subr.mxu0 %v627
    %1573 = vmatpush1.msra.mxu0 %v626
    %1574 = vmatprep.mubr.f32.mxu0 %v41
    %1575 = vmatmul.mubr.f32.gmra.mrb[0].mxu0 %v40
    %v1576 = vpop.f32.mrb[0].mxu0
    %v1577 = vadd.f32 %v1506, %v1576
    %v1578 = vpop.f32.mrb[0].mxu0
    %v1579 = vadd.f32 %v1508, %v1578
    %1580 = vdwg.mxu0
    %1581 = vmatprep.subr.mxu0 %v630
    %1582 = vmatpush1.msra.mxu0 %v629
    %1583 = vmatprep.subr.mxu0 %v633
    %1584 = vmatpush1.msra.mxu0 %v632
    %1585 = vmatprep.subr.mxu0 %v636
    %1586 = vmatpush1.msra.mxu0 %v635
    %1587 = vmatprep.subr.mxu0 %v639
    %1588 = vmatpush1.msra.mxu0 %v638
    %1589 = vmatprep.subr.mxu0 %v642
    %1590 = vmatpush1.msra.mxu0 %v641
    %1591 = vmatprep.subr.mxu0 %v645
    %1592 = vmatpush1.msra.mxu0 %v644
    %1593 = vmatprep.subr.mxu0 %v648
    %1594 = vmatpush1.msra.mxu0 %v647
    %1595 = vmatprep.subr.mxu0 %v651
    %1596 = vmatpush1.msra.mxu0 %v650
    %1597 = vmatprep.subr.mxu0 %v654
    %1598 = vmatpush1.msra.mxu0 %v653
    %1599 = vmatprep.subr.mxu0 %v657
    %1600 = vmatpush1.msra.mxu0 %v656
    %1601 = vmatprep.subr.mxu0 %v660
    %1602 = vmatpush1.msra.mxu0 %v659
    %1603 = vmatprep.subr.mxu0 %v663
    %1604 = vmatpush1.msra.mxu0 %v662
    %1605 = vmatprep.subr.mxu0 %v666
    %1606 = vmatpush1.msra.mxu0 %v665
    %1607 = vmatprep.subr.mxu0 %v669
    %1608 = vmatpush1.msra.mxu0 %v668
    %1609 = vmatprep.subr.mxu0 %v672
    %1610 = vmatpush1.msra.mxu0 %v671
    %1611 = vmatprep.subr.mxu0 %v675
    %1612 = vmatpush1.msra.mxu0 %v674
    %1613 = vmatprep.subr.mxu0 %v678
    %1614 = vmatpush1.msra.mxu0 %v677
    %1615 = vmatprep.subr.mxu0 %v681
    %1616 = vmatpush1.msra.mxu0 %v680
    %1617 = vmatprep.subr.mxu0 %v684
    %1618 = vmatpush1.msra.mxu0 %v683
    %1619 = vmatprep.subr.mxu0 %v687
    %1620 = vmatpush1.msra.mxu0 %v686
    %1621 = vmatprep.subr.mxu0 %v690
    %1622 = vmatpush1.msra.mxu0 %v689
    %1623 = vmatprep.subr.mxu0 %v693
    %1624 = vmatpush1.msra.mxu0 %v692
    %1625 = vmatprep.subr.mxu0 %v696
    %1626 = vmatpush1.msra.mxu0 %v695
    %1627 = vmatprep.subr.mxu0 %v699
    %1628 = vmatpush1.msra.mxu0 %v698
    %1629 = vmatprep.subr.mxu0 %v702
    %1630 = vmatpush1.msra.mxu0 %v701
    %1631 = vmatprep.subr.mxu0 %v705
    %1632 = vmatpush1.msra.mxu0 %v704
    %1633 = vmatprep.subr.mxu0 %v708
    %1634 = vmatpush1.msra.mxu0 %v707
    %1635 = vmatprep.subr.mxu0 %v711
    %1636 = vmatpush1.msra.mxu0 %v710
    %1637 = vmatprep.subr.mxu0 %v714
    %1638 = vmatpush1.msra.mxu0 %v713
    %1639 = vmatprep.subr.mxu0 %v717
    %1640 = vmatpush1.msra.mxu0 %v716
    %1641 = vmatprep.subr.mxu0 %v720
    %1642 = vmatpush1.msra.mxu0 %v719
    %1643 = vmatprep.subr.mxu0 %v723
    %1644 = vmatpush1.msra.mxu0 %v722
    %1645 = vmatprep.mubr.f32.mxu0 %v43
    %1646 = vmatmul.mubr.f32.gmra.mrb[0].mxu0 %v42
    %v1647 = vpop.f32.mrb[0].mxu0
    %v1648 = vadd.f32 %v1577, %v1647
    %v1649 = vpop.f32.mrb[0].mxu0
    %v1650 = vadd.f32 %v1579, %v1649
    %1651 = vdwg.mxu0
    %1652 = vmatprep.subr.mxu0 %v726
    %1653 = vmatpush1.msra.mxu0 %v725
    %1654 = vmatprep.subr.mxu0 %v729
    %1655 = vmatpush1.msra.mxu0 %v728
    %1656 = vmatprep.subr.mxu0 %v732
    %1657 = vmatpush1.msra.mxu0 %v731
    %1658 = vmatprep.subr.mxu0 %v735
    %1659 = vmatpush1.msra.mxu0 %v734
    %1660 = vmatprep.subr.mxu0 %v738
    %1661 = vmatpush1.msra.mxu0 %v737
    %1662 = vmatprep.subr.mxu0 %v741
    %1663 = vmatpush1.msra.mxu0 %v740
    %1664 = vmatprep.subr.mxu0 %v744
    %1665 = vmatpush1.msra.mxu0 %v743
    %1666 = vmatprep.subr.mxu0 %v747
    %1667 = vmatpush1.msra.mxu0 %v746
    %1668 = vmatprep.subr.mxu0 %v750
    %1669 = vmatpush1.msra.mxu0 %v749
    %1670 = vmatprep.subr.mxu0 %v753
    %1671 = vmatpush1.msra.mxu0 %v752
    %1672 = vmatprep.subr.mxu0 %v756
    %1673 = vmatpush1.msra.mxu0 %v755
    %1674 = vmatprep.subr.mxu0 %v759
    %1675 = vmatpush1.msra.mxu0 %v758
    %1676 = vmatprep.subr.mxu0 %v762
    %1677 = vmatpush1.msra.mxu0 %v761
    %1678 = vmatprep.subr.mxu0 %v765
    %1679 = vmatpush1.msra.mxu0 %v764
    %1680 = vmatprep.subr.mxu0 %v768
    %1681 = vmatpush1.msra.mxu0 %v767
    %1682 = vmatprep.subr.mxu0 %v771
    %1683 = vmatpush1.msra.mxu0 %v770
    %1684 = vmatprep.subr.mxu0 %v774
    %1685 = vmatpush1.msra.mxu0 %v773
    %1686 = vmatprep.subr.mxu0 %v777
    %1687 = vmatpush1.msra.mxu0 %v776
    %1688 = vmatprep.subr.mxu0 %v780
    %1689 = vmatpush1.msra.mxu0 %v779
    %1690 = vmatprep.subr.mxu0 %v783
    %1691 = vmatpush1.msra.mxu0 %v782
    %1692 = vmatprep.subr.mxu0 %v786
    %1693 = vmatpush1.msra.mxu0 %v785
    %1694 = vmatprep.subr.mxu0 %v789
    %1695 = vmatpush1.msra.mxu0 %v788
    %1696 = vmatprep.subr.mxu0 %v792
    %1697 = vmatpush1.msra.mxu0 %v791
    %1698 = vmatprep.subr.mxu0 %v795
    %1699 = vmatpush1.msra.mxu0 %v794
    %1700 = vmatprep.subr.mxu0 %v798
    %1701 = vmatpush1.msra.mxu0 %v797
    %1702 = vmatprep.subr.mxu0 %v801
    %1703 = vmatpush1.msra.mxu0 %v800
    %1704 = vmatprep.subr.mxu0 %v804
    %1705 = vmatpush1.msra.mxu0 %v803
    %1706 = vmatprep.subr.mxu0 %v807
    %1707 = vmatpush1.msra.mxu0 %v806
    %1708 = vmatprep.subr.mxu0 %v810
    %1709 = vmatpush1.msra.mxu0 %v809
    %1710 = vmatprep.subr.mxu0 %v813
    %1711 = vmatpush1.msra.mxu0 %v812
    %1712 = vmatprep.subr.mxu0 %v816
    %1713 = vmatpush1.msra.mxu0 %v815
    %1714 = vmatprep.subr.mxu0 %v819
    %1715 = vmatpush1.msra.mxu0 %v818
    %1716 = vmatprep.mubr.f32.mxu0 %v45
    %1717 = vmatmul.mubr.f32.gmra.mrb[0].mxu0 %v44
    %v1718 = vpop.f32.mrb[0].mxu0
    %v1719 = vadd.f32 %v1648, %v1718
    %v1720 = vpop.f32.mrb[0].mxu0
    %v1721 = vadd.f32 %v1650, %v1720
    %1722 = vdwg.mxu0
    %1723 = vmatprep.subr.mxu0 %v822
    %1724 = vmatpush1.msra.mxu0 %v821
    %1725 = vmatprep.subr.mxu0 %v825
    %1726 = vmatpush1.msra.mxu0 %v824
    %1727 = vmatprep.subr.mxu0 %v828
    %1728 = vmatpush1.msra.mxu0 %v827
    %1729 = vmatprep.subr.mxu0 %v831
    %1730 = vmatpush1.msra.mxu0 %v830
    %1731 = vmatprep.subr.mxu0 %v834
    %1732 = vmatpush1.msra.mxu0 %v833
    %1733 = vmatprep.subr.mxu0 %v837
    %1734 = vmatpush1.msra.mxu0 %v836
    %1735 = vmatprep.subr.mxu0 %v840
    %1736 = vmatpush1.msra.mxu0 %v839
    %1737 = vmatprep.subr.mxu0 %v843
    %1738 = vmatpush1.msra.mxu0 %v842
    %1739 = vmatprep.subr.mxu0 %v846
    %1740 = vmatpush1.msra.mxu0 %v845
    %1741 = vmatprep.subr.mxu0 %v849
    %1742 = vmatpush1.msra.mxu0 %v848
    %1743 = vmatprep.subr.mxu0 %v852
    %1744 = vmatpush1.msra.mxu0 %v851
    %1745 = vmatprep.subr.mxu0 %v855
    %1746 = vmatpush1.msra.mxu0 %v854
    %1747 = vmatprep.subr.mxu0 %v858
    %1748 = vmatpush1.msra.mxu0 %v857
    %1749 = vmatprep.subr.mxu0 %v861
    %1750 = vmatpush1.msra.mxu0 %v860
    %1751 = vmatprep.subr.mxu0 %v864
    %1752 = vmatpush1.msra.mxu0 %v863
    %1753 = vmatprep.subr.mxu0 %v867
    %1754 = vmatpush1.msra.mxu0 %v866
    %1755 = vmatprep.subr.mxu0 %v870
    %1756 = vmatpush1.msra.mxu0 %v869
    %1757 = vmatprep.subr.mxu0 %v873
    %1758 = vmatpush1.msra.mxu0 %v872
    %1759 = vmatprep.subr.mxu0 %v876
    %1760 = vmatpush1.msra.mxu0 %v875
    %1761 = vmatprep.subr.mxu0 %v879
    %1762 = vmatpush1.msra.mxu0 %v878
    %1763 = vmatprep.subr.mxu0 %v882
    %1764 = vmatpush1.msra.mxu0 %v881
    %1765 = vmatprep.subr.mxu0 %v885
    %1766 = vmatpush1.msra.mxu0 %v884
    %1767 = vmatprep.subr.mxu0 %v888
    %1768 = vmatpush1.msra.mxu0 %v887
    %1769 = vmatprep.subr.mxu0 %v891
    %1770 = vmatpush1.msra.mxu0 %v890
    %1771 = vmatprep.subr.mxu0 %v894
    %1772 = vmatpush1.msra.mxu0 %v893
    %1773 = vmatprep.subr.mxu0 %v897
    %1774 = vmatpush1.msra.mxu0 %v896
    %1775 = vmatprep.subr.mxu0 %v900
    %1776 = vmatpush1.msra.mxu0 %v899
    %1777 = vmatprep.subr.mxu0 %v903
    %1778 = vmatpush1.msra.mxu0 %v902
    %1779 = vmatprep.subr.mxu0 %v906
    %1780 = vmatpush1.msra.mxu0 %v905
    %1781 = vmatprep.subr.mxu0 %v909
    %1782 = vmatpush1.msra.mxu0 %v908
    %1783 = vmatprep.subr.mxu0 %v912
    %1784 = vmatpush1.msra.mxu0 %v911
    %1785 = vmatprep.subr.mxu0 %v915
    %1786 = vmatpush1.msra.mxu0 %v914
    %1787 = vmatprep.mubr.f32.mxu0 %v47
    %1788 = vmatmul.mubr.f32.gmra.mrb[0].mxu0 %v46
    %v1789 = vpop.f32.mrb[0].mxu0
    %v1790 = vadd.f32 %v1719, %v1789
    %v1791 = vpop.f32.mrb[0].mxu0
    %v1792 = vadd.f32 %v1721, %v1791
    %1793 = vdwg.mxu0
    %1794 = vmatprep.subr.mxu0 %v918
    %1795 = vmatpush1.msra.mxu0 %v917
    %1796 = vmatprep.subr.mxu0 %v921
    %1797 = vmatpush1.msra.mxu0 %v920
    %1798 = vmatprep.subr.mxu0 %v924
    %1799 = vmatpush1.msra.mxu0 %v923
    %1800 = vmatprep.subr.mxu0 %v927
    %1801 = vmatpush1.msra.mxu0 %v926
    %1802 = vmatprep.subr.mxu0 %v930
    %1803 = vmatpush1.msra.mxu0 %v929
    %1804 = vmatprep.subr.mxu0 %v933
    %1805 = vmatpush1.msra.mxu0 %v932
    %1806 = vmatprep.subr.mxu0 %v936
    %1807 = vmatpush1.msra.mxu0 %v935
    %1808 = vmatprep.subr.mxu0 %v939
    %1809 = vmatpush1.msra.mxu0 %v938
    %1810 = vmatprep.subr.mxu0 %v942
    %1811 = vmatpush1.msra.mxu0 %v941
    %1812 = vmatprep.subr.mxu0 %v945
    %1813 = vmatpush1.msra.mxu0 %v944
    %1814 = vmatprep.subr.mxu0 %v948
    %1815 = vmatpush1.msra.mxu0 %v947
    %1816 = vmatprep.subr.mxu0 %v951
    %1817 = vmatpush1.msra.mxu0 %v950
    %1818 = vmatprep.subr.mxu0 %v954
    %1819 = vmatpush1.msra.mxu0 %v953
    %1820 = vmatprep.subr.mxu0 %v957
    %1821 = vmatpush1.msra.mxu0 %v956
    %1822 = vmatprep.subr.mxu0 %v960
    %1823 = vmatpush1.msra.mxu0 %v959
    %1824 = vmatprep.subr.mxu0 %v963
    %1825 = vmatpush1.msra.mxu0 %v962
    %1826 = vmatprep.subr.mxu0 %v966
    %1827 = vmatpush1.msra.mxu0 %v965
    %1828 = vmatprep.subr.mxu0 %v969
    %1829 = vmatpush1.msra.mxu0 %v968
    %1830 = vmatprep.subr.mxu0 %v972
    %1831 = vmatpush1.msra.mxu0 %v971
    %1832 = vmatprep.subr.mxu0 %v975
    %1833 = vmatpush1.msra.mxu0 %v974
    %1834 = vmatprep.subr.mxu0 %v978
    %1835 = vmatpush1.msra.mxu0 %v977
    %1836 = vmatprep.subr.mxu0 %v981
    %1837 = vmatpush1.msra.mxu0 %v980
    %1838 = vmatprep.subr.mxu0 %v984
    %1839 = vmatpush1.msra.mxu0 %v983
    %1840 = vmatprep.subr.mxu0 %v987
    %1841 = vmatpush1.msra.mxu0 %v986
    %1842 = vmatprep.subr.mxu0 %v990
    %1843 = vmatpush1.msra.mxu0 %v989
    %1844 = vmatprep.subr.mxu0 %v993
    %1845 = vmatpush1.msra.mxu0 %v992
    %1846 = vmatprep.subr.mxu0 %v996
    %1847 = vmatpush1.msra.mxu0 %v995
    %1848 = vmatprep.subr.mxu0 %v999
    %1849 = vmatpush1.msra.mxu0 %v998
    %1850 = vmatprep.subr.mxu0 %v1002
    %1851 = vmatpush1.msra.mxu0 %v1001
    %1852 = vmatprep.subr.mxu0 %v1005
    %1853 = vmatpush1.msra.mxu0 %v1004
    %1854 = vmatprep.subr.mxu0 %v1008
    %1855 = vmatpush1.msra.mxu0 %v1007
    %1856 = vmatprep.subr.mxu0 %v1011
    %1857 = vmatpush1.msra.mxu0 %v1010
    %1858 = vmatprep.mubr.f32.mxu0 %v49
    %1859 = vmatmul.mubr.f32.gmra.mrb[0].mxu0 %v48
    %v1860 = vpop.f32.mrb[0].mxu0
    %v1861 = vadd.f32 %v1790, %v1860
    %v1862 = vpop.f32.mrb[0].mxu0
    %v1863 = vadd.f32 %v1792, %v1862
    %1864 = vdwg.mxu0
    %1865 = vmatprep.subr.mxu0 %v1014
    %1866 = vmatpush1.msra.mxu0 %v1013
    %1867 = vmatprep.subr.mxu0 %v1017
    %1868 = vmatpush1.msra.mxu0 %v1016
    %1869 = vmatprep.subr.mxu0 %v1020
    %1870 = vmatpush1.msra.mxu0 %v1019
    %1871 = vmatprep.subr.mxu0 %v1023
    %1872 = vmatpush1.msra.mxu0 %v1022
    %1873 = vmatprep.subr.mxu0 %v1026
    %1874 = vmatpush1.msra.mxu0 %v1025
    %1875 = vmatprep.subr.mxu0 %v1029
    %1876 = vmatpush1.msra.mxu0 %v1028
    %1877 = vmatprep.subr.mxu0 %v1032
    %1878 = vmatpush1.msra.mxu0 %v1031
    %1879 = vmatprep.subr.mxu0 %v1035
    %1880 = vmatpush1.msra.mxu0 %v1034
    %1881 = vmatprep.subr.mxu0 %v1038
    %1882 = vmatpush1.msra.mxu0 %v1037
    %1883 = vmatprep.subr.mxu0 %v1041
    %1884 = vmatpush1.msra.mxu0 %v1040
    %1885 = vmatprep.subr.mxu0 %v1044
    %1886 = vmatpush1.msra.mxu0 %v1043
    %1887 = vmatprep.subr.mxu0 %v1047
    %1888 = vmatpush1.msra.mxu0 %v1046
    %1889 = vmatprep.subr.mxu0 %v1050
    %1890 = vmatpush1.msra.mxu0 %v1049
    %1891 = vmatprep.subr.mxu0 %v1053
    %1892 = vmatpush1.msra.mxu0 %v1052
    %1893 = vmatprep.subr.mxu0 %v1056
    %1894 = vmatpush1.msra.mxu0 %v1055
    %1895 = vmatprep.subr.mxu0 %v1059
    %1896 = vmatpush1.msra.mxu0 %v1058
    %1897 = vmatprep.subr.mxu0 %v1062
    %1898 = vmatpush1.msra.mxu0 %v1061
    %1899 = vmatprep.subr.mxu0 %v1065
    %1900 = vmatpush1.msra.mxu0 %v1064
    %1901 = vmatprep.subr.mxu0 %v1068
    %1902 = vmatpush1.msra.mxu0 %v1067
    %1903 = vmatprep.subr.mxu0 %v1071
    %1904 = vmatpush1.msra.mxu0 %v1070
    %1905 = vmatprep.subr.mxu0 %v1074
    %1906 = vmatpush1.msra.mxu0 %v1073
    %1907 = vmatprep.subr.mxu0 %v1077
    %1908 = vmatpush1.msra.mxu0 %v1076
    %1909 = vmatprep.subr.mxu0 %v1080
    %1910 = vmatpush1.msra.mxu0 %v1079
    %1911 = vmatprep.subr.mxu0 %v1083
    %1912 = vmatpush1.msra.mxu0 %v1082
    %1913 = vmatprep.subr.mxu0 %v1086
    %1914 = vmatpush1.msra.mxu0 %v1085
    %1915 = vmatprep.subr.mxu0 %v1089
    %1916 = vmatpush1.msra.mxu0 %v1088
    %1917 = vmatprep.subr.mxu0 %v1092
    %1918 = vmatpush1.msra.mxu0 %v1091
    %1919 = vmatprep.subr.mxu0 %v1095
    %1920 = vmatpush1.msra.mxu0 %v1094
    %1921 = vmatprep.subr.mxu0 %v1098
    %1922 = vmatpush1.msra.mxu0 %v1097
    %1923 = vmatprep.subr.mxu0 %v1101
    %1924 = vmatpush1.msra.mxu0 %v1100
    %1925 = vmatprep.subr.mxu0 %v1104
    %1926 = vmatpush1.msra.mxu0 %v1103
    %1927 = vmatprep.subr.mxu0 %v1107
    %1928 = vmatpush1.msra.mxu0 %v1106
    %1929 = vmatprep.mubr.f32.mxu0 %v51
    %1930 = vmatmul.mubr.f32.gmra.mrb[0].mxu0 %v50
    %v1931 = vpop.f32.mrb[0].mxu0
    %v1932 = vadd.f32 %v1861, %v1931
    %v1933 = vpop.f32.mrb[0].mxu0
    %v1934 = vadd.f32 %v1863, %v1933
    %1935 = vdwg.mxu0
    %1936 = vmatprep.subr.mxu0 %v1110
    %1937 = vmatpush1.msra.mxu0 %v1109
    %1938 = vmatprep.subr.mxu0 %v1113
    %1939 = vmatpush1.msra.mxu0 %v1112
    %1940 = vmatprep.subr.mxu0 %v1116
    %1941 = vmatpush1.msra.mxu0 %v1115
    %1942 = vmatprep.subr.mxu0 %v1119
    %1943 = vmatpush1.msra.mxu0 %v1118
    %1944 = vmatprep.subr.mxu0 %v1122
    %1945 = vmatpush1.msra.mxu0 %v1121
    %1946 = vmatprep.subr.mxu0 %v1125
    %1947 = vmatpush1.msra.mxu0 %v1124
    %1948 = vmatprep.subr.mxu0 %v1128
    %1949 = vmatpush1.msra.mxu0 %v1127
    %1950 = vmatprep.subr.mxu0 %v1131
    %1951 = vmatpush1.msra.mxu0 %v1130
    %1952 = vmatprep.subr.mxu0 %v1134
    %1953 = vmatpush1.msra.mxu0 %v1133
    %1954 = vmatprep.subr.mxu0 %v1137
    %1955 = vmatpush1.msra.mxu0 %v1136
    %1956 = vmatprep.subr.mxu0 %v1140
    %1957 = vmatpush1.msra.mxu0 %v1139
    %1958 = vmatprep.subr.mxu0 %v1143
    %1959 = vmatpush1.msra.mxu0 %v1142
    %1960 = vmatprep.subr.mxu0 %v1146
    %1961 = vmatpush1.msra.mxu0 %v1145
    %1962 = vmatprep.subr.mxu0 %v1149
    %1963 = vmatpush1.msra.mxu0 %v1148
    %1964 = vmatprep.subr.mxu0 0.0
    %1965 = vmatpush1.msra.mxu0 0.0
    %1966 = vmatprep.subr.mxu0 0.0
    %1967 = vmatpush1.msra.mxu0 0.0
    %1968 = vmatprep.subr.mxu0 0.0
    %1969 = vmatpush1.msra.mxu0 0.0
    %1970 = vmatprep.subr.mxu0 0.0
    %1971 = vmatpush1.msra.mxu0 0.0
    %1972 = vmatprep.subr.mxu0 0.0
    %1973 = vmatpush1.msra.mxu0 0.0
    %1974 = vmatprep.subr.mxu0 0.0
    %1975 = vmatpush1.msra.mxu0 0.0
    %1976 = vmatprep.subr.mxu0 0.0
    %1977 = vmatpush1.msra.mxu0 0.0
    %1978 = vmatprep.subr.mxu0 0.0
    %1979 = vmatpush1.msra.mxu0 0.0
    %1980 = vmatprep.subr.mxu0 0.0
    %1981 = vmatpush1.msra.mxu0 0.0
    %1982 = vmatprep.subr.mxu0 0.0
    %1983 = vmatpush1.msra.mxu0 0.0
    %1984 = vmatprep.subr.mxu0 0.0
    %1985 = vmatpush1.msra.mxu0 0.0
    %1986 = vmatprep.subr.mxu0 0.0
    %1987 = vmatpush1.msra.mxu0 0.0
    %1988 = vmatprep.subr.mxu0 0.0
    %1989 = vmatpush1.msra.mxu0 0.0
    %1990 = vmatprep.subr.mxu0 0.0
    %1991 = vmatpush1.msra.mxu0 0.0
    %1992 = vmatprep.subr.mxu0 0.0
    %1993 = vmatpush1.msra.mxu0 0.0
    %1994 = vmatprep.subr.mxu0 0.0
    %1995 = vmatpush1.msra.mxu0 0.0
    %1996 = vmatprep.subr.mxu0 0.0
    %1997 = vmatpush1.msra.mxu0 0.0
    %1998 = vmatprep.subr.mxu0 0.0
    %1999 = vmatpush1.msra.mxu0 0.0
    %2000 = vmatprep.mubr.f32.mxu0 0.0
    %2001 = vmatmul.mubr.f32.gmra.mrb[0].mxu0 %v1153
    %v2002 = vpop.f32.mrb[0].mxu0
    %v2003 = vadd.f32 %v1932, %v2002
    %v2004 = vpop.f32.mrb[0].mxu0
    %v2005 = vadd.f32 %v1934, %v2004
    %2006 = vdwg.mxu0
    %2007 = vmatprep.subr.mxu0 0.0
    %2008 = vmatpush1.msra.mxu0 %v55
    %2009 = vmatprep.subr.mxu0 0.0
    %2010 = vmatpush1.msra.mxu0 %v58
    %2011 = vmatprep.subr.mxu0 0.0
    %2012 = vmatpush1.msra.mxu0 %v61
    %2013 = vmatprep.subr.mxu0 0.0
    %2014 = vmatpush1.msra.mxu0 %v64
    %2015 = vmatprep.subr.mxu0 0.0
    %2016 = vmatpush1.msra.mxu0 %v67
    %2017 = vmatprep.subr.mxu0 0.0
    %2018 = vmatpush1.msra.mxu0 %v70
    %2019 = vmatprep.subr.mxu0 0.0
    %2020 = vmatpush1.msra.mxu0 %v73
    %2021 = vmatprep.subr.mxu0 0.0
    %2022 = vmatpush1.msra.mxu0 %v76
    %2023 = vmatprep.subr.mxu0 0.0
    %2024 = vmatpush1.msra.mxu0 %v79
    %2025 = vmatprep.subr.mxu0 0.0
    %2026 = vmatpush1.msra.mxu0 %v82
    %2027 = vmatprep.subr.mxu0 0.0
    %2028 = vmatpush1.msra.mxu0 %v85
    %2029 = vmatprep.subr.mxu0 0.0
    %2030 = vmatpush1.msra.mxu0 %v88
    %2031 = vmatprep.subr.mxu0 0.0
    %2032 = vmatpush1.msra.mxu0 %v91
    %2033 = vmatprep.subr.mxu0 0.0
    %2034 = vmatpush1.msra.mxu0 %v94
    %2035 = vmatprep.subr.mxu0 0.0
    %2036 = vmatpush1.msra.mxu0 %v97
    %2037 = vmatprep.subr.mxu0 0.0
    %2038 = vmatpush1.msra.mxu0 %v100
    %2039 = vmatprep.subr.mxu0 0.0
    %2040 = vmatpush1.msra.mxu0 %v103
    %2041 = vmatprep.subr.mxu0 0.0
    %2042 = vmatpush1.msra.mxu0 %v106
    %2043 = vmatprep.subr.mxu0 0.0
    %2044 = vmatpush1.msra.mxu0 %v109
    %2045 = vmatprep.subr.mxu0 0.0
    %2046 = vmatpush1.msra.mxu0 %v112
    %2047 = vmatprep.subr.mxu0 0.0
    %2048 = vmatpush1.msra.mxu0 %v115
    %2049 = vmatprep.subr.mxu0 0.0
    %2050 = vmatpush1.msra.mxu0 %v118
    %2051 = vmatprep.subr.mxu0 0.0
    %2052 = vmatpush1.msra.mxu0 %v121
    %2053 = vmatprep.subr.mxu0 0.0
    %2054 = vmatpush1.msra.mxu0 %v124
    %2055 = vmatprep.subr.mxu0 0.0
    %2056 = vmatpush1.msra.mxu0 %v127
    %2057 = vmatprep.subr.mxu0 0.0
    %2058 = vmatpush1.msra.mxu0 %v130
    %2059 = vmatprep.subr.mxu0 0.0
    %2060 = vmatpush1.msra.mxu0 %v133
    %2061 = vmatprep.subr.mxu0 0.0
    %2062 = vmatpush1.msra.mxu0 %v136
    %2063 = vmatprep.subr.mxu0 0.0
    %2064 = vmatpush1.msra.mxu0 %v139
    %2065 = vmatprep.subr.mxu0 0.0
    %2066 = vmatpush1.msra.mxu0 %v142
    %2067 = vmatprep.subr.mxu0 0.0
    %2068 = vmatpush1.msra.mxu0 %v145
    %2069 = vmatprep.subr.mxu0 0.0
    %2070 = vmatpush1.msra.mxu0 %v148
    %2071 = vmatprep.mubr.f32.mxu0 %v31
    %2072 = vmatmul.mubr.f32.gmra.mrb[0].mxu0 %v30
    %v2073 = vpop.f32.mrb[0].mxu0
    %v2074 = vadd.f32 0.0, %v2073
    %v2075 = vpop.f32.mrb[0].mxu0
    %2076 = vdwg.mxu0
    %2077 = vmatprep.subr.mxu0 0.0
    %2078 = vmatpush1.msra.mxu0 %v151
    %2079 = vmatprep.subr.mxu0 0.0
    %2080 = vmatpush1.msra.mxu0 %v154
    %2081 = vmatprep.subr.mxu0 0.0
    %2082 = vmatpush1.msra.mxu0 %v157
    %2083 = vmatprep.subr.mxu0 0.0
    %2084 = vmatpush1.msra.mxu0 %v160
    %2085 = vmatprep.subr.mxu0 0.0
    %2086 = vmatpush1.msra.mxu0 %v163
    %2087 = vmatprep.subr.mxu0 0.0
    %2088 = vmatpush1.msra.mxu0 %v166
    %2089 = vmatprep.subr.mxu0 0.0
    %2090 = vmatpush1.msra.mxu0 %v169
    %2091 = vmatprep.subr.mxu0 0.0
    %2092 = vmatpush1.msra.mxu0 %v172
    %2093 = vmatprep.subr.mxu0 0.0
    %2094 = vmatpush1.msra.mxu0 %v175
    %2095 = vmatprep.subr.mxu0 0.0
    %2096 = vmatpush1.msra.mxu0 %v178
    %2097 = vmatprep.subr.mxu0 0.0
    %2098 = vmatpush1.msra.mxu0 %v181
    %2099 = vmatprep.subr.mxu0 0.0
    %2100 = vmatpush1.msra.mxu0 %v184
    %2101 = vmatprep.subr.mxu0 0.0
    %2102 = vmatpush1.msra.mxu0 %v187
    %2103 = vmatprep.subr.mxu0 0.0
    %2104 = vmatpush1.msra.mxu0 %v190
    %2105 = vmatprep.subr.mxu0 0.0
    %2106 = vmatpush1.msra.mxu0 %v193
    %2107 = vmatprep.subr.mxu0 0.0
    %2108 = vmatpush1.msra.mxu0 %v196
    %2109 = vmatprep.subr.mxu0 0.0
    %2110 = vmatpush1.msra.mxu0 %v199
    %2111 = vmatprep.subr.mxu0 0.0
    %2112 = vmatpush1.msra.mxu0 %v202
    %2113 = vmatprep.subr.mxu0 0.0
    %2114 = vmatpush1.msra.mxu0 %v205
    %2115 = vmatprep.subr.mxu0 0.0
    %2116 = vmatpush1.msra.mxu0 %v208
    %2117 = vmatprep.subr.mxu0 0.0
    %2118 = vmatpush1.msra.mxu0 %v211
    %2119 = vmatprep.subr.mxu0 0.0
    %2120 = vmatpush1.msra.mxu0 %v214
    %2121 = vmatprep.subr.mxu0 0.0
    %2122 = vmatpush1.msra.mxu0 %v217
    %2123 = vmatprep.subr.mxu0 0.0
    %2124 = vmatpush1.msra.mxu0 %v220
    %2125 = vmatprep.subr.mxu0 0.0
    %2126 = vmatpush1.msra.mxu0 %v223
    %2127 = vmatprep.subr.mxu0 0.0
    %2128 = vmatpush1.msra.mxu0 %v226
    %2129 = vmatprep.subr.mxu0 0.0
    %2130 = vmatpush1.msra.mxu0 %v229
    %2131 = vmatprep.subr.mxu0 0.0
    %2132 = vmatpush1.msra.mxu0 %v232
    %2133 = vmatprep.subr.mxu0 0.0
    %2134 = vmatpush1.msra.mxu0 %v235
    %2135 = vmatprep.subr.mxu0 0.0
    %2136 = vmatpush1.msra.mxu0 %v238
    %2137 = vmatprep.subr.mxu0 0.0
    %2138 = vmatpush1.msra.mxu0 %v241
    %2139 = vmatprep.subr.mxu0 0.0
    %2140 = vmatpush1.msra.mxu0 %v244
    %2141 = vmatprep.mubr.f32.mxu0 %v33
    %2142 = vmatmul.mubr.f32.gmra.mrb[0].mxu0 %v32
    %v2143 = vpop.f32.mrb[0].mxu0
    %v2144 = vadd.f32 %v2074, %v2143
    %v2145 = vpop.f32.mrb[0].mxu0
    %2146 = vdwg.mxu0
    %2147 = vmatprep.subr.mxu0 0.0
    %2148 = vmatpush1.msra.mxu0 %v247
    %2149 = vmatprep.subr.mxu0 0.0
    %2150 = vmatpush1.msra.mxu0 %v250
    %2151 = vmatprep.subr.mxu0 0.0
    %2152 = vmatpush1.msra.mxu0 %v253
    %2153 = vmatprep.subr.mxu0 0.0
    %2154 = vmatpush1.msra.mxu0 %v256
    %2155 = vmatprep.subr.mxu0 0.0
    %2156 = vmatpush1.msra.mxu0 %v259
    %2157 = vmatprep.subr.mxu0 0.0
    %2158 = vmatpush1.msra.mxu0 %v262
    %2159 = vmatprep.subr.mxu0 0.0
    %2160 = vmatpush1.msra.mxu0 %v265
    %2161 = vmatprep.subr.mxu0 0.0
    %2162 = vmatpush1.msra.mxu0 %v268
    %2163 = vmatprep.subr.mxu0 0.0
    %2164 = vmatpush1.msra.mxu0 %v271
    %2165 = vmatprep.subr.mxu0 0.0
    %2166 = vmatpush1.msra.mxu0 %v274
    %2167 = vmatprep.subr.mxu0 0.0
    %2168 = vmatpush1.msra.mxu0 %v277
    %2169 = vmatprep.subr.mxu0 0.0
    %2170 = vmatpush1.msra.mxu0 %v280
    %2171 = vmatprep.subr.mxu0 0.0
    %2172 = vmatpush1.msra.mxu0 %v283
    %2173 = vmatprep.subr.mxu0 0.0
    %2174 = vmatpush1.msra.mxu0 %v286
    %2175 = vmatprep.subr.mxu0 0.0
    %2176 = vmatpush1.msra.mxu0 %v289
    %2177 = vmatprep.subr.mxu0 0.0
    %2178 = vmatpush1.msra.mxu0 %v292
    %2179 = vmatprep.subr.mxu0 0.0
    %2180 = vmatpush1.msra.mxu0 %v295
    %2181 = vmatprep.subr.mxu0 0.0
    %2182 = vmatpush1.msra.mxu0 %v298
    %2183 = vmatprep.subr.mxu0 0.0
    %2184 = vmatpush1.msra.mxu0 %v301
    %2185 = vmatprep.subr.mxu0 0.0
    %2186 = vmatpush1.msra.mxu0 %v304
    %2187 = vmatprep.subr.mxu0 0.0
    %2188 = vmatpush1.msra.mxu0 %v307
    %2189 = vmatprep.subr.mxu0 0.0
    %2190 = vmatpush1.msra.mxu0 %v310
    %2191 = vmatprep.subr.mxu0 0.0
    %2192 = vmatpush1.msra.mxu0 %v313
    %2193 = vmatprep.subr.mxu0 0.0
    %2194 = vmatpush1.msra.mxu0 %v316
    %2195 = vmatprep.subr.mxu0 0.0
    %2196 = vmatpush1.msra.mxu0 %v319
    %2197 = vmatprep.subr.mxu0 0.0
    %2198 = vmatpush1.msra.mxu0 %v322
    %2199 = vmatprep.subr.mxu0 0.0
    %2200 = vmatpush1.msra.mxu0 %v325
    %2201 = vmatprep.subr.mxu0 0.0
    %2202 = vmatpush1.msra.mxu0 %v328
    %2203 = vmatprep.subr.mxu0 0.0
    %2204 = vmatpush1.msra.mxu0 %v331
    %2205 = vmatprep.subr.mxu0 0.0
    %2206 = vmatpush1.msra.mxu0 %v334
    %2207 = vmatprep.subr.mxu0 0.0
    %2208 = vmatpush1.msra.mxu0 %v337
    %2209 = vmatprep.subr.mxu0 0.0
    %2210 = vmatpush1.msra.mxu0 %v340
    %2211 = vmatprep.mubr.f32.mxu0 %v35
    %2212 = vmatmul.mubr.f32.gmra.mrb[0].mxu0 %v34
    %v2213 = vpop.f32.mrb[0].mxu0
    %v2214 = vadd.f32 %v2144, %v2213
    %v2215 = vpop.f32.mrb[0].mxu0
    %2216 = vdwg.mxu0
    %2217 = vmatprep.subr.mxu0 0.0
    %2218 = vmatpush1.msra.mxu0 %v343
    %2219 = vmatprep.subr.mxu0 0.0
    %2220 = vmatpush1.msra.mxu0 %v346
    %2221 = vmatprep.subr.mxu0 0.0
    %2222 = vmatpush1.msra.mxu0 %v349
    %2223 = vmatprep.subr.mxu0 0.0
    %2224 = vmatpush1.msra.mxu0 %v352
    %2225 = vmatprep.subr.mxu0 0.0
    %2226 = vmatpush1.msra.mxu0 %v355
    %2227 = vmatprep.subr.mxu0 0.0
    %2228 = vmatpush1.msra.mxu0 %v358
    %2229 = vmatprep.subr.mxu0 0.0
    %2230 = vmatpush1.msra.mxu0 %v361
    %2231 = vmatprep.subr.mxu0 0.0
    %2232 = vmatpush1.msra.mxu0 %v364
    %2233 = vmatprep.subr.mxu0 0.0
    %2234 = vmatpush1.msra.mxu0 %v367
    %2235 = vmatprep.subr.mxu0 0.0
    %2236 = vmatpush1.msra.mxu0 %v370
    %2237 = vmatprep.subr.mxu0 0.0
    %2238 = vmatpush1.msra.mxu0 %v373
    %2239 = vmatprep.subr.mxu0 0.0
    %2240 = vmatpush1.msra.mxu0 %v376
    %2241 = vmatprep.subr.mxu0 0.0
    %2242 = vmatpush1.msra.mxu0 %v379
    %2243 = vmatprep.subr.mxu0 0.0
    %2244 = vmatpush1.msra.mxu0 %v382
    %2245 = vmatprep.subr.mxu0 0.0
    %2246 = vmatpush1.msra.mxu0 %v385
    %2247 = vmatprep.subr.mxu0 0.0
    %2248 = vmatpush1.msra.mxu0 %v388
    %2249 = vmatprep.subr.mxu0 0.0
    %2250 = vmatpush1.msra.mxu0 %v391
    %2251 = vmatprep.subr.mxu0 0.0
    %2252 = vmatpush1.msra.mxu0 %v394
    %2253 = vmatprep.subr.mxu0 0.0
    %2254 = vmatpush1.msra.mxu0 %v397
    %2255 = vmatprep.subr.mxu0 0.0
    %2256 = vmatpush1.msra.mxu0 %v400
    %2257 = vmatprep.subr.mxu0 0.0
    %2258 = vmatpush1.msra.mxu0 %v403
    %2259 = vmatprep.subr.mxu0 0.0
    %2260 = vmatpush1.msra.mxu0 %v406
    %2261 = vmatprep.subr.mxu0 0.0
    %2262 = vmatpush1.msra.mxu0 %v409
    %2263 = vmatprep.subr.mxu0 0.0
    %2264 = vmatpush1.msra.mxu0 %v412
    %2265 = vmatprep.subr.mxu0 0.0
    %2266 = vmatpush1.msra.mxu0 %v415
    %2267 = vmatprep.subr.mxu0 0.0
    %2268 = vmatpush1.msra.mxu0 %v418
    %2269 = vmatprep.subr.mxu0 0.0
    %2270 = vmatpush1.msra.mxu0 %v421
    %2271 = vmatprep.subr.mxu0 0.0
    %2272 = vmatpush1.msra.mxu0 %v424
    %2273 = vmatprep.subr.mxu0 0.0
    %2274 = vmatpush1.msra.mxu0 %v427
    %2275 = vmatprep.subr.mxu0 0.0
    %2276 = vmatpush1.msra.mxu0 %v430
    %2277 = vmatprep.subr.mxu0 0.0
    %2278 = vmatpush1.msra.mxu0 %v433
    %2279 = vmatprep.subr.mxu0 0.0
    %2280 = vmatpush1.msra.mxu0 %v436
    %2281 = vmatprep.mubr.f32.mxu0 %v37
    %2282 = vmatmul.mubr.f32.gmra.mrb[0].mxu0 %v36
    %v2283 = vpop.f32.mrb[0].mxu0
    %v2284 = vadd.f32 %v2214, %v2283
    %v2285 = vpop.f32.mrb[0].mxu0
    %2286 = vdwg.mxu0
    %2287 = vmatprep.subr.mxu0 0.0
    %2288 = vmatpush1.msra.mxu0 %v439
    %2289 = vmatprep.subr.mxu0 0.0
    %2290 = vmatpush1.msra.mxu0 %v442
    %2291 = vmatprep.subr.mxu0 0.0
    %2292 = vmatpush1.msra.mxu0 %v445
    %2293 = vmatprep.subr.mxu0 0.0
    %2294 = vmatpush1.msra.mxu0 %v448
    %2295 = vmatprep.subr.mxu0 0.0
    %2296 = vmatpush1.msra.mxu0 %v451
    %2297 = vmatprep.subr.mxu0 0.0
    %2298 = vmatpush1.msra.mxu0 %v454
    %2299 = vmatprep.subr.mxu0 0.0
    %2300 = vmatpush1.msra.mxu0 %v457
    %2301 = vmatprep.subr.mxu0 0.0
    %2302 = vmatpush1.msra.mxu0 %v460
    %2303 = vmatprep.subr.mxu0 0.0
    %2304 = vmatpush1.msra.mxu0 %v463
    %2305 = vmatprep.subr.mxu0 0.0
    %2306 = vmatpush1.msra.mxu0 %v466
    %2307 = vmatprep.subr.mxu0 0.0
    %2308 = vmatpush1.msra.mxu0 %v469
    %2309 = vmatprep.subr.mxu0 0.0
    %2310 = vmatpush1.msra.mxu0 %v472
    %2311 = vmatprep.subr.mxu0 0.0
    %2312 = vmatpush1.msra.mxu0 %v475
    %2313 = vmatprep.subr.mxu0 0.0
    %2314 = vmatpush1.msra.mxu0 %v478
    %2315 = vmatprep.subr.mxu0 0.0
    %2316 = vmatpush1.msra.mxu0 %v481
    %2317 = vmatprep.subr.mxu0 0.0
    %2318 = vmatpush1.msra.mxu0 %v484
    %2319 = vmatprep.subr.mxu0 0.0
    %2320 = vmatpush1.msra.mxu0 %v487
    %2321 = vmatprep.subr.mxu0 0.0
    %2322 = vmatpush1.msra.mxu0 %v490
    %2323 = vmatprep.subr.mxu0 0.0
    %2324 = vmatpush1.msra.mxu0 %v493
    %2325 = vmatprep.subr.mxu0 0.0
    %2326 = vmatpush1.msra.mxu0 %v496
    %2327 = vmatprep.subr.mxu0 0.0
    %2328 = vmatpush1.msra.mxu0 %v499
    %2329 = vmatprep.subr.mxu0 0.0
    %2330 = vmatpush1.msra.mxu0 %v502
    %2331 = vmatprep.subr.mxu0 0.0
    %2332 = vmatpush1.msra.mxu0 %v505
    %2333 = vmatprep.subr.mxu0 0.0
    %2334 = vmatpush1.msra.mxu0 %v508
    %2335 = vmatprep.subr.mxu0 0.0
    %2336 = vmatpush1.msra.mxu0 %v511
    %2337 = vmatprep.subr.mxu0 0.0
    %2338 = vmatpush1.msra.mxu0 %v514
    %2339 = vmatprep.subr.mxu0 0.0
    %2340 = vmatpush1.msra.mxu0 %v517
    %2341 = vmatprep.subr.mxu0 0.0
    %2342 = vmatpush1.msra.mxu0 %v520
    %2343 = vmatprep.subr.mxu0 0.0
    %2344 = vmatpush1.msra.mxu0 %v523
    %2345 = vmatprep.subr.mxu0 0.0
    %2346 = vmatpush1.msra.mxu0 %v526
    %2347 = vmatprep.subr.mxu0 0.0
    %2348 = vmatpush1.msra.mxu0 %v529
    %2349 = vmatprep.subr.mxu0 0.0
    %2350 = vmatpush1.msra.mxu0 %v532
    %2351 = vmatprep.mubr.f32.mxu0 %v39
    %2352 = vmatmul.mubr.f32.gmra.mrb[0].mxu0 %v38
    %v2353 = vpop.f32.mrb[0].mxu0
    %v2354 = vadd.f32 %v2284, %v2353
    %v2355 = vpop.f32.mrb[0].mxu0
    %2356 = vdwg.mxu0
    %2357 = vmatprep.subr.mxu0 0.0
    %2358 = vmatpush1.msra.mxu0 %v535
    %2359 = vmatprep.subr.mxu0 0.0
    %2360 = vmatpush1.msra.mxu0 %v538
    %2361 = vmatprep.subr.mxu0 0.0
    %2362 = vmatpush1.msra.mxu0 %v541
    %2363 = vmatprep.subr.mxu0 0.0
    %2364 = vmatpush1.msra.mxu0 %v544
    %2365 = vmatprep.subr.mxu0 0.0
    %2366 = vmatpush1.msra.mxu0 %v547
    %2367 = vmatprep.subr.mxu0 0.0
    %2368 = vmatpush1.msra.mxu0 %v550
    %2369 = vmatprep.subr.mxu0 0.0
    %2370 = vmatpush1.msra.mxu0 %v553
    %2371 = vmatprep.subr.mxu0 0.0
    %2372 = vmatpush1.msra.mxu0 %v556
    %2373 = vmatprep.subr.mxu0 0.0
    %2374 = vmatpush1.msra.mxu0 %v559
    %2375 = vmatprep.subr.mxu0 0.0
    %2376 = vmatpush1.msra.mxu0 %v562
    %2377 = vmatprep.subr.mxu0 0.0
    %2378 = vmatpush1.msra.mxu0 %v565
    %2379 = vmatprep.subr.mxu0 0.0
    %2380 = vmatpush1.msra.mxu0 %v568
    %2381 = vmatprep.subr.mxu0 0.0
    %2382 = vmatpush1.msra.mxu0 %v571
    %2383 = vmatprep.subr.mxu0 0.0
    %2384 = vmatpush1.msra.mxu0 %v574
    %2385 = vmatprep.subr.mxu0 0.0
    %2386 = vmatpush1.msra.mxu0 %v577
    %2387 = vmatprep.subr.mxu0 0.0
    %2388 = vmatpush1.msra.mxu0 %v580
    %2389 = vmatprep.subr.mxu0 0.0
    %2390 = vmatpush1.msra.mxu0 %v583
    %2391 = vmatprep.subr.mxu0 0.0
    %2392 = vmatpush1.msra.mxu0 %v586
    %2393 = vmatprep.subr.mxu0 0.0
    %2394 = vmatpush1.msra.mxu0 %v589
    %2395 = vmatprep.subr.mxu0 0.0
    %2396 = vmatpush1.msra.mxu0 %v592
    %2397 = vmatprep.subr.mxu0 0.0
    %2398 = vmatpush1.msra.mxu0 %v595
    %2399 = vmatprep.subr.mxu0 0.0
    %2400 = vmatpush1.msra.mxu0 %v598
    %2401 = vmatprep.subr.mxu0 0.0
    %2402 = vmatpush1.msra.mxu0 %v601
    %2403 = vmatprep.subr.mxu0 0.0
    %2404 = vmatpush1.msra.mxu0 %v604
    %2405 = vmatprep.subr.mxu0 0.0
    %2406 = vmatpush1.msra.mxu0 %v607
    %2407 = vmatprep.subr.mxu0 0.0
    %2408 = vmatpush1.msra.mxu0 %v610
    %2409 = vmatprep.subr.mxu0 0.0
    %2410 = vmatpush1.msra.mxu0 %v613
    %2411 = vmatprep.subr.mxu0 0.0
    %2412 = vmatpush1.msra.mxu0 %v616
    %2413 = vmatprep.subr.mxu0 0.0
    %2414 = vmatpush1.msra.mxu0 %v619
    %2415 = vmatprep.subr.mxu0 0.0
    %2416 = vmatpush1.msra.mxu0 %v622
    %2417 = vmatprep.subr.mxu0 0.0
    %2418 = vmatpush1.msra.mxu0 %v625
    %2419 = vmatprep.subr.mxu0 0.0
    %2420 = vmatpush1.msra.mxu0 %v628
    %2421 = vmatprep.mubr.f32.mxu0 %v41
    %2422 = vmatmul.mubr.f32.gmra.mrb[0].mxu0 %v40
    %v2423 = vpop.f32.mrb[0].mxu0
    %v2424 = vadd.f32 %v2354, %v2423
    %v2425 = vpop.f32.mrb[0].mxu0
    %2426 = vdwg.mxu0
    %2427 = vmatprep.subr.mxu0 0.0
    %2428 = vmatpush1.msra.mxu0 %v631
    %2429 = vmatprep.subr.mxu0 0.0
    %2430 = vmatpush1.msra.mxu0 %v634
    %2431 = vmatprep.subr.mxu0 0.0
    %2432 = vmatpush1.msra.mxu0 %v637
    %2433 = vmatprep.subr.mxu0 0.0
    %2434 = vmatpush1.msra.mxu0 %v640
    %2435 = vmatprep.subr.mxu0 0.0
    %2436 = vmatpush1.msra.mxu0 %v643
    %2437 = vmatprep.subr.mxu0 0.0
    %2438 = vmatpush1.msra.mxu0 %v646
    %2439 = vmatprep.subr.mxu0 0.0
    %2440 = vmatpush1.msra.mxu0 %v649
    %2441 = vmatprep.subr.mxu0 0.0
    %2442 = vmatpush1.msra.mxu0 %v652
    %2443 = vmatprep.subr.mxu0 0.0
    %2444 = vmatpush1.msra.mxu0 %v655
    %2445 = vmatprep.subr.mxu0 0.0
    %2446 = vmatpush1.msra.mxu0 %v658
    %2447 = vmatprep.subr.mxu0 0.0
    %2448 = vmatpush1.msra.mxu0 %v661
    %2449 = vmatprep.subr.mxu0 0.0
    %2450 = vmatpush1.msra.mxu0 %v664
    %2451 = vmatprep.subr.mxu0 0.0
    %2452 = vmatpush1.msra.mxu0 %v667
    %2453 = vmatprep.subr.mxu0 0.0
    %2454 = vmatpush1.msra.mxu0 %v670
    %2455 = vmatprep.subr.mxu0 0.0
    %2456 = vmatpush1.msra.mxu0 %v673
    %2457 = vmatprep.subr.mxu0 0.0
    %2458 = vmatpush1.msra.mxu0 %v676
    %2459 = vmatprep.subr.mxu0 0.0
    %2460 = vmatpush1.msra.mxu0 %v679
    %2461 = vmatprep.subr.mxu0 0.0
    %2462 = vmatpush1.msra.mxu0 %v682
    %2463 = vmatprep.subr.mxu0 0.0
    %2464 = vmatpush1.msra.mxu0 %v685
    %2465 = vmatprep.subr.mxu0 0.0
    %2466 = vmatpush1.msra.mxu0 %v688
    %2467 = vmatprep.subr.mxu0 0.0
    %2468 = vmatpush1.msra.mxu0 %v691
    %2469 = vmatprep.subr.mxu0 0.0
    %2470 = vmatpush1.msra.mxu0 %v694
    %2471 = vmatprep.subr.mxu0 0.0
    %2472 = vmatpush1.msra.mxu0 %v697
    %2473 = vmatprep.subr.mxu0 0.0
    %2474 = vmatpush1.msra.mxu0 %v700
    %2475 = vmatprep.subr.mxu0 0.0
    %2476 = vmatpush1.msra.mxu0 %v703
    %2477 = vmatprep.subr.mxu0 0.0
    %2478 = vmatpush1.msra.mxu0 %v706
    %2479 = vmatprep.subr.mxu0 0.0
    %2480 = vmatpush1.msra.mxu0 %v709
    %2481 = vmatprep.subr.mxu0 0.0
    %2482 = vmatpush1.msra.mxu0 %v712
    %2483 = vmatprep.subr.mxu0 0.0
    %2484 = vmatpush1.msra.mxu0 %v715
    %2485 = vmatprep.subr.mxu0 0.0
    %2486 = vmatpush1.msra.mxu0 %v718
    %2487 = vmatprep.subr.mxu0 0.0
    %2488 = vmatpush1.msra.mxu0 %v721
    %2489 = vmatprep.subr.mxu0 0.0
    %2490 = vmatpush1.msra.mxu0 %v724
    %2491 = vmatprep.mubr.f32.mxu0 %v43
    %2492 = vmatmul.mubr.f32.gmra.mrb[0].mxu0 %v42
    %v2493 = vpop.f32.mrb[0].mxu0
    %v2494 = vadd.f32 %v2424, %v2493
    %v2495 = vpop.f32.mrb[0].mxu0
    %2496 = vdwg.mxu0
    %2497 = vmatprep.subr.mxu0 0.0
    %2498 = vmatpush1.msra.mxu0 %v727
    %2499 = vmatprep.subr.mxu0 0.0
    %2500 = vmatpush1.msra.mxu0 %v730
    %2501 = vmatprep.subr.mxu0 0.0
    %2502 = vmatpush1.msra.mxu0 %v733
    %2503 = vmatprep.subr.mxu0 0.0
    %2504 = vmatpush1.msra.mxu0 %v736
    %2505 = vmatprep.subr.mxu0 0.0
    %2506 = vmatpush1.msra.mxu0 %v739
    %2507 = vmatprep.subr.mxu0 0.0
    %2508 = vmatpush1.msra.mxu0 %v742
    %2509 = vmatprep.subr.mxu0 0.0
    %2510 = vmatpush1.msra.mxu0 %v745
    %2511 = vmatprep.subr.mxu0 0.0
    %2512 = vmatpush1.msra.mxu0 %v748
    %2513 = vmatprep.subr.mxu0 0.0
    %2514 = vmatpush1.msra.mxu0 %v751
    %2515 = vmatprep.subr.mxu0 0.0
    %2516 = vmatpush1.msra.mxu0 %v754
    %2517 = vmatprep.subr.mxu0 0.0
    %2518 = vmatpush1.msra.mxu0 %v757
    %2519 = vmatprep.subr.mxu0 0.0
    %2520 = vmatpush1.msra.mxu0 %v760
    %2521 = vmatprep.subr.mxu0 0.0
    %2522 = vmatpush1.msra.mxu0 %v763
    %2523 = vmatprep.subr.mxu0 0.0
    %2524 = vmatpush1.msra.mxu0 %v766
    %2525 = vmatprep.subr.mxu0 0.0
    %2526 = vmatpush1.msra.mxu0 %v769
    %2527 = vmatprep.subr.mxu0 0.0
    %2528 = vmatpush1.msra.mxu0 %v772
    %2529 = vmatprep.subr.mxu0 0.0
    %2530 = vmatpush1.msra.mxu0 %v775
    %2531 = vmatprep.subr.mxu0 0.0
    %2532 = vmatpush1.msra.mxu0 %v778
    %2533 = vmatprep.subr.mxu0 0.0
    %2534 = vmatpush1.msra.mxu0 %v781
    %2535 = vmatprep.subr.mxu0 0.0
    %2536 = vmatpush1.msra.mxu0 %v784
    %2537 = vmatprep.subr.mxu0 0.0
    %2538 = vmatpush1.msra.mxu0 %v787
    %2539 = vmatprep.subr.mxu0 0.0
    %2540 = vmatpush1.msra.mxu0 %v790
    %2541 = vmatprep.subr.mxu0 0.0
    %2542 = vmatpush1.msra.mxu0 %v793
    %2543 = vmatprep.subr.mxu0 0.0
    %2544 = vmatpush1.msra.mxu0 %v796
    %2545 = vmatprep.subr.mxu0 0.0
    %2546 = vmatpush1.msra.mxu0 %v799
    %2547 = vmatprep.subr.mxu0 0.0
    %2548 = vmatpush1.msra.mxu0 %v802
    %2549 = vmatprep.subr.mxu0 0.0
    %2550 = vmatpush1.msra.mxu0 %v805
    %2551 = vmatprep.subr.mxu0 0.0
    %2552 = vmatpush1.msra.mxu0 %v808
    %2553 = vmatprep.subr.mxu0 0.0
    %2554 = vmatpush1.msra.mxu0 %v811
    %2555 = vmatprep.subr.mxu0 0.0
    %2556 = vmatpush1.msra.mxu0 %v814
    %2557 = vmatprep.subr.mxu0 0.0
    %2558 = vmatpush1.msra.mxu0 %v817
    %2559 = vmatprep.subr.mxu0 0.0
    %2560 = vmatpush1.msra.mxu0 %v820
    %2561 = vmatprep.mubr.f32.mxu0 %v45
    %2562 = vmatmul.mubr.f32.gmra.mrb[0].mxu0 %v44
    %v2563 = vpop.f32.mrb[0].mxu0
    %v2564 = vadd.f32 %v2494, %v2563
    %v2565 = vpop.f32.mrb[0].mxu0
    %2566 = vdwg.mxu0
    %2567 = vmatprep.subr.mxu0 0.0
    %2568 = vmatpush1.msra.mxu0 %v823
    %2569 = vmatprep.subr.mxu0 0.0
    %2570 = vmatpush1.msra.mxu0 %v826
    %2571 = vmatprep.subr.mxu0 0.0
    %2572 = vmatpush1.msra.mxu0 %v829
    %2573 = vmatprep.subr.mxu0 0.0
    %2574 = vmatpush1.msra.mxu0 %v832
    %2575 = vmatprep.subr.mxu0 0.0
    %2576 = vmatpush1.msra.mxu0 %v835
    %2577 = vmatprep.subr.mxu0 0.0
    %2578 = vmatpush1.msra.mxu0 %v838
    %2579 = vmatprep.subr.mxu0 0.0
    %2580 = vmatpush1.msra.mxu0 %v841
    %2581 = vmatprep.subr.mxu0 0.0
    %2582 = vmatpush1.msra.mxu0 %v844
    %2583 = vmatprep.subr.mxu0 0.0
    %2584 = vmatpush1.msra.mxu0 %v847
    %2585 = vmatprep.subr.mxu0 0.0
    %2586 = vmatpush1.msra.mxu0 %v850
    %2587 = vmatprep.subr.mxu0 0.0
    %2588 = vmatpush1.msra.mxu0 %v853
    %2589 = vmatprep.subr.mxu0 0.0
    %2590 = vmatpush1.msra.mxu0 %v856
    %2591 = vmatprep.subr.mxu0 0.0
    %2592 = vmatpush1.msra.mxu0 %v859
    %2593 = vmatprep.subr.mxu0 0.0
    %2594 = vmatpush1.msra.mxu0 %v862
    %2595 = vmatprep.subr.mxu0 0.0
    %2596 = vmatpush1.msra.mxu0 %v865
    %2597 = vmatprep.subr.mxu0 0.0
    %2598 = vmatpush1.msra.mxu0 %v868
    %2599 = vmatprep.subr.mxu0 0.0
    %2600 = vmatpush1.msra.mxu0 %v871
    %2601 = vmatprep.subr.mxu0 0.0
    %2602 = vmatpush1.msra.mxu0 %v874
    %2603 = vmatprep.subr.mxu0 0.0
    %2604 = vmatpush1.msra.mxu0 %v877
    %2605 = vmatprep.subr.mxu0 0.0
    %2606 = vmatpush1.msra.mxu0 %v880
    %2607 = vmatprep.subr.mxu0 0.0
    %2608 = vmatpush1.msra.mxu0 %v883
    %2609 = vmatprep.subr.mxu0 0.0
    %2610 = vmatpush1.msra.mxu0 %v886
    %2611 = vmatprep.subr.mxu0 0.0
    %2612 = vmatpush1.msra.mxu0 %v889
    %2613 = vmatprep.subr.mxu0 0.0
    %2614 = vmatpush1.msra.mxu0 %v892
    %2615 = vmatprep.subr.mxu0 0.0
    %2616 = vmatpush1.msra.mxu0 %v895
    %2617 = vmatprep.subr.mxu0 0.0
    %2618 = vmatpush1.msra.mxu0 %v898
    %2619 = vmatprep.subr.mxu0 0.0
    %2620 = vmatpush1.msra.mxu0 %v901
    %2621 = vmatprep.subr.mxu0 0.0
    %2622 = vmatpush1.msra.mxu0 %v904
    %2623 = vmatprep.subr.mxu0 0.0
    %2624 = vmatpush1.msra.mxu0 %v907
    %2625 = vmatprep.subr.mxu0 0.0
    %2626 = vmatpush1.msra.mxu0 %v910
    %2627 = vmatprep.subr.mxu0 0.0
    %2628 = vmatpush1.msra.mxu0 %v913
    %2629 = vmatprep.subr.mxu0 0.0
    %2630 = vmatpush1.msra.mxu0 %v916
    %2631 = vmatprep.mubr.f32.mxu0 %v47
    %2632 = vmatmul.mubr.f32.gmra.mrb[0].mxu0 %v46
    %v2633 = vpop.f32.mrb[0].mxu0
    %v2634 = vadd.f32 %v2564, %v2633
    %v2635 = vpop.f32.mrb[0].mxu0
    %2636 = vdwg.mxu0
    %2637 = vmatprep.subr.mxu0 0.0
    %2638 = vmatpush1.msra.mxu0 %v919
    %2639 = vmatprep.subr.mxu0 0.0
    %2640 = vmatpush1.msra.mxu0 %v922
    %2641 = vmatprep.subr.mxu0 0.0
    %2642 = vmatpush1.msra.mxu0 %v925
    %2643 = vmatprep.subr.mxu0 0.0
    %2644 = vmatpush1.msra.mxu0 %v928
    %2645 = vmatprep.subr.mxu0 0.0
    %2646 = vmatpush1.msra.mxu0 %v931
    %2647 = vmatprep.subr.mxu0 0.0
    %2648 = vmatpush1.msra.mxu0 %v934
    %2649 = vmatprep.subr.mxu0 0.0
    %2650 = vmatpush1.msra.mxu0 %v937
    %2651 = vmatprep.subr.mxu0 0.0
    %2652 = vmatpush1.msra.mxu0 %v940
    %2653 = vmatprep.subr.mxu0 0.0
    %2654 = vmatpush1.msra.mxu0 %v943
    %2655 = vmatprep.subr.mxu0 0.0
    %2656 = vmatpush1.msra.mxu0 %v946
    %2657 = vmatprep.subr.mxu0 0.0
    %2658 = vmatpush1.msra.mxu0 %v949
    %2659 = vmatprep.subr.mxu0 0.0
    %2660 = vmatpush1.msra.mxu0 %v952
    %2661 = vmatprep.subr.mxu0 0.0
    %2662 = vmatpush1.msra.mxu0 %v955
    %2663 = vmatprep.subr.mxu0 0.0
    %2664 = vmatpush1.msra.mxu0 %v958
    %2665 = vmatprep.subr.mxu0 0.0
    %2666 = vmatpush1.msra.mxu0 %v961
    %2667 = vmatprep.subr.mxu0 0.0
    %2668 = vmatpush1.msra.mxu0 %v964
    %2669 = vmatprep.subr.mxu0 0.0
    %2670 = vmatpush1.msra.mxu0 %v967
    %2671 = vmatprep.subr.mxu0 0.0
    %2672 = vmatpush1.msra.mxu0 %v970
    %2673 = vmatprep.subr.mxu0 0.0
    %2674 = vmatpush1.msra.mxu0 %v973
    %2675 = vmatprep.subr.mxu0 0.0
    %2676 = vmatpush1.msra.mxu0 %v976
    %2677 = vmatprep.subr.mxu0 0.0
    %2678 = vmatpush1.msra.mxu0 %v979
    %2679 = vmatprep.subr.mxu0 0.0
    %2680 = vmatpush1.msra.mxu0 %v982
    %2681 = vmatprep.subr.mxu0 0.0
    %2682 = vmatpush1.msra.mxu0 %v985
    %2683 = vmatprep.subr.mxu0 0.0
    %2684 = vmatpush1.msra.mxu0 %v988
    %2685 = vmatprep.subr.mxu0 0.0
    %2686 = vmatpush1.msra.mxu0 %v991
    %2687 = vmatprep.subr.mxu0 0.0
    %2688 = vmatpush1.msra.mxu0 %v994
    %2689 = vmatprep.subr.mxu0 0.0
    %2690 = vmatpush1.msra.mxu0 %v997
    %2691 = vmatprep.subr.mxu0 0.0
    %2692 = vmatpush1.msra.mxu0 %v1000
    %2693 = vmatprep.subr.mxu0 0.0
    %2694 = vmatpush1.msra.mxu0 %v1003
    %2695 = vmatprep.subr.mxu0 0.0
    %2696 = vmatpush1.msra.mxu0 %v1006
    %2697 = vmatprep.subr.mxu0 0.0
    %2698 = vmatpush1.msra.mxu0 %v1009
    %2699 = vmatprep.subr.mxu0 0.0
    %2700 = vmatpush1.msra.mxu0 %v1012
    %2701 = vmatprep.mubr.f32.mxu0 %v49
    %2702 = vmatmul.mubr.f32.gmra.mrb[0].mxu0 %v48
    %v2703 = vpop.f32.mrb[0].mxu0
    %v2704 = vadd.f32 %v2634, %v2703
    %v2705 = vpop.f32.mrb[0].mxu0
    %2706 = vdwg.mxu0
    %2707 = vmatprep.subr.mxu0 0.0
    %2708 = vmatpush1.msra.mxu0 %v1015
    %2709 = vmatprep.subr.mxu0 0.0
    %2710 = vmatpush1.msra.mxu0 %v1018
    %2711 = vmatprep.subr.mxu0 0.0
    %2712 = vmatpush1.msra.mxu0 %v1021
    %2713 = vmatprep.subr.mxu0 0.0
    %2714 = vmatpush1.msra.mxu0 %v1024
    %2715 = vmatprep.subr.mxu0 0.0
    %2716 = vmatpush1.msra.mxu0 %v1027
    %2717 = vmatprep.subr.mxu0 0.0
    %2718 = vmatpush1.msra.mxu0 %v1030
    %2719 = vmatprep.subr.mxu0 0.0
    %2720 = vmatpush1.msra.mxu0 %v1033
    %2721 = vmatprep.subr.mxu0 0.0
    %2722 = vmatpush1.msra.mxu0 %v1036
    %2723 = vmatprep.subr.mxu0 0.0
    %2724 = vmatpush1.msra.mxu0 %v1039
    %2725 = vmatprep.subr.mxu0 0.0
    %2726 = vmatpush1.msra.mxu0 %v1042
    %2727 = vmatprep.subr.mxu0 0.0
    %2728 = vmatpush1.msra.mxu0 %v1045
    %2729 = vmatprep.subr.mxu0 0.0
    %2730 = vmatpush1.msra.mxu0 %v1048
    %2731 = vmatprep.subr.mxu0 0.0
    %2732 = vmatpush1.msra.mxu0 %v1051
    %2733 = vmatprep.subr.mxu0 0.0
    %2734 = vmatpush1.msra.mxu0 %v1054
    %2735 = vmatprep.subr.mxu0 0.0
    %2736 = vmatpush1.msra.mxu0 %v1057
    %2737 = vmatprep.subr.mxu0 0.0
    %2738 = vmatpush1.msra.mxu0 %v1060
    %2739 = vmatprep.subr.mxu0 0.0
    %2740 = vmatpush1.msra.mxu0 %v1063
    %2741 = vmatprep.subr.mxu0 0.0
    %2742 = vmatpush1.msra.mxu0 %v1066
    %2743 = vmatprep.subr.mxu0 0.0
    %2744 = vmatpush1.msra.mxu0 %v1069
    %2745 = vmatprep.subr.mxu0 0.0
    %2746 = vmatpush1.msra.mxu0 %v1072
    %2747 = vmatprep.subr.mxu0 0.0
    %2748 = vmatpush1.msra.mxu0 %v1075
    %2749 = vmatprep.subr.mxu0 0.0
    %2750 = vmatpush1.msra.mxu0 %v1078
    %2751 = vmatprep.subr.mxu0 0.0
    %2752 = vmatpush1.msra.mxu0 %v1081
    %2753 = vmatprep.subr.mxu0 0.0
    %2754 = vmatpush1.msra.mxu0 %v1084
    %2755 = vmatprep.subr.mxu0 0.0
    %2756 = vmatpush1.msra.mxu0 %v1087
    %2757 = vmatprep.subr.mxu0 0.0
    %2758 = vmatpush1.msra.mxu0 %v1090
    %2759 = vmatprep.subr.mxu0 0.0
    %2760 = vmatpush1.msra.mxu0 %v1093
    %2761 = vmatprep.subr.mxu0 0.0
    %2762 = vmatpush1.msra.mxu0 %v1096
    %2763 = vmatprep.subr.mxu0 0.0
    %2764 = vmatpush1.msra.mxu0 %v1099
    %2765 = vmatprep.subr.mxu0 0.0
    %2766 = vmatpush1.msra.mxu0 %v1102
    %2767 = vmatprep.subr.mxu0 0.0
    %2768 = vmatpush1.msra.mxu0 %v1105
    %2769 = vmatprep.subr.mxu0 0.0
    %2770 = vmatpush1.msra.mxu0 %v1108
    %2771 = vmatprep.mubr.f32.mxu0 %v51
    %2772 = vmatmul.mubr.f32.gmra.mrb[0].mxu0 %v50
    %v2773 = vpop.f32.mrb[0].mxu0
    %v2774 = vadd.f32 %v2704, %v2773
    %v2775 = vpop.f32.mrb[0].mxu0
    %2776 = vdwg.mxu0
    %2777 = vmatprep.subr.mxu0 0.0
    %2778 = vmatpush1.msra.mxu0 %v1111
    %2779 = vmatprep.subr.mxu0 0.0
    %2780 = vmatpush1.msra.mxu0 %v1114
    %2781 = vmatprep.subr.mxu0 0.0
    %2782 = vmatpush1.msra.mxu0 %v1117
    %2783 = vmatprep.subr.mxu0 0.0
    %2784 = vmatpush1.msra.mxu0 %v1120
    %2785 = vmatprep.subr.mxu0 0.0
    %2786 = vmatpush1.msra.mxu0 %v1123
    %2787 = vmatprep.subr.mxu0 0.0
    %2788 = vmatpush1.msra.mxu0 %v1126
    %2789 = vmatprep.subr.mxu0 0.0
    %2790 = vmatpush1.msra.mxu0 %v1129
    %2791 = vmatprep.subr.mxu0 0.0
    %2792 = vmatpush1.msra.mxu0 %v1132
    %2793 = vmatprep.subr.mxu0 0.0
    %2794 = vmatpush1.msra.mxu0 %v1135
    %2795 = vmatprep.subr.mxu0 0.0
    %2796 = vmatpush1.msra.mxu0 %v1138
    %2797 = vmatprep.subr.mxu0 0.0
    %2798 = vmatpush1.msra.mxu0 %v1141
    %2799 = vmatprep.subr.mxu0 0.0
    %2800 = vmatpush1.msra.mxu0 %v1144
    %2801 = vmatprep.subr.mxu0 0.0
    %2802 = vmatpush1.msra.mxu0 %v1147
    %2803 = vmatprep.subr.mxu0 0.0
    %2804 = vmatpush1.msra.mxu0 %v1150
    %2805 = vmatprep.subr.mxu0 0.0
    %2806 = vmatpush1.msra.mxu0 0.0
    %2807 = vmatprep.subr.mxu0 0.0
    %2808 = vmatpush1.msra.mxu0 0.0
    %2809 = vmatprep.subr.mxu0 0.0
    %2810 = vmatpush1.msra.mxu0 0.0
    %2811 = vmatprep.subr.mxu0 0.0
    %2812 = vmatpush1.msra.mxu0 0.0
    %2813 = vmatprep.subr.mxu0 0.0
    %2814 = vmatpush1.msra.mxu0 0.0
    %2815 = vmatprep.subr.mxu0 0.0
    %2816 = vmatpush1.msra.mxu0 0.0
    %2817 = vmatprep.subr.mxu0 0.0
    %2818 = vmatpush1.msra.mxu0 0.0
    %2819 = vmatprep.subr.mxu0 0.0
    %2820 = vmatpush1.msra.mxu0 0.0
    %2821 = vmatprep.subr.mxu0 0.0
    %2822 = vmatpush1.msra.mxu0 0.0
    %2823 = vmatprep.subr.mxu0 0.0
    %2824 = vmatpush1.msra.mxu0 0.0
    %2825 = vmatprep.subr.mxu0 0.0
    %2826 = vmatpush1.msra.mxu0 0.0
    %2827 = vmatprep.subr.mxu0 0.0
    %2828 = vmatpush1.msra.mxu0 0.0
    %2829 = vmatprep.subr.mxu0 0.0
    %2830 = vmatpush1.msra.mxu0 0.0
    %2831 = vmatprep.subr.mxu0 0.0
    %2832 = vmatpush1.msra.mxu0 0.0
    %2833 = vmatprep.subr.mxu0 0.0
    %2834 = vmatpush1.msra.mxu0 0.0
    %2835 = vmatprep.subr.mxu0 0.0
    %2836 = vmatpush1.msra.mxu0 0.0
    %2837 = vmatprep.subr.mxu0 0.0
    %2838 = vmatpush1.msra.mxu0 0.0
    %2839 = vmatprep.subr.mxu0 0.0
    %2840 = vmatpush1.msra.mxu0 0.0
    %2841 = vmatprep.mubr.f32.mxu0 0.0
    %2842 = vmatmul.mubr.f32.gmra.mrb[0].mxu0 %v1153
    %v2843 = vpop.f32.mrb[0].mxu0
    %v2844 = vadd.f32 %v2774, %v2843
    %v2845 = vpop.f32.mrb[0].mxu0
    %2846 = vdwg.mxu0
    %v2847 = vld [vmem:[%s2] sm:$0x3]
    %v2849 = vlaneseq
    %v2850 = vshrl.u32 %v2849, 7
    %v2851 = vsub.s32 0, %v2850
    %v2852 = vrot.slane %v2847, %v2851
    %v2853 = vlaneseq
    %v2854 = vshrl.u32 %v2853, 7
    %v2855 = vsub.s32 1, %v2854
    %v2856 = vrot.slane %v2847, %v2855
    %v2859 = vadd.f32 %v2003, %v2852
    %v2860 = vadd.f32 %v2005, %v2856
    %v2861 = vmax.f32 %v2859, 0.0
    %v2862 = vmax.f32 %v2860, 0.0
    %v2863 = vld [vmem:[%s3] sm:$0xff]
    %v2864 = vld [vmem:[%s3 + $0x8] sm:$0xff]
    %v2865 = vld [vmem:[%s3 + $0x10] sm:$0xff]
    %v2866 = vld [vmem:[%s3 + $0x18] sm:$0xff]
    %v2867 = vld [vmem:[%s3 + $0x20] sm:$0xff]
    %v2868 = vld [vmem:[%s3 + $0x28] sm:$0xff]
    %v2869 = vld [vmem:[%s3 + $0x30] sm:$0xff]
    %v2870 = vld [vmem:[%s3 + $0x38] sm:$0xff]
    %v2871 = vld [vmem:[%s3 + $0x40] sm:$0xff]
    %v2872 = vld [vmem:[%s3 + $0x48] sm:$0xff]
    %v2873 = vld [vmem:[%s3 + $0x50] sm:$0xff]
    %v2874 = vld [vmem:[%s3 + $0x58] sm:$0xff]
    %v2875 = vld [vmem:[%s3 + $0x60] sm:$0xff]
    %v2876 = vld [vmem:[%s3 + $0x68] sm:$0xff]
    %v2877 = vld [vmem:[%s3 + $0x70] sm:$0xff]
    %v2878 = vld [vmem:[%s3 + $0x78] sm:$0xff]
    %v2879 = vld [vmem:[%s3 + $0x80] sm:$0xff]
    %v2880 = vld [vmem:[%s3 + $0x88] sm:$0xff]
    %v2881 = vld [vmem:[%s3 + $0x90] sm:$0xff]
    %v2882 = vld [vmem:[%s3 + $0x98] sm:$0xff]
    %v2883 = vld [vmem:[%s3 + $0xa0] sm:$0xff]
    %v2884 = vld [vmem:[%s3 + $0xa8] sm:$0xff]
    %v2885 = vld [vmem:[%s3 + $0xb0] sm:$0xff]
    %v2886 = vld [vmem:[%s3 + $0xb8] sm:$0xff]
    %v2887 = vld [vmem:[%s3 + $0xc0] sm:$0xff]
    %v2888 = vld [vmem:[%s3 + $0xc8] sm:$0xff]
    %v2889 = vld [vmem:[%s3 + $0xd0] sm:$0xff]
    %v2890 = vld [vmem:[%s3 + $0xd8] sm:$0xff]
    %v2891 = vld [vmem:[%s3 + $0xe0] sm:$0xff]
    %v2892 = vld [vmem:[%s3 + $0xe8] sm:$0xff]
    %v2893 = vld [vmem:[%s3 + $0xf0] sm:$0xff]
    %v2894 = vld [vmem:[%s3 + $0xf8] sm:$0xff]
    %v2895 = vld [vmem:[%s3 + $0x100] sm:$0xff]
    %v2896 = vld [vmem:[%s3 + $0x108] sm:$0xff]
    %v2897 = vld [vmem:[%s3 + $0x110] sm:$0xff]
    %v2898 = vld [vmem:[%s3 + $0x118] sm:$0xff]
    %v2899 = vld [vmem:[%s3 + $0x120] sm:$0xff]
    %v2900 = vld [vmem:[%s3 + $0x128] sm:$0xff]
    %v2901 = vld [vmem:[%s3 + $0x130] sm:$0xff]
    %v2902 = vld [vmem:[%s3 + $0x138] sm:$0xff]
    %v2903 = vld [vmem:[%s3 + $0x140] sm:$0xff]
    %v2904 = vld [vmem:[%s3 + $0x148] sm:$0xff]
    %v2905 = vld [vmem:[%s3 + $0x150] sm:$0xff]
    %v2906 = vld [vmem:[%s3 + $0x158] sm:$0xff]
    %v2907 = vld [vmem:[%s3 + $0x160] sm:$0xff]
    %v2908 = vld [vmem:[%s3 + $0x168] sm:$0xff]
    %v2909 = vld [vmem:[%s3 + $0x170] sm:$0xff]
    %v2910 = vld [vmem:[%s3 + $0x178] sm:$0xff]
    %v2911 = vld [vmem:[%s3 + $0x180] sm:$0xff]
    %v2912 = vld [vmem:[%s3 + $0x188] sm:$0xff]
    %v2913 = vld [vmem:[%s3 + $0x190] sm:$0xff]
    %v2914 = vld [vmem:[%s3 + $0x198] sm:$0xff]
    %v2915 = vld [vmem:[%s3 + $0x1a0] sm:$0xff]
    %v2916 = vld [vmem:[%s3 + $0x1a8] sm:$0xff]
    %v2917 = vld [vmem:[%s3 + $0x1b0] sm:$0xff]
    %v2918 = vld [vmem:[%s3 + $0x1b8] sm:$0xff]
    %v2919 = vld [vmem:[%s3 + $0x1c0] sm:$0xff]
    %v2920 = vld [vmem:[%s3 + $0x1c8] sm:$0xff]
    %v2921 = vld [vmem:[%s3 + $0x1d0] sm:$0xff]
    %v2922 = vld [vmem:[%s3 + $0x1d8] sm:$0xff]
    %v2923 = vld [vmem:[%s3 + $0x1e0] sm:$0xff]
    %v2924 = vld [vmem:[%s3 + $0x1e8] sm:$0xff]
    %v2925 = vld [vmem:[%s3 + $0x1f0] sm:$0xff]
    %v2926 = vld [vmem:[%s3 + $0x1f8] sm:$0xff]
    %v2927 = vld [vmem:[%s4] sm:$0x3]
    %v2929 = vlaneseq
    %v2930 = vshrl.u32 %v2929, 7
    %v2931 = vsub.s32 0, %v2930
    %v2932 = vrot.slane %v2927, %v2931
    %v2933 = vlaneseq
    %v2934 = vshrl.u32 %v2933, 7
    %v2935 = vsub.s32 1, %v2934
    %v2936 = vrot.slane %v2927, %v2935
    %2939 = vmatprep.subr.mxu0 %v2864
    %2940 = vmatpush1.msra.mxu0 %v2863
    %2941 = vmatprep.subr.mxu0 %v2866
    %2942 = vmatpush1.msra.mxu0 %v2865
    %2943 = vmatprep.subr.mxu0 %v2868
    %2944 = vmatpush1.msra.mxu0 %v2867
    %2945 = vmatprep.subr.mxu0 %v2870
    %2946 = vmatpush1.msra.mxu0 %v2869
    %2947 = vmatprep.subr.mxu0 %v2872
    %2948 = vmatpush1.msra.mxu0 %v2871
    %2949 = vmatprep.subr.mxu0 %v2874
    %2950 = vmatpush1.msra.mxu0 %v2873
    %2951 = vmatprep.subr.mxu0 %v2876
    %2952 = vmatpush1.msra.mxu0 %v2875
    %2953 = vmatprep.subr.mxu0 %v2878
    %2954 = vmatpush1.msra.mxu0 %v2877
    %2955 = vmatprep.subr.mxu0 %v2880
    %2956 = vmatpush1.msra.mxu0 %v2879
    %2957 = vmatprep.subr.mxu0 %v2882
    %2958 = vmatpush1.msra.mxu0 %v2881
    %2959 = vmatprep.subr.mxu0 %v2884
    %2960 = vmatpush1.msra.mxu0 %v2883
    %2961 = vmatprep.subr.mxu0 %v2886
    %2962 = vmatpush1.msra.mxu0 %v2885
    %2963 = vmatprep.subr.mxu0 %v2888
    %2964 = vmatpush1.msra.mxu0 %v2887
    %2965 = vmatprep.subr.mxu0 %v2890
    %2966 = vmatpush1.msra.mxu0 %v2889
    %2967 = vmatprep.subr.mxu0 %v2892
    %2968 = vmatpush1.msra.mxu0 %v2891
    %2969 = vmatprep.subr.mxu0 %v2894
    %2970 = vmatpush1.msra.mxu0 %v2893
    %2971 = vmatprep.subr.mxu0 %v2896
    %2972 = vmatpush1.msra.mxu0 %v2895
    %2973 = vmatprep.subr.mxu0 %v2898
    %2974 = vmatpush1.msra.mxu0 %v2897
    %2975 = vmatprep.subr.mxu0 %v2900
    %2976 = vmatpush1.msra.mxu0 %v2899
    %2977 = vmatprep.subr.mxu0 %v2902
    %2978 = vmatpush1.msra.mxu0 %v2901
    %2979 = vmatprep.subr.mxu0 %v2904
    %2980 = vmatpush1.msra.mxu0 %v2903
    %2981 = vmatprep.subr.mxu0 %v2906
    %2982 = vmatpush1.msra.mxu0 %v2905
    %2983 = vmatprep.subr.mxu0 %v2908
    %2984 = vmatpush1.msra.mxu0 %v2907
    %2985 = vmatprep.subr.mxu0 %v2910
    %2986 = vmatpush1.msra.mxu0 %v2909
    %2987 = vmatprep.subr.mxu0 %v2912
    %2988 = vmatpush1.msra.mxu0 %v2911
    %2989 = vmatprep.subr.mxu0 %v2914
    %2990 = vmatpush1.msra.mxu0 %v2913
    %2991 = vmatprep.subr.mxu0 %v2916
    %2992 = vmatpush1.msra.mxu0 %v2915
    %2993 = vmatprep.subr.mxu0 %v2918
    %2994 = vmatpush1.msra.mxu0 %v2917
    %2995 = vmatprep.subr.mxu0 %v2920
    %2996 = vmatpush1.msra.mxu0 %v2919
    %2997 = vmatprep.subr.mxu0 %v2922
    %2998 = vmatpush1.msra.mxu0 %v2921
    %2999 = vmatprep.subr.mxu0 %v2924
    %3000 = vmatpush1.msra.mxu0 %v2923
    %3001 = vmatprep.subr.mxu0 %v2926
    %3002 = vmatpush1.msra.mxu0 %v2925
    %3003 = vmatprep.mubr.f32.mxu0 %v2862
    %3004 = vmatmul.mubr.f32.gmra.mrb[0].mxu0 %v2861
    %v3005 = vpop.f32.mrb[0].mxu0
    %v3006 = vadd.f32 %v2932, %v3005
    %v3007 = vpop.f32.mrb[0].mxu0
    %v3008 = vadd.f32 %v2936, %v3007
    %3009 = vdwg.mxu0
    %v3010 = vmax.f32 %v3006, 0.0
    %v3011 = vmax.f32 %v3008, 0.0
    %v3012 = vld [vmem:[%s5] sm:$0xff]
    %v3013 = vld [vmem:[%s5 + $0x8] sm:$0xff]
    %v3014 = vld [vmem:[%s5 + $0x10] sm:$0xff]
    %v3015 = vld [vmem:[%s5 + $0x18] sm:$0xff]
    %v3016 = vld [vmem:[%s5 + $0x20] sm:$0xff]
    %v3017 = vld [vmem:[%s5 + $0x28] sm:$0xff]
    %v3018 = vld [vmem:[%s5 + $0x30] sm:$0xff]
    %v3019 = vld [vmem:[%s5 + $0x38] sm:$0xff]
    %v3020 = vld [vmem:[%s5 + $0x40] sm:$0xff]
    %v3021 = vld [vmem:[%s5 + $0x48] sm:$0xff]
    %v3022 = vld [vmem:[%s5 + $0x50] sm:$0xff]
    %v3023 = vld [vmem:[%s5 + $0x58] sm:$0xff]
    %v3024 = vld [vmem:[%s5 + $0x60] sm:$0xff]
    %v3025 = vld [vmem:[%s5 + $0x68] sm:$0xff]
    %v3026 = vld [vmem:[%s5 + $0x70] sm:$0xff]
    %v3027 = vld [vmem:[%s5 + $0x78] sm:$0xff]
    %v3028 = vld [vmem:[%s5 + $0x80] sm:$0xff]
    %v3029 = vld [vmem:[%s5 + $0x88] sm:$0xff]
    %v3030 = vld [vmem:[%s5 + $0x90] sm:$0xff]
    %v3031 = vld [vmem:[%s5 + $0x98] sm:$0xff]
    %v3032 = vld [vmem:[%s5 + $0xa0] sm:$0xff]
    %v3033 = vld [vmem:[%s5 + $0xa8] sm:$0xff]
    %v3034 = vld [vmem:[%s5 + $0xb0] sm:$0xff]
    %v3035 = vld [vmem:[%s5 + $0xb8] sm:$0xff]
    %v3036 = vld [vmem:[%s5 + $0xc0] sm:$0xff]
    %v3037 = vld [vmem:[%s5 + $0xc8] sm:$0xff]
    %v3038 = vld [vmem:[%s5 + $0xd0] sm:$0xff]
    %v3039 = vld [vmem:[%s5 + $0xd8] sm:$0xff]
    %v3040 = vld [vmem:[%s5 + $0xe0] sm:$0xff]
    %v3041 = vld [vmem:[%s5 + $0xe8] sm:$0xff]
    %v3042 = vld [vmem:[%s5 + $0xf0] sm:$0xff]
    %v3043 = vld [vmem:[%s5 + $0xf8] sm:$0xff]
    %v3044 = vld [vmem:[%s6] sm:$0x1]
    %v3046 = vlaneseq
    %v3047 = vshrl.u32 %v3046, 7
    %v3048 = vsub.s32 0, %v3047
    %v3049 = vrot.slane %v3044, %v3048
    %3051 = vmatprep.subr.mxu0 0.0
    %3052 = vmatpush1.msra.mxu0 %v3012
    %3053 = vmatprep.subr.mxu0 0.0
    %3054 = vmatpush1.msra.mxu0 %v3013
    %3055 = vmatprep.subr.mxu0 0.0
    %3056 = vmatpush1.msra.mxu0 %v3014
    %3057 = vmatprep.subr.mxu0 0.0
    %3058 = vmatpush1.msra.mxu0 %v3015
    %3059 = vmatprep.subr.mxu0 0.0
    %3060 = vmatpush1.msra.mxu0 %v3016
    %3061 = vmatprep.subr.mxu0 0.0
    %3062 = vmatpush1.msra.mxu0 %v3017
    %3063 = vmatprep.subr.mxu0 0.0
    %3064 = vmatpush1.msra.mxu0 %v3018
    %3065 = vmatprep.subr.mxu0 0.0
    %3066 = vmatpush1.msra.mxu0 %v3019
    %3067 = vmatprep.subr.mxu0 0.0
    %3068 = vmatpush1.msra.mxu0 %v3020
    %3069 = vmatprep.subr.mxu0 0.0
    %3070 = vmatpush1.msra.mxu0 %v3021
    %3071 = vmatprep.subr.mxu0 0.0
    %3072 = vmatpush1.msra.mxu0 %v3022
    %3073 = vmatprep.subr.mxu0 0.0
    %3074 = vmatpush1.msra.mxu0 %v3023
    %3075 = vmatprep.subr.mxu0 0.0
    %3076 = vmatpush1.msra.mxu0 %v3024
    %3077 = vmatprep.subr.mxu0 0.0
    %3078 = vmatpush1.msra.mxu0 %v3025
    %3079 = vmatprep.subr.mxu0 0.0
    %3080 = vmatpush1.msra.mxu0 %v3026
    %3081 = vmatprep.subr.mxu0 0.0
    %3082 = vmatpush1.msra.mxu0 %v3027
    %3083 = vmatprep.subr.mxu0 0.0
    %3084 = vmatpush1.msra.mxu0 %v3028
    %3085 = vmatprep.subr.mxu0 0.0
    %3086 = vmatpush1.msra.mxu0 %v3029
    %3087 = vmatprep.subr.mxu0 0.0
    %3088 = vmatpush1.msra.mxu0 %v3030
    %3089 = vmatprep.subr.mxu0 0.0
    %3090 = vmatpush1.msra.mxu0 %v3031
    %3091 = vmatprep.subr.mxu0 0.0
    %3092 = vmatpush1.msra.mxu0 %v3032
    %3093 = vmatprep.subr.mxu0 0.0
    %3094 = vmatpush1.msra.mxu0 %v3033
    %3095 = vmatprep.subr.mxu0 0.0
    %3096 = vmatpush1.msra.mxu0 %v3034
    %3097 = vmatprep.subr.mxu0 0.0
    %3098 = vmatpush1.msra.mxu0 %v3035
    %3099 = vmatprep.subr.mxu0 0.0
    %3100 = vmatpush1.msra.mxu0 %v3036
    %3101 = vmatprep.subr.mxu0 0.0
    %3102 = vmatpush1.msra.mxu0 %v3037
    %3103 = vmatprep.subr.mxu0 0.0
    %3104 = vmatpush1.msra.mxu0 %v3038
    %3105 = vmatprep.subr.mxu0 0.0
    %3106 = vmatpush1.msra.mxu0 %v3039
    %3107 = vmatprep.subr.mxu0 0.0
    %3108 = vmatpush1.msra.mxu0 %v3040
    %3109 = vmatprep.subr.mxu0 0.0
    %3110 = vmatpush1.msra.mxu0 %v3041
    %3111 = vmatprep.subr.mxu0 0.0
    %3112 = vmatpush1.msra.mxu0 %v3042
    %3113 = vmatprep.subr.mxu0 0.0
    %3114 = vmatpush1.msra.mxu0 %v3043
    %3115 = vmatprep.mubr.f32.mxu0 %v3011
    %3116 = vmatmul.mubr.f32.gmra.mrb[0].mxu0 %v3010
    %v3117 = vpop.f32.mrb[0].mxu0
    %v3118 = vadd.f32 %v3049, %v3117
    %v3119 = vpop.f32.mrb[0].mxu0
    %3120 = vdwg.mxu0
    %3122 = vrot.lane.b32.xlu0 %v3118, 1
    %v3123 = vpop.permute.xlu0 %3122
    %v3125 = vsub.f32 %v3118, %v3123
    %v3126 = vmul.f32 %v3125, 1.442695
    %v3127 = vpow.pop %v3126
    %v3128 = vadd.f32 %v3127, 1.0
    %v3129 = vrcp.pop %v3128
    %v3130 = vmul.f32 1.0, %v3129
    %3131 = vrot.lane.b32.xlu0 %v3118, 127
    %v3132 = vpop.permute.xlu0 %3131
    %v3134 = vsub.f32 %v3118, %v3132
    %v3135 = vmul.f32 %v3134, 1.442695
    %v3136 = vpow.pop %v3135
    %v3137 = vadd.f32 %v3136, 1.0
    %v3138 = vrcp.pop %v3137
    %v3139 = vmul.f32 1.0, %v3138
    %v3140 = vld [vmem:[%s7] sm:$0x1]
    %v3142 = vlaneseq
    %v3143 = vshrl.u32 %v3142, 7
    %v3144 = vsub.s32 0, %v3143
    %v3145 = vrot.slane %v3140, %v3144
    %v3147 = vadd.f32 %v2844, %v3145
    %3149 = vrot.lane.b32.xlu0 %v3130, 127
    %v3150 = vpop.permute.xlu0 %3149
    %3153 = vrot.lane.b32.xlu0 %v3139, 1
    %v3154 = vpop.permute.xlu0 %3153
    %3157 = vrot.lane.b32.xlu0 %v3147, 2
    %v3158 = vpop.permute.xlu0 %3157
    %vm3160 = vcmask 7168
    %v3161 = vsel %vm3160, %v3150, %v3154
    %vm3162 = vcmask 15360
    %v3163 = vsel %vm3162, %v3161, %v3158
    %vm3164 = vcmask 269312
    %v3165 = vsel %vm3164, %v3163, 0.0
    %3166 = vst [vmem:[#allocation2] sm:$0xff] %v3165
    // Predicated region
    $region34: #{tpu_custom_call.1} parent=1 // pred_check
      _
    $region35: #{tpu_custom_call.1} parent=1 // pred_check_branch
      %3168 = sbr.rel (0) target = $region37
    $region36: #{tpu_custom_call.1} parent=1 // pred_region
      %s3170 = ssub.s32 128, 128
      %3171 = vsyncadd [#allocation3], %s3170
      %s3173 = sshll.u32 [#allocation2], 4
      %s3174 = int_to_ptr.vmem [resolvable:$true] %s3173
      %3176 = dma.vmem_to_hbm [thread:$0]  %s3174, 128, %s8, [#allocation3]
    $region37: #{tpu_custom_call.1} parent=1 // pred_fallthru
      _
    // Predicated region
    $region38: #{tpu_custom_call.1} parent=1 // pred_check
      _
    $region39: #{tpu_custom_call.1} parent=1 // pred_check_branch
      %3178 = sbr.rel (0) target = $region41
    $region40: #{tpu_custom_call.1} parent=1 // pred_region
      %3179 = dma.done [#allocation3], 128
    $region41: #{tpu_custom_call.1} parent=1 // pred_fallthru
      _
    %3180 = vsyncpa [#allocation3], 1

</llo_original>
